<compile_context>
chip_gen: v6e
topology: v6e:2x2x1
jax: 0.10.0
libtpu: 0.0.40
codegen_flags: <defaults>
</compile_context>

<pallas_src>
import jax
import jax.numpy as jnp
from jax.experimental import pallas as pl
from jax.experimental.pallas import tpu as pltpu
import numpy as np

_EPS = 1e-5


def _residual_block_kernel(x_ref, w1_ref, w2_ref, o_ref):
    # x_ref / o_ref: (1, H, W, Cp) activation dtype (f32 or bf16)
    # w*_ref:        (3, 3*Cp, Cp) bf16, kw folded into the contraction dim.
    _, H, W, Cp = x_ref.shape
    x = x_ref[0]                                        # (H, W, Cp)
    inv_hw = 1.0 / float(H * W)

    def conv3x3_reflect(a, w_ref):
        # a: (H, W, Cp) activation.  Returns (H*W, Cp) f32, bias-free.
        # Cast ONCE to bf16 before building the padded/shifted variants:
        # halves the bytes moved by every copy below, removes per-tap casts.
        ab = a.astype(jnp.bfloat16)
        # Reflection pad along H only (major-axis concat, tile-aligned copies).
        ah = jnp.concatenate([ab[1:2], ab, ab[H - 2:H - 1]], axis=0)   # (H+2, W, Cp)
        # Reflected W-shift variants reused by all three ky taps:
        #   left[:, w]  = ah[:, reflect(w-1)],  right[:, w] = ah[:, reflect(w+1)]
        left = jnp.concatenate([ah[:, 1:2], ah[:, :W - 1]], axis=1)
        right = jnp.concatenate([ah[:, 1:], ah[:, W - 2:W - 1]], axis=1)
        # K-fusion: one lane-axis concat (3*Cp % 128 == 0 -> tile-aligned
        # copy), then each ky is a single K = 3*Cp dot on an aligned
        # leading-axis slice whose flatten is a layout no-op (W % 8 == 0).
        fused = jnp.concatenate([left, ah, right], axis=-1)            # (H+2, W, 3*Cp)
        acc = None
        for ky in range(3):
            patch = fused[ky:ky + H].reshape(H * W, 3 * Cp)
            t = jnp.dot(patch, w_ref[ky], preferred_element_type=jnp.float32)
            acc = t if acc is None else acc + t                        # init = first ky
        return acc                                                     # (H*W, Cp) f32

    def instance_norm(y):
        # Single pass: mean and mean-of-squares together, one fused write.
        # (Zero-padded channels give var = 0; rsqrt(eps) is large but it
        # multiplies exact zeros, so padded lanes stay 0.)
        mean = jnp.sum(y, axis=0, keepdims=True) * inv_hw              # (1, Cp)
        msq = jnp.sum(y * y, axis=0, keepdims=True) * inv_hw
        var = jnp.maximum(msq - mean * mean, 0.0)
        return (y - mean) * jax.lax.rsqrt(var + _EPS)

    # Stage 1: reflect-pad -> conv -> instance norm -> ReLU
    y = jnp.maximum(instance_norm(conv3x3_reflect(x, w1_ref)), 0.0)
    y = y.reshape(H, W, Cp)

    # Stage 2: reflect-pad -> conv -> instance norm
    z = instance_norm(conv3x3_reflect(y, w2_ref)).reshape(H, W, Cp)

    # Residual add in f32, stored at the caller's activation dtype
    # (lane-dense store, Cp % 128 == 0).
    o_ref[0] = (x.astype(jnp.float32) + z).astype(o_ref.dtype)


def _pick_vmem_limit():
    # Per-generation scoped-VMEM ceiling: ~half of physical VMEM
    # (-> 64 MiB on v5e/v6e's 128 MiB, 32 MiB on v7x's 64 MiB).
    # Conservative 32 MiB fallback if the hardware query is unavailable.
    try:
        cap = getattr(pltpu.get_tpu_info(), "vmem_capacity_bytes", None)
    except Exception:
        cap = None
    if not cap:
        return 32 * 1024 * 1024
    return int(min(cap // 2, 96 * 1024 * 1024))


def _prep_weight(w, c, cp):
    # (3, 3, Cin, Cout) -> zero-pad channels to Cp, fold kw into the
    # contraction dim (matching the kernel's lane-axis tap concat), bf16.
    # TODO(synk): for unpadded 9*C <= 128 (e.g. C=4 demo) a full-im2col
    # packing would make each conv a single K=128 dot instead of padding.
    wp = jnp.pad(w.astype(jnp.float32),
                 ((0, 0), (0, 0), (0, cp - c), (0, cp - c)))
    return wp.reshape(3, 3 * cp, cp).astype(jnp.bfloat16)


def residual_block_nhwc(x_nhwc, w1f, w2f):
    """NHWC, channel-padded fast path.

    x_nhwc: (N, H, W, Cp), f32 or bf16, with Cp % 128 == 0 and W % 8 == 0.
    w1f/w2f: (3, 3*Cp, Cp) bf16 from _prep_weight (zero-padded beyond the
             real channel count, kw folded into the contraction dim).
    Output dtype follows x_nhwc (use bf16 activations across a full network
    to halve activation DMA; conv accumulation / norm stats stay f32).
    """
    N, H, W, Cp = x_nhwc.shape
    if Cp % 128 != 0:
        raise ValueError(f"Cp={Cp} must be a multiple of 128 (lane width)")
    if W % 8 != 0:
        raise ValueError(f"W={W} must be a multiple of 8 (sublane width); "
                         "otherwise every tap reshape becomes a relayout copy")
    if H < 2:
        raise ValueError("reflection pad of 1 needs H >= 2")
    assert w1f.shape == (3, 3 * Cp, Cp) and w2f.shape == (3, 3 * Cp, Cp)

    # TODO(synk): for large H*W on v7x (64 MiB VMEM, 2 TCs) add H-row tiling
    # with a 1-row reflection halo and a two-pass (stats-accumulate then
    # normalize) instance norm, plus a second "parallel" grid axis so both
    # TensorCores are busy at N=1.  Whole-image-per-step is sized for the
    # small spatial extents used here.
    return pl.pallas_call(
        _residual_block_kernel,
        out_shape=jax.ShapeDtypeStruct((N, H, W, Cp), x_nhwc.dtype),
        grid_spec=pltpu.PrefetchScalarGridSpec(
            num_scalar_prefetch=0,
            grid=(N,),
            in_specs=[
                pl.BlockSpec((1, H, W, Cp), lambda n: (n, 0, 0, 0)),
                # Weights are grid-invariant; default double-buffering costs
                # only ~1.2 MiB total at Cp=128, accepted rather than relying
                # on pipeline_mode=pl.Buffered(1) support in this version.
                pl.BlockSpec((3, 3 * Cp, Cp), lambda n: (0, 0, 0)),
                pl.BlockSpec((3, 3 * Cp, Cp), lambda n: (0, 0, 0)),
            ],
            out_specs=pl.BlockSpec((1, H, W, Cp), lambda n: (n, 0, 0, 0)),
        ),
        compiler_params=pltpu.CompilerParams(
            dimension_semantics=("parallel",),
            vmem_limit_bytes=_pick_vmem_limit(),
        ),
    )(x_nhwc, w1f, w2f)


def residual_block(x_nchw, w1, b1, w2, b2):
    """Drop-in NCHW entry point matching the PyTorch ResidualBlock.

    w1/w2 are in (kh, kw, Cin, Cout) layout (PyTorch's (Cout, Cin, kh, kw)
    transposed by (2, 3, 1, 0)).  b1/b2 are accepted for signature parity but
    NOT used: a per-channel conv bias feeding InstanceNorm2d(affine=False) is
    exactly cancelled by the mean subtraction (mathematical no-op).

    NOTE: in a full network, keep activations NHWC (ideally bf16) with
    channels padded to a lane multiple across all residual blocks and call
    residual_block_nhwc directly -- one layout change per network.
    """
    del b1, b2  # exact no-op before affine-free InstanceNorm
    N, C, H, W = x_nchw.shape
    Cp = ((C + 127) // 128) * 128

    x = jnp.transpose(x_nchw, (0, 2, 3, 1)).astype(jnp.float32)        # NCHW -> NHWC
    x = jnp.pad(x, ((0, 0), (0, 0), (0, 0), (0, Cp - C)))

    out = residual_block_nhwc(x, _prep_weight(w1, C, Cp), _prep_weight(w2, C, Cp))
    return jnp.transpose(out[..., :C], (0, 3, 1, 2))                   # NHWC -> NCHW


def _reference(x_nchw, w1, b1, w2, b2):
    """Pure-JAX f32 reference of the PyTorch forward pass (NHWC internally)."""
    x = jnp.transpose(x_nchw, (0, 2, 3, 1))
    N, H, W, C = x.shape

    def conv(a, w, b):
        ap = jnp.pad(a, ((0, 0), (1, 1), (1, 1), (0, 0)), mode="reflect")
        out = jnp.zeros((N, H, W, C), jnp.float32)
        for dy in range(3):
            for dx in range(3):
                out = out + jnp.einsum("nhwc,cd->nhwd",
                                       ap[:, dy:dy + H, dx:dx + W, :], w[dy, dx])
        return out + b

    def inorm(y):
        mean = y.mean(axis=(1, 2), keepdims=True)
        var = ((y - mean) ** 2).mean(axis=(1, 2), keepdims=True)
        return (y - mean) * jax.lax.rsqrt(var + _EPS)

    y = jnp.maximum(inorm(conv(x, w1, b1)), 0.0)
    z = inorm(conv(y, w2, b2))
    return jnp.transpose(x + z, (0, 3, 1, 2))


if __name__ == "__main__":
    N, C, H, W = 2, 4, 16, 16  # in_features = C = 4

    key = jax.random.PRNGKey(0)
    kx, kw1, kb1, kw2, kb2 = jax.random.split(key, 5)
    x = jax.random.normal(kx, (N, C, H, W), jnp.float32)
    # Conv weights in (kh, kw, Cin, Cout) layout; biases included in the
    # reference to show the kernel-side bias elision is exact.
    w1 = jax.random.normal(kw1, (3, 3, C, C), jnp.float32) * 0.1
    b1 = jax.random.normal(kb1, (C,), jnp.float32) * 0.1
    w2 = jax.random.normal(kw2, (3, 3, C, C), jnp.float32) * 0.1
    b2 = jax.random.normal(kb2, (C,), jnp.float32) * 0.1

    out = jax.block_until_ready(jax.jit(residual_block)(x, w1, b1, w2, b2))
    ref = jax.block_until_ready(_reference(x, w1, b1, w2, b2))

    # Tolerance sized for bf16 MXU operands (f32 accumulation, two convs +
    # two instance norms); any structural bug (reflection indexing, tap/weight
    # fusion order, norm, residual) shows up as O(1) error.
    np.testing.assert_allclose(np.asarray(out), np.asarray(ref),
                               rtol=5e-2, atol=5e-2)
    print("KERNEL_OK")
</pallas_src>

<mosaic_0001>
module attributes {stable_mosaic.version = 11 : i64} {
  func.func @_residual_block_kernel(%arg0: i32, %arg1: memref<1x16x16x128xf32, #tpu.memory_space<vmem>>, %arg2: memref<3x384x128xbf16, #tpu.memory_space<vmem>>, %arg3: memref<3x384x128xbf16, #tpu.memory_space<vmem>>, %arg4: memref<1x16x16x128xf32, #tpu.memory_space<vmem>>) attributes {dimension_semantics = [#tpu.dimension_semantics<parallel>], iteration_bounds = array<i64: 2>, scalar_prefetch = 0 : i64, scratch_operands = 0 : i64, tpu.core_type = #tpu.core_type<tc>, window_params = [{transform_indices = @transform_0, window_bounds = array<i64: 1, 16, 16, 128>}, {pipeline_mode = #tpu.pipeline_mode<synchronous>, transform_indices = @transform_1, window_bounds = array<i64: 3, 384, 128>}, {pipeline_mode = #tpu.pipeline_mode<synchronous>, transform_indices = @transform_2, window_bounds = array<i64: 3, 384, 128>}, {transform_indices = @transform_3, window_bounds = array<i64: 1, 16, 16, 128>}]} {
    %c0 = arith.constant 0 : index
    %c0_0 = arith.constant 0 : index
    %c0_1 = arith.constant 0 : index
    %c0_2 = arith.constant 0 : index
    %0 = vector.load %arg1[%c0, %c0_0, %c0_1, %c0_2] : memref<1x16x16x128xf32, #tpu.memory_space<vmem>>, vector<1x16x16x128xf32>
    %1 = vector.shape_cast %0 : vector<1x16x16x128xf32> to vector<16x16x128xf32>
    %2 = arith.truncf %1 : vector<16x16x128xf32> to vector<16x16x128xbf16>
    %3 = vector.extract_strided_slice %2 {offsets = [1, 0, 0], sizes = [1, 16, 128], strides = [1, 1, 1]} : vector<16x16x128xbf16> to vector<1x16x128xbf16>
    %4 = vector.extract_strided_slice %2 {offsets = [14, 0, 0], sizes = [1, 16, 128], strides = [1, 1, 1]} : vector<16x16x128xbf16> to vector<1x16x128xbf16>
    %5 = tpu.concatenate %3, %2, %4 in 0 : vector<1x16x128xbf16>, vector<16x16x128xbf16>, vector<1x16x128xbf16> -> vector<18x16x128xbf16>
    %6 = vector.extract_strided_slice %5 {offsets = [0, 1, 0], sizes = [18, 1, 128], strides = [1, 1, 1]} : vector<18x16x128xbf16> to vector<18x1x128xbf16>
    %7 = vector.extract_strided_slice %5 {offsets = [0, 0, 0], sizes = [18, 15, 128], strides = [1, 1, 1]} : vector<18x16x128xbf16> to vector<18x15x128xbf16>
    %8 = tpu.concatenate %6, %7 in 1 : vector<18x1x128xbf16>, vector<18x15x128xbf16> -> vector<18x16x128xbf16>
    %9 = vector.extract_strided_slice %5 {offsets = [0, 1, 0], sizes = [18, 15, 128], strides = [1, 1, 1]} : vector<18x16x128xbf16> to vector<18x15x128xbf16>
    %10 = vector.extract_strided_slice %5 {offsets = [0, 14, 0], sizes = [18, 1, 128], strides = [1, 1, 1]} : vector<18x16x128xbf16> to vector<18x1x128xbf16>
    %11 = tpu.concatenate %9, %10 in 1 : vector<18x15x128xbf16>, vector<18x1x128xbf16> -> vector<18x16x128xbf16>
    %12 = tpu.concatenate %8, %5, %11 in 2 : vector<18x16x128xbf16>, vector<18x16x128xbf16>, vector<18x16x128xbf16> -> vector<18x16x384xbf16>
    %13 = vector.extract_strided_slice %12 {offsets = [0, 0, 0], sizes = [16, 16, 384], strides = [1, 1, 1]} : vector<18x16x384xbf16> to vector<16x16x384xbf16>
    %14 = vector.shape_cast %13 : vector<16x16x384xbf16> to vector<256x384xbf16>
    %c0_3 = arith.constant 0 : index
    %c0_4 = arith.constant 0 : index
    %c0_5 = arith.constant 0 : index
    %15 = vector.load %arg2[%c0_3, %c0_4, %c0_5] : memref<3x384x128xbf16, #tpu.memory_space<vmem>>, vector<1x384x128xbf16>
    %16 = vector.shape_cast %15 : vector<1x384x128xbf16> to vector<384x128xbf16>
    %cst = arith.constant dense<0.000000e+00> : vector<256x128xf32>
    %17 = tpu.matmul %14, %16, %cst {dimension_numbers = #tpu.dot_dimension_numbers<[1], [0], [0], [1], [0, 0, 1, 1], [], []>} : vector<256x384xbf16>, vector<384x128xbf16>, vector<256x128xf32> -> vector<256x128xf32>
    %18 = vector.extract_strided_slice %12 {offsets = [1, 0, 0], sizes = [16, 16, 384], strides = [1, 1, 1]} : vector<18x16x384xbf16> to vector<16x16x384xbf16>
    %19 = vector.shape_cast %18 : vector<16x16x384xbf16> to vector<256x384xbf16>
    %c1 = arith.constant 1 : index
    %c0_6 = arith.constant 0 : index
    %c0_7 = arith.constant 0 : index
    %20 = vector.load %arg2[%c1, %c0_6, %c0_7] : memref<3x384x128xbf16, #tpu.memory_space<vmem>>, vector<1x384x128xbf16>
    %21 = vector.shape_cast %20 : vector<1x384x128xbf16> to vector<384x128xbf16>
    %cst_8 = arith.constant dense<0.000000e+00> : vector<256x128xf32>
    %22 = tpu.matmul %19, %21, %cst_8 {dimension_numbers = #tpu.dot_dimension_numbers<[1], [0], [0], [1], [0, 0, 1, 1], [], []>} : vector<256x384xbf16>, vector<384x128xbf16>, vector<256x128xf32> -> vector<256x128xf32>
    %23 = arith.addf %17, %22 : vector<256x128xf32>
    %24 = vector.extract_strided_slice %12 {offsets = [2, 0, 0], sizes = [16, 16, 384], strides = [1, 1, 1]} : vector<18x16x384xbf16> to vector<16x16x384xbf16>
    %25 = vector.shape_cast %24 : vector<16x16x384xbf16> to vector<256x384xbf16>
    %c2 = arith.constant 2 : index
    %c0_9 = arith.constant 0 : index
    %c0_10 = arith.constant 0 : index
    %26 = vector.load %arg2[%c2, %c0_9, %c0_10] : memref<3x384x128xbf16, #tpu.memory_space<vmem>>, vector<1x384x128xbf16>
    %27 = vector.shape_cast %26 : vector<1x384x128xbf16> to vector<384x128xbf16>
    %cst_11 = arith.constant dense<0.000000e+00> : vector<256x128xf32>
    %28 = tpu.matmul %25, %27, %cst_11 {dimension_numbers = #tpu.dot_dimension_numbers<[1], [0], [0], [1], [0, 0, 1, 1], [], []>} : vector<256x384xbf16>, vector<384x128xbf16>, vector<256x128xf32> -> vector<256x128xf32>
    %29 = arith.addf %23, %28 : vector<256x128xf32>
    %cst_12 = arith.constant dense<0.000000e+00> : vector<128xf32>
    %30 = vector.multi_reduction <add>, %29, %cst_12 [0] : vector<256x128xf32> to vector<128xf32>
    %31 = vector.shape_cast %30 : vector<128xf32> to vector<1x128xf32>
    %cst_13 = arith.constant 3.906250e-03 : f32
    %32 = vector.broadcast %cst_13 : f32 to vector<1x128xf32>
    %33 = arith.mulf %31, %32 : vector<1x128xf32>
    %34 = arith.mulf %29, %29 : vector<256x128xf32>
    %cst_14 = arith.constant dense<0.000000e+00> : vector<128xf32>
    %35 = vector.multi_reduction <add>, %34, %cst_14 [0] : vector<256x128xf32> to vector<128xf32>
    %36 = vector.shape_cast %35 : vector<128xf32> to vector<1x128xf32>
    %cst_15 = arith.constant 3.906250e-03 : f32
    %37 = vector.broadcast %cst_15 : f32 to vector<1x128xf32>
    %38 = arith.mulf %36, %37 : vector<1x128xf32>
    %39 = arith.mulf %33, %33 : vector<1x128xf32>
    %40 = arith.subf %38, %39 : vector<1x128xf32>
    %cst_16 = arith.constant 0.000000e+00 : f32
    %41 = vector.broadcast %cst_16 : f32 to vector<1x128xf32>
    %42 = arith.maximumf %40, %41 : vector<1x128xf32>
    %43 = vector.broadcast %33 : vector<1x128xf32> to vector<256x128xf32>
    %44 = arith.subf %29, %43 : vector<256x128xf32>
    %cst_17 = arith.constant 9.99999974E-6 : f32
    %45 = vector.broadcast %cst_17 : f32 to vector<1x128xf32>
    %46 = arith.addf %42, %45 : vector<1x128xf32>
    %47 = math.rsqrt %46 : vector<1x128xf32>
    %48 = vector.broadcast %47 : vector<1x128xf32> to vector<256x128xf32>
    %49 = arith.mulf %44, %48 : vector<256x128xf32>
    %cst_18 = arith.constant 0.000000e+00 : f32
    %50 = vector.broadcast %cst_18 : f32 to vector<256x128xf32>
    %51 = arith.maximumf %49, %50 : vector<256x128xf32>
    %52 = vector.shape_cast %51 : vector<256x128xf32> to vector<16x16x128xf32>
    %53 = arith.truncf %52 : vector<16x16x128xf32> to vector<16x16x128xbf16>
    %54 = vector.extract_strided_slice %53 {offsets = [1, 0, 0], sizes = [1, 16, 128], strides = [1, 1, 1]} : vector<16x16x128xbf16> to vector<1x16x128xbf16>
    %55 = vector.extract_strided_slice %53 {offsets = [14, 0, 0], sizes = [1, 16, 128], strides = [1, 1, 1]} : vector<16x16x128xbf16> to vector<1x16x128xbf16>
    %56 = tpu.concatenate %54, %53, %55 in 0 : vector<1x16x128xbf16>, vector<16x16x128xbf16>, vector<1x16x128xbf16> -> vector<18x16x128xbf16>
    %57 = vector.extract_strided_slice %56 {offsets = [0, 1, 0], sizes = [18, 1, 128], strides = [1, 1, 1]} : vector<18x16x128xbf16> to vector<18x1x128xbf16>
    %58 = vector.extract_strided_slice %56 {offsets = [0, 0, 0], sizes = [18, 15, 128], strides = [1, 1, 1]} : vector<18x16x128xbf16> to vector<18x15x128xbf16>
    %59 = tpu.concatenate %57, %58 in 1 : vector<18x1x128xbf16>, vector<18x15x128xbf16> -> vector<18x16x128xbf16>
    %60 = vector.extract_strided_slice %56 {offsets = [0, 1, 0], sizes = [18, 15, 128], strides = [1, 1, 1]} : vector<18x16x128xbf16> to vector<18x15x128xbf16>
    %61 = vector.extract_strided_slice %56 {offsets = [0, 14, 0], sizes = [18, 1, 128], strides = [1, 1, 1]} : vector<18x16x128xbf16> to vector<18x1x128xbf16>
    %62 = tpu.concatenate %60, %61 in 1 : vector<18x15x128xbf16>, vector<18x1x128xbf16> -> vector<18x16x128xbf16>
    %63 = tpu.concatenate %59, %56, %62 in 2 : vector<18x16x128xbf16>, vector<18x16x128xbf16>, vector<18x16x128xbf16> -> vector<18x16x384xbf16>
    %64 = vector.extract_strided_slice %63 {offsets = [0, 0, 0], sizes = [16, 16, 384], strides = [1, 1, 1]} : vector<18x16x384xbf16> to vector<16x16x384xbf16>
    %65 = vector.shape_cast %64 : vector<16x16x384xbf16> to vector<256x384xbf16>
    %c0_19 = arith.constant 0 : index
    %c0_20 = arith.constant 0 : index
    %c0_21 = arith.constant 0 : index
    %66 = vector.load %arg3[%c0_19, %c0_20, %c0_21] : memref<3x384x128xbf16, #tpu.memory_space<vmem>>, vector<1x384x128xbf16>
    %67 = vector.shape_cast %66 : vector<1x384x128xbf16> to vector<384x128xbf16>
    %cst_22 = arith.constant dense<0.000000e+00> : vector<256x128xf32>
    %68 = tpu.matmul %65, %67, %cst_22 {dimension_numbers = #tpu.dot_dimension_numbers<[1], [0], [0], [1], [0, 0, 1, 1], [], []>} : vector<256x384xbf16>, vector<384x128xbf16>, vector<256x128xf32> -> vector<256x128xf32>
    %69 = vector.extract_strided_slice %63 {offsets = [1, 0, 0], sizes = [16, 16, 384], strides = [1, 1, 1]} : vector<18x16x384xbf16> to vector<16x16x384xbf16>
    %70 = vector.shape_cast %69 : vector<16x16x384xbf16> to vector<256x384xbf16>
    %c1_23 = arith.constant 1 : index
    %c0_24 = arith.constant 0 : index
    %c0_25 = arith.constant 0 : index
    %71 = vector.load %arg3[%c1_23, %c0_24, %c0_25] : memref<3x384x128xbf16, #tpu.memory_space<vmem>>, vector<1x384x128xbf16>
    %72 = vector.shape_cast %71 : vector<1x384x128xbf16> to vector<384x128xbf16>
    %cst_26 = arith.constant dense<0.000000e+00> : vector<256x128xf32>
    %73 = tpu.matmul %70, %72, %cst_26 {dimension_numbers = #tpu.dot_dimension_numbers<[1], [0], [0], [1], [0, 0, 1, 1], [], []>} : vector<256x384xbf16>, vector<384x128xbf16>, vector<256x128xf32> -> vector<256x128xf32>
    %74 = arith.addf %68, %73 : vector<256x128xf32>
    %75 = vector.extract_strided_slice %63 {offsets = [2, 0, 0], sizes = [16, 16, 384], strides = [1, 1, 1]} : vector<18x16x384xbf16> to vector<16x16x384xbf16>
    %76 = vector.shape_cast %75 : vector<16x16x384xbf16> to vector<256x384xbf16>
    %c2_27 = arith.constant 2 : index
    %c0_28 = arith.constant 0 : index
    %c0_29 = arith.constant 0 : index
    %77 = vector.load %arg3[%c2_27, %c0_28, %c0_29] : memref<3x384x128xbf16, #tpu.memory_space<vmem>>, vector<1x384x128xbf16>
    %78 = vector.shape_cast %77 : vector<1x384x128xbf16> to vector<384x128xbf16>
    %cst_30 = arith.constant dense<0.000000e+00> : vector<256x128xf32>
    %79 = tpu.matmul %76, %78, %cst_30 {dimension_numbers = #tpu.dot_dimension_numbers<[1], [0], [0], [1], [0, 0, 1, 1], [], []>} : vector<256x384xbf16>, vector<384x128xbf16>, vector<256x128xf32> -> vector<256x128xf32>
    %80 = arith.addf %74, %79 : vector<256x128xf32>
    %cst_31 = arith.constant dense<0.000000e+00> : vector<128xf32>
    %81 = vector.multi_reduction <add>, %80, %cst_31 [0] : vector<256x128xf32> to vector<128xf32>
    %82 = vector.shape_cast %81 : vector<128xf32> to vector<1x128xf32>
    %cst_32 = arith.constant 3.906250e-03 : f32
    %83 = vector.broadcast %cst_32 : f32 to vector<1x128xf32>
    %84 = arith.mulf %82, %83 : vector<1x128xf32>
    %85 = arith.mulf %80, %80 : vector<256x128xf32>
    %cst_33 = arith.constant dense<0.000000e+00> : vector<128xf32>
    %86 = vector.multi_reduction <add>, %85, %cst_33 [0] : vector<256x128xf32> to vector<128xf32>
    %87 = vector.shape_cast %86 : vector<128xf32> to vector<1x128xf32>
    %cst_34 = arith.constant 3.906250e-03 : f32
    %88 = vector.broadcast %cst_34 : f32 to vector<1x128xf32>
    %89 = arith.mulf %87, %88 : vector<1x128xf32>
    %90 = arith.mulf %84, %84 : vector<1x128xf32>
    %91 = arith.subf %89, %90 : vector<1x128xf32>
    %cst_35 = arith.constant 0.000000e+00 : f32
    %92 = vector.broadcast %cst_35 : f32 to vector<1x128xf32>
    %93 = arith.maximumf %91, %92 : vector<1x128xf32>
    %94 = vector.broadcast %84 : vector<1x128xf32> to vector<256x128xf32>
    %95 = arith.subf %80, %94 : vector<256x128xf32>
    %cst_36 = arith.constant 9.99999974E-6 : f32
    %96 = vector.broadcast %cst_36 : f32 to vector<1x128xf32>
    %97 = arith.addf %93, %96 : vector<1x128xf32>
    %98 = math.rsqrt %97 : vector<1x128xf32>
    %99 = vector.broadcast %98 : vector<1x128xf32> to vector<256x128xf32>
    %100 = arith.mulf %95, %99 : vector<256x128xf32>
    %101 = vector.shape_cast %100 : vector<256x128xf32> to vector<16x16x128xf32>
    %102 = arith.addf %1, %101 : vector<16x16x128xf32>
    %c0_37 = arith.constant 0 : index
    %c0_38 = arith.constant 0 : index
    %c0_39 = arith.constant 0 : index
    %c0_40 = arith.constant 0 : index
    %103 = vector.load %arg4[%c0_37, %c0_38, %c0_39, %c0_40] : memref<1x16x16x128xf32, #tpu.memory_space<vmem>>, vector<1x16x16x128xf32>
    %104 = vector.shape_cast %103 : vector<1x16x16x128xf32> to vector<16x16x128xf32>
    %105 = vector.shape_cast %102 : vector<16x16x128xf32> to vector<1x16x16x128xf32>
    tpu.vector_store %arg4[%c0_37, %c0_38, %c0_39, %c0_40], %105 {strides = array<i32>} : memref<1x16x16x128xf32, #tpu.memory_space<vmem>>, vector<1x16x16x128xf32>,
    return
  }
  func.func @transform_0(%arg0: i32) -> (i32, i32, i32, i32) {
    %c0_i32 = arith.constant 0 : i32
    %c0_i32_0 = arith.constant 0 : i32
    %c0_i32_1 = arith.constant 0 : i32
    %c0_i32_2 = arith.constant 0 : i32
    return %arg0, %c0_i32, %c0_i32_0, %c0_i32_1 : i32, i32, i32, i32
  }
  func.func @transform_1(%arg0: i32) -> (i32, i32, i32) {
    %c0_i32 = arith.constant 0 : i32
    %c0_i32_0 = arith.constant 0 : i32
    %c0_i32_1 = arith.constant 0 : i32
    %c0_i32_2 = arith.constant 0 : i32
    return %c0_i32, %c0_i32_0, %c0_i32_1 : i32, i32, i32
  }
  func.func @transform_2(%arg0: i32) -> (i32, i32, i32) {
    %c0_i32 = arith.constant 0 : i32
    %c0_i32_0 = arith.constant 0 : i32
    %c0_i32_1 = arith.constant 0 : i32
    %c0_i32_2 = arith.constant 0 : i32
    return %c0_i32, %c0_i32_0, %c0_i32_1 : i32, i32, i32
  }
  func.func @transform_3(%arg0: i32) -> (i32, i32, i32, i32) {
    %c0_i32 = arith.constant 0 : i32
    %c0_i32_0 = arith.constant 0 : i32
    %c0_i32_1 = arith.constant 0 : i32
    %c0_i32_2 = arith.constant 0 : i32
    return %arg0, %c0_i32, %c0_i32_0, %c0_i32_1 : i32, i32, i32, i32
  }
}

</mosaic_0001>

<llo_original>
// kernel: residual_block.1
$region0: #{residual_block.1}
  #allocation0 [shape = 'u32[]', space=smem, size = 0x4, offset = 0x4, fixed_abs, tag = 'smem constant byte address 0x4 - core index']
  #allocation1 [shape = 'u32[144,128]{1,0:T(1,128)}', space=vmem, size = 0x12000, scoped, tag = 'internal scratch']
  %s0 = inlined_call_operand.vmem [shape: f32[2,16,16,128], index: 0, kind: input, shape index: {}]
  %s1 = inlined_call_operand.vmem [shape: bf16[3,384,128], index: 1, kind: input, shape index: {}]
  %s2 = inlined_call_operand.vmem [shape: bf16[3,384,128], index: 2, kind: input, shape index: {}]
  %s3 = inlined_call_operand.vmem [shape: f32[2,16,16,128], index: 3, kind: output, shape index: {}]
  %s4 = sld [smem:[#allocation0]]
  $region45: #{residual_block.1} parent=0
    _
  %s6 = ssub.s32 1, %s4
  %s7 = scalar_select 0, %s6, %s4
  loop: start=0, step=1, limit=4
  $region2: #{residual_block.1} parent=0 // loop_pre_header
    _
  $region3: #{residual_block.1} parent=0 // loop_header
    %s9 = sphi 0, %s13
    %p10 = scmp.ge.s32.totalorder %s9, 4
    %s19 = sphi 0, %s21
    %s22 = sphi 0, %s19
    %s23 = sphi 0, %s22
    %s39 = sphi 0, %s23
    %s43 = sphi 0, %s43
    %s45 = sphi 0, %s43
    %s46 = sphi 0, %s45
    %s60 = sphi 0, %s46
    %s64 = sphi 0, %s64
    %s66 = sphi 0, %s64
    %s67 = sphi 0, %s66
    %s81 = sphi 0, %s67
    %s87 = sphi 0, %s89
    %s90 = sphi 0, %s87
    %s91 = sphi 0, %s90
    %s107 = sphi 0, %s91
  $region4: #{residual_block.1} parent=0 // loop_header_branch
    %12 = sbr.rel (%p10) target = $region8
  $region5: #{residual_block.1} parent=0 // loop_body
    %s14 = ssub.s32 %s9, 1
    %s15 = ssub.s32 %s9, 2
    %s16 = sadd.s32 %s9, 1
    %s17 = ssub.s32 %s9, %s16
    %p18 = scmp.eq.s32.totalorder %s17, 0
    %s20 = sadd.s32 %s19, 1
    %s21 = scalar_select %p18, %s19, %s20
    %p24 = pneg %p18
    %p25 = scmp.eq.s32.totalorder %s9, 1
    %p26 = por %p24, %p25
    %p27 = scmp.ne.s32.totalorder %s19, %s22
    %p28 = scmp.eq.s32.totalorder %s9, 0
    %p29 = por %p27, %p28
    %p30 = scmp.ne.s32.totalorder %s19, %s22
    %p31 = scmp.eq.s32.totalorder %s14, 1
    %p32 = por %p30, %p31
    %p33 = scmp.ne.s32.totalorder %s22, %s23
    %p34 = scmp.eq.s32.totalorder %s14, 0
    %p35 = por %p33, %p34
    %p36 = scmp.ne.s32.totalorder %s22, %s23
    %p37 = scmp.eq.s32.totalorder %s15, 1
    %p38 = por %p36, %p37
    %p40 = scmp.ne.s32.totalorder %s23, %s39
    %p41 = scmp.eq.s32.totalorder %s15, 0
    %p42 = por %p40, %p41
    %s44 = sadd.s32 %s43, 1
    %p47 = scmp.eq.s32.totalorder %s9, 1
    %p48 = scmp.ne.s32.totalorder %s43, %s45
    %p49 = scmp.eq.s32.totalorder %s9, 0
    %p50 = por %p48, %p49
    %p51 = scmp.ne.s32.totalorder %s43, %s45
    %p52 = scmp.eq.s32.totalorder %s14, 1
    %p53 = por %p51, %p52
    %p54 = scmp.ne.s32.totalorder %s45, %s46
    %p55 = scmp.eq.s32.totalorder %s14, 0
    %p56 = por %p54, %p55
    %p57 = scmp.ne.s32.totalorder %s45, %s46
    %p58 = scmp.eq.s32.totalorder %s15, 1
    %p59 = por %p57, %p58
    %p61 = scmp.ne.s32.totalorder %s46, %s60
    %p62 = scmp.eq.s32.totalorder %s15, 0
    %p63 = por %p61, %p62
    %s65 = sadd.s32 %s64, 1
    %p68 = scmp.eq.s32.totalorder %s9, 1
    %p69 = scmp.ne.s32.totalorder %s64, %s66
    %p70 = scmp.eq.s32.totalorder %s9, 0
    %p71 = por %p69, %p70
    %p72 = scmp.ne.s32.totalorder %s64, %s66
    %p73 = scmp.eq.s32.totalorder %s14, 1
    %p74 = por %p72, %p73
    %p75 = scmp.ne.s32.totalorder %s66, %s67
    %p76 = scmp.eq.s32.totalorder %s14, 0
    %p77 = por %p75, %p76
    %p78 = scmp.ne.s32.totalorder %s66, %s67
    %p79 = scmp.eq.s32.totalorder %s15, 1
    %p80 = por %p78, %p79
    %p82 = scmp.ne.s32.totalorder %s67, %s81
    %p83 = scmp.eq.s32.totalorder %s15, 0
    %p84 = por %p82, %p83
    %s85 = ssub.s32 %s9, %s16
    %p86 = scmp.eq.s32.totalorder %s85, 0
    %s88 = sadd.s32 %s87, 1
    %s89 = scalar_select %p86, %s87, %s88
    %p92 = pneg %p86
    %p93 = scmp.eq.s32.totalorder %s9, 1
    %p94 = por %p92, %p93
    %p95 = scmp.ne.s32.totalorder %s87, %s90
    %p96 = scmp.eq.s32.totalorder %s9, 0
    %p97 = por %p95, %p96
    %p98 = scmp.ne.s32.totalorder %s87, %s90
    %p99 = scmp.eq.s32.totalorder %s14, 1
    %p100 = por %p98, %p99
    %p101 = scmp.ne.s32.totalorder %s90, %s91
    %p102 = scmp.eq.s32.totalorder %s14, 0
    %p103 = por %p101, %p102
    %p104 = scmp.ne.s32.totalorder %s90, %s91
    %p105 = scmp.eq.s32.totalorder %s15, 1
    %p106 = por %p104, %p105
    %p108 = scmp.ne.s32.totalorder %s91, %s107
    %p109 = scmp.eq.s32.totalorder %s15, 0
    %p110 = por %p108, %p109
    %p111 = scmp.le.s32.totalorder 1, %s9
    %p112 = scmp.lt.s32.totalorder %s9, 3
    %p113 = pnand %p111, %p112
    %p114 = pneg %p113
    // Predicated region
    $region9: #{residual_block.1} parent=5 // pred_check
      _
    $region10: #{residual_block.1} parent=5 // pred_check_branch
      %116 = sbr.rel (%p113) target = $region12
    $region11: #{residual_block.1} parent=5 // pred_region
      %s117 = ssub.s32 %s9, 1
      // Predicated region
      $region13: #{residual_block.1} parent=11 // pred_check
        %p118 = pneg %p56
      $region14: #{residual_block.1} parent=11 // pred_check_branch
        %120 = sbr.rel (%p118) target = $region16
      $region15: #{residual_block.1} parent=11 // pred_region
        _
      $region16: #{residual_block.1} parent=11 // pred_fallthru
        _
      // Predicated region
      $region17: #{residual_block.1} parent=11 // pred_check
        %p121 = pneg %p77
      $region18: #{residual_block.1} parent=11 // pred_check_branch
        %123 = sbr.rel (%p121) target = $region20
      $region19: #{residual_block.1} parent=11 // pred_region
        _
      $region20: #{residual_block.1} parent=11 // pred_fallthru
        _
    $region12: #{residual_block.1} parent=5 // pred_fallthru
      _
    %p124 = scmp.lt.s32.totalorder %s9, 2
    // Predicated region
    $region21: #{residual_block.1} parent=5 // pred_check
      %p125 = pneg %p124
    $region22: #{residual_block.1} parent=5 // pred_check_branch
      %127 = sbr.rel (%p125) target = $region24
    $region23: #{residual_block.1} parent=5 // pred_region
      // Predicated region
      $region25: #{residual_block.1} parent=23 // pred_check
        %p128 = pneg %p29
      $region26: #{residual_block.1} parent=23 // pred_check_branch
        %130 = sbr.rel (%p128) target = $region28
      $region27: #{residual_block.1} parent=23 // pred_region
        %p131 = scmp.lt.s32.totalorder %s9, 1
        %s132 = scalar_select %p131, %s9, 1
        %s133 = smul.addr %s132, 32
        %s134 = smul.addr %s133, 8
        %s135 = scalar_lea.vmem %s0, %s134
      $region28: #{residual_block.1} parent=23 // pred_fallthru
        _
    $region24: #{residual_block.1} parent=5 // pred_fallthru
      _
    %p136 = scmp.le.s32.totalorder 1, %s9
    %p137 = scmp.lt.s32.totalorder %s9, 3
    %p138 = pnand %p136, %p137
    %p139 = pneg %p138
    // Predicated region
    $region29: #{residual_block.1} parent=5 // pred_check
      _
    $region30: #{residual_block.1} parent=5 // pred_check_branch
      %141 = sbr.rel (%p138) target = $region32
    $region31: #{residual_block.1} parent=5 // pred_region
      %s142 = ssub.s32 %s9, 1
      %p143 = scmp.lt.s32.totalorder %s14, 1
      %s144 = scalar_select %p143, %s14, 1
      %s145 = smul.addr %s144, 32
      %s146 = smul.addr %s145, 8
      %s147 = scalar_lea.vmem %s0, %s146
      %p148 = pneg %p35
      %p149 = pneg %p32
      %p150 = pneg %p56
      %p151 = pneg %p53
      %p152 = pneg %p77
      %p153 = pneg %p74
      %p154 = pneg %p103
      %p155 = pneg %p100
      %p156 = scmp.lt.s32.totalorder %s14, 1
      %s157 = scalar_select %p156, %s14, 1
      %s158 = smul.addr %s157, 32
      %s159 = smul.addr %s158, 8
      %s160 = scalar_lea.vmem %s3, %s159
      %p161 = scmp.lt.s32.totalorder %s14, 1
      %s162 = scalar_select %p161, %s14, 1
      %s163 = smul.addr %s162, 32
      %s164 = smul.addr %s163, 8
      %s165 = scalar_lea.vmem %s0, %s164
      %p166 = scmp.lt.s32.totalorder %s14, 1
      %s167 = scalar_select %p166, %s14, 1
      %s168 = smul.addr %s167, 32
      %s169 = smul.addr %s168, 8
      %s170 = scalar_lea.vmem %s3, %s169
      %v172 = vld [vmem:[%s165] sm:$0xff]
      %v173 = vld [vmem:[%s165 + $0x8] sm:$0xff]
      %v174 = vld [vmem:[%s165 + $0x10] sm:$0xff]
      %v175 = vld [vmem:[%s165 + $0x18] sm:$0xff]
      %v176 = vld [vmem:[%s165 + $0x20] sm:$0xff]
      %v177 = vld [vmem:[%s165 + $0x28] sm:$0xff]
      %v178 = vld [vmem:[%s165 + $0x30] sm:$0xff]
      %v179 = vld [vmem:[%s165 + $0x38] sm:$0xff]
      %v180 = vld [vmem:[%s165 + $0x40] sm:$0xff]
      %v181 = vld [vmem:[%s165 + $0x48] sm:$0xff]
      %v182 = vld [vmem:[%s165 + $0x50] sm:$0xff]
      %v183 = vld [vmem:[%s165 + $0x58] sm:$0xff]
      %v184 = vld [vmem:[%s165 + $0x60] sm:$0xff]
      %v185 = vld [vmem:[%s165 + $0x68] sm:$0xff]
      %v186 = vld [vmem:[%s165 + $0x70] sm:$0xff]
      %v187 = vld [vmem:[%s165 + $0x78] sm:$0xff]
      %v188 = vld [vmem:[%s165 + $0x80] sm:$0xff]
      %v189 = vld [vmem:[%s165 + $0x88] sm:$0xff]
      %v190 = vld [vmem:[%s165 + $0x90] sm:$0xff]
      %v191 = vld [vmem:[%s165 + $0x98] sm:$0xff]
      %v192 = vld [vmem:[%s165 + $0xa0] sm:$0xff]
      %v193 = vld [vmem:[%s165 + $0xa8] sm:$0xff]
      %v194 = vld [vmem:[%s165 + $0xb0] sm:$0xff]
      %v195 = vld [vmem:[%s165 + $0xb8] sm:$0xff]
      %v196 = vld [vmem:[%s165 + $0xc0] sm:$0xff]
      %v197 = vld [vmem:[%s165 + $0xc8] sm:$0xff]
      %v198 = vld [vmem:[%s165 + $0xd0] sm:$0xff]
      %v199 = vld [vmem:[%s165 + $0xd8] sm:$0xff]
      %v200 = vld [vmem:[%s165 + $0xe0] sm:$0xff]
      %v201 = vld [vmem:[%s165 + $0xe8] sm:$0xff]
      %v202 = vld [vmem:[%s165 + $0xf0] sm:$0xff]
      %v203 = vld [vmem:[%s165 + $0xf8] sm:$0xff]
      %v204 = vpack.c.bf16 %v173, %v172
      %v205 = vpack.c.bf16 %v175, %v174
      %v206 = vpack.c.bf16 %v177, %v176
      %v207 = vpack.c.bf16 %v179, %v178
      %v208 = vpack.c.bf16 %v181, %v180
      %v209 = vpack.c.bf16 %v183, %v182
      %v210 = vpack.c.bf16 %v185, %v184
      %v211 = vpack.c.bf16 %v187, %v186
      %v212 = vpack.c.bf16 %v189, %v188
      %v213 = vpack.c.bf16 %v191, %v190
      %v214 = vpack.c.bf16 %v193, %v192
      %v215 = vpack.c.bf16 %v195, %v194
      %v216 = vpack.c.bf16 %v197, %v196
      %v217 = vpack.c.bf16 %v199, %v198
      %v218 = vpack.c.bf16 %v201, %v200
      %v219 = vpack.c.bf16 %v203, %v202
      %v221 = vshrl.u32 %v205, 16
      %v224 = vshrl.u32 %v204, 16
      %v227 = vshrl.u32 %v206, 16
      %v230 = vshrl.u32 %v207, 16
      %v233 = vshrl.u32 %v208, 16
      %v236 = vshrl.u32 %v209, 16
      %v239 = vshrl.u32 %v210, 16
      %v242 = vshrl.u32 %v211, 16
      %v245 = vshrl.u32 %v212, 16
      %v248 = vshrl.u32 %v213, 16
      %v251 = vshrl.u32 %v214, 16
      %v254 = vshrl.u32 %v215, 16
      %v257 = vshrl.u32 %v216, 16
      %v260 = vshrl.u32 %v217, 16
      %v263 = vshrl.u32 %v218, 16
      %v266 = vshrl.u32 %v219, 16
      %v284 = vrot.slane %v221, 7
      %v285 = vshll.u32 %v205, 16
      %v287 = vor.u32 %v284, %v285
      %v288 = vrot.slane %v224, 7
      %v289 = vshll.u32 %v204, 16
      %v291 = vor.u32 %v288, %v289
      %v292 = vrot.slane %v227, 7
      %v293 = vshll.u32 %v206, 16
      %v295 = vor.u32 %v292, %v293
      %v296 = vrot.slane %v230, 7
      %v297 = vshll.u32 %v207, 16
      %v299 = vor.u32 %v296, %v297
      %v300 = vrot.slane %v233, 7
      %v301 = vshll.u32 %v208, 16
      %v303 = vor.u32 %v300, %v301
      %v304 = vrot.slane %v236, 7
      %v305 = vshll.u32 %v209, 16
      %v307 = vor.u32 %v304, %v305
      %v308 = vrot.slane %v239, 7
      %v309 = vshll.u32 %v210, 16
      %v311 = vor.u32 %v308, %v309
      %v312 = vrot.slane %v242, 7
      %v313 = vshll.u32 %v211, 16
      %v315 = vor.u32 %v312, %v313
      %v316 = vrot.slane %v245, 7
      %v317 = vshll.u32 %v212, 16
      %v319 = vor.u32 %v316, %v317
      %v320 = vrot.slane %v248, 7
      %v321 = vshll.u32 %v213, 16
      %v323 = vor.u32 %v320, %v321
      %v324 = vrot.slane %v251, 7
      %v325 = vshll.u32 %v214, 16
      %v327 = vor.u32 %v324, %v325
      %v328 = vrot.slane %v254, 7
      %v329 = vshll.u32 %v215, 16
      %v331 = vor.u32 %v328, %v329
      %v332 = vrot.slane %v257, 7
      %v333 = vshll.u32 %v216, 16
      %v335 = vor.u32 %v332, %v333
      %v336 = vrot.slane %v260, 7
      %v337 = vshll.u32 %v217, 16
      %v339 = vor.u32 %v336, %v337
      %v340 = vrot.slane %v263, 7
      %v341 = vshll.u32 %v218, 16
      %v343 = vor.u32 %v340, %v341
      %v344 = vrot.slane %v266, 7
      %v345 = vshll.u32 %v219, 16
      %v347 = vor.u32 %v344, %v345
      %vm364 = vcmask 1040384
      %vm365 = vsmask.f32 256
      %vm366 = vmand %vm364, %vm365
      %v367 = vsel %vm366, %v221, %v287
      %v368 = vsel %vm366, %v224, %v291
      %v369 = vsel %vm366, %v227, %v295
      %v370 = vsel %vm366, %v230, %v299
      %v371 = vsel %vm366, %v233, %v303
      %v372 = vsel %vm366, %v236, %v307
      %v373 = vsel %vm366, %v239, %v311
      %v374 = vsel %vm366, %v242, %v315
      %v375 = vsel %vm366, %v245, %v319
      %v376 = vsel %vm366, %v248, %v323
      %v377 = vsel %vm366, %v251, %v327
      %v378 = vsel %vm366, %v254, %v331
      %v379 = vsel %vm366, %v257, %v335
      %v380 = vsel %vm366, %v260, %v339
      %v381 = vsel %vm366, %v263, %v343
      %v382 = vsel %vm366, %v266, %v347
      %v383 = vrot.slane %v285, 1
      %v384 = vor.u32 %v221, %v383
      %v385 = vrot.slane %v289, 1
      %v386 = vor.u32 %v224, %v385
      %v387 = vrot.slane %v293, 1
      %v388 = vor.u32 %v227, %v387
      %v389 = vrot.slane %v297, 1
      %v390 = vor.u32 %v230, %v389
      %v391 = vrot.slane %v301, 1
      %v392 = vor.u32 %v233, %v391
      %v393 = vrot.slane %v305, 1
      %v394 = vor.u32 %v236, %v393
      %v395 = vrot.slane %v309, 1
      %v396 = vor.u32 %v239, %v395
      %v397 = vrot.slane %v313, 1
      %v398 = vor.u32 %v242, %v397
      %v399 = vrot.slane %v317, 1
      %v400 = vor.u32 %v245, %v399
      %v401 = vrot.slane %v321, 1
      %v402 = vor.u32 %v248, %v401
      %v403 = vrot.slane %v325, 1
      %v404 = vor.u32 %v251, %v403
      %v405 = vrot.slane %v329, 1
      %v406 = vor.u32 %v254, %v405
      %v407 = vrot.slane %v333, 1
      %v408 = vor.u32 %v257, %v407
      %v409 = vrot.slane %v337, 1
      %v410 = vor.u32 %v260, %v409
      %v411 = vrot.slane %v341, 1
      %v412 = vor.u32 %v263, %v411
      %v413 = vrot.slane %v345, 1
      %v414 = vor.u32 %v266, %v413
      %vm447 = vcmask 1047552
      %vm448 = vsmask.f32 7424
      %vm449 = vmand %vm447, %vm448
      %v450 = vsel %vm449, %v384, %v285
      %v451 = vsel %vm449, %v386, %v289
      %v452 = vsel %vm449, %v388, %v293
      %v453 = vsel %vm449, %v390, %v297
      %v454 = vsel %vm449, %v392, %v301
      %v455 = vsel %vm449, %v394, %v305
      %v456 = vsel %vm449, %v396, %v309
      %v457 = vsel %vm449, %v398, %v313
      %v458 = vsel %vm449, %v400, %v317
      %v459 = vsel %vm449, %v402, %v321
      %v460 = vsel %vm449, %v404, %v325
      %v461 = vsel %vm449, %v406, %v329
      %v462 = vsel %vm449, %v408, %v333
      %v463 = vsel %vm449, %v410, %v337
      %v464 = vsel %vm449, %v412, %v341
      %v465 = vsel %vm449, %v414, %v345
      %v466 = vld [vmem:[%s1] sm:$0xf]
      %v467 = vld [vmem:[%s1 + $0x4] sm:$0xf]
      %v468 = vld [vmem:[%s1 + $0x8] sm:$0xf]
      %v469 = vld [vmem:[%s1 + $0xc] sm:$0xf]
      %v470 = vld [vmem:[%s1 + $0x10] sm:$0xf]
      %v471 = vld [vmem:[%s1 + $0x14] sm:$0xf]
      %v472 = vld [vmem:[%s1 + $0x18] sm:$0xf]
      %v473 = vld [vmem:[%s1 + $0x1c] sm:$0xf]
      %v474 = vld [vmem:[%s1 + $0x20] sm:$0xf]
      %v475 = vld [vmem:[%s1 + $0x24] sm:$0xf]
      %v476 = vld [vmem:[%s1 + $0x28] sm:$0xf]
      %v477 = vld [vmem:[%s1 + $0x2c] sm:$0xf]
      %v478 = vld [vmem:[%s1 + $0x30] sm:$0xf]
      %v479 = vld [vmem:[%s1 + $0x34] sm:$0xf]
      %v480 = vld [vmem:[%s1 + $0x38] sm:$0xf]
      %v481 = vld [vmem:[%s1 + $0x3c] sm:$0xf]
      %v482 = vld [vmem:[%s1 + $0x40] sm:$0xf]
      %v483 = vld [vmem:[%s1 + $0x44] sm:$0xf]
      %v484 = vld [vmem:[%s1 + $0x48] sm:$0xf]
      %v485 = vld [vmem:[%s1 + $0x4c] sm:$0xf]
      %v486 = vld [vmem:[%s1 + $0x50] sm:$0xf]
      %v487 = vld [vmem:[%s1 + $0x54] sm:$0xf]
      %v488 = vld [vmem:[%s1 + $0x58] sm:$0xf]
      %v489 = vld [vmem:[%s1 + $0x5c] sm:$0xf]
      %v490 = vld [vmem:[%s1 + $0x60] sm:$0xf]
      %v491 = vld [vmem:[%s1 + $0x64] sm:$0xf]
      %v492 = vld [vmem:[%s1 + $0x68] sm:$0xf]
      %v493 = vld [vmem:[%s1 + $0x6c] sm:$0xf]
      %v494 = vld [vmem:[%s1 + $0x70] sm:$0xf]
      %v495 = vld [vmem:[%s1 + $0x74] sm:$0xf]
      %v496 = vld [vmem:[%s1 + $0x78] sm:$0xf]
      %v497 = vld [vmem:[%s1 + $0x7c] sm:$0xf]
      %v498 = vld [vmem:[%s1 + $0x80] sm:$0xf]
      %v499 = vld [vmem:[%s1 + $0x84] sm:$0xf]
      %v500 = vld [vmem:[%s1 + $0x88] sm:$0xf]
      %v501 = vld [vmem:[%s1 + $0x8c] sm:$0xf]
      %v502 = vld [vmem:[%s1 + $0x90] sm:$0xf]
      %v503 = vld [vmem:[%s1 + $0x94] sm:$0xf]
      %v504 = vld [vmem:[%s1 + $0x98] sm:$0xf]
      %v505 = vld [vmem:[%s1 + $0x9c] sm:$0xf]
      %v506 = vld [vmem:[%s1 + $0xa0] sm:$0xf]
      %v507 = vld [vmem:[%s1 + $0xa4] sm:$0xf]
      %v508 = vld [vmem:[%s1 + $0xa8] sm:$0xf]
      %v509 = vld [vmem:[%s1 + $0xac] sm:$0xf]
      %v510 = vld [vmem:[%s1 + $0xb0] sm:$0xf]
      %v511 = vld [vmem:[%s1 + $0xb4] sm:$0xf]
      %v512 = vld [vmem:[%s1 + $0xb8] sm:$0xf]
      %v513 = vld [vmem:[%s1 + $0xbc] sm:$0xf]
      %s514 = scalar_lea.vmem %s1, 192
      %v515 = vld [vmem:[%s514] sm:$0xf]
      %v516 = vld [vmem:[%s514 + $0x4] sm:$0xf]
      %v517 = vld [vmem:[%s514 + $0x8] sm:$0xf]
      %v518 = vld [vmem:[%s514 + $0xc] sm:$0xf]
      %v519 = vld [vmem:[%s514 + $0x10] sm:$0xf]
      %v520 = vld [vmem:[%s514 + $0x14] sm:$0xf]
      %v521 = vld [vmem:[%s514 + $0x18] sm:$0xf]
      %v522 = vld [vmem:[%s514 + $0x1c] sm:$0xf]
      %v523 = vld [vmem:[%s514 + $0x20] sm:$0xf]
      %v524 = vld [vmem:[%s514 + $0x24] sm:$0xf]
      %v525 = vld [vmem:[%s514 + $0x28] sm:$0xf]
      %v526 = vld [vmem:[%s514 + $0x2c] sm:$0xf]
      %v527 = vld [vmem:[%s514 + $0x30] sm:$0xf]
      %v528 = vld [vmem:[%s514 + $0x34] sm:$0xf]
      %v529 = vld [vmem:[%s514 + $0x38] sm:$0xf]
      %v530 = vld [vmem:[%s514 + $0x3c] sm:$0xf]
      %v531 = vld [vmem:[%s514 + $0x40] sm:$0xf]
      %v532 = vld [vmem:[%s514 + $0x44] sm:$0xf]
      %v533 = vld [vmem:[%s514 + $0x48] sm:$0xf]
      %v534 = vld [vmem:[%s514 + $0x4c] sm:$0xf]
      %v535 = vld [vmem:[%s514 + $0x50] sm:$0xf]
      %v536 = vld [vmem:[%s514 + $0x54] sm:$0xf]
      %v537 = vld [vmem:[%s514 + $0x58] sm:$0xf]
      %v538 = vld [vmem:[%s514 + $0x5c] sm:$0xf]
      %v539 = vld [vmem:[%s514 + $0x60] sm:$0xf]
      %v540 = vld [vmem:[%s514 + $0x64] sm:$0xf]
      %v541 = vld [vmem:[%s514 + $0x68] sm:$0xf]
      %v542 = vld [vmem:[%s514 + $0x6c] sm:$0xf]
      %v543 = vld [vmem:[%s514 + $0x70] sm:$0xf]
      %v544 = vld [vmem:[%s514 + $0x74] sm:$0xf]
      %v545 = vld [vmem:[%s514 + $0x78] sm:$0xf]
      %v546 = vld [vmem:[%s514 + $0x7c] sm:$0xf]
      %v547 = vld [vmem:[%s514 + $0x80] sm:$0xf]
      %v548 = vld [vmem:[%s514 + $0x84] sm:$0xf]
      %v549 = vld [vmem:[%s514 + $0x88] sm:$0xf]
      %v550 = vld [vmem:[%s514 + $0x8c] sm:$0xf]
      %v551 = vld [vmem:[%s514 + $0x90] sm:$0xf]
      %v552 = vld [vmem:[%s514 + $0x94] sm:$0xf]
      %v553 = vld [vmem:[%s514 + $0x98] sm:$0xf]
      %v554 = vld [vmem:[%s514 + $0x9c] sm:$0xf]
      %v555 = vld [vmem:[%s514 + $0xa0] sm:$0xf]
      %v556 = vld [vmem:[%s514 + $0xa4] sm:$0xf]
      %v557 = vld [vmem:[%s514 + $0xa8] sm:$0xf]
      %v558 = vld [vmem:[%s514 + $0xac] sm:$0xf]
      %v559 = vld [vmem:[%s514 + $0xb0] sm:$0xf]
      %v560 = vld [vmem:[%s514 + $0xb4] sm:$0xf]
      %v561 = vld [vmem:[%s514 + $0xb8] sm:$0xf]
      %v562 = vld [vmem:[%s514 + $0xbc] sm:$0xf]
      %v611 = vunpack.c.l.b16 %v515
      %v612 = vunpack.c.l.b16 %v516
      %v613 = vunpack.c.l.b16 %v517
      %v614 = vunpack.c.l.b16 %v518
      %v615 = vunpack.c.l.b16 %v519
      %v616 = vunpack.c.l.b16 %v520
      %v617 = vunpack.c.l.b16 %v521
      %v618 = vunpack.c.l.b16 %v522
      %v619 = vunpack.c.l.b16 %v523
      %v620 = vunpack.c.l.b16 %v524
      %v621 = vunpack.c.l.b16 %v525
      %v622 = vunpack.c.l.b16 %v526
      %v623 = vunpack.c.l.b16 %v527
      %v624 = vunpack.c.l.b16 %v528
      %v625 = vunpack.c.l.b16 %v529
      %v626 = vunpack.c.l.b16 %v530
      %v627 = vunpack.c.l.b16 %v531
      %v628 = vunpack.c.l.b16 %v532
      %v629 = vunpack.c.l.b16 %v533
      %v630 = vunpack.c.l.b16 %v534
      %v631 = vunpack.c.l.b16 %v535
      %v632 = vunpack.c.l.b16 %v536
      %v633 = vunpack.c.l.b16 %v537
      %v634 = vunpack.c.l.b16 %v538
      %v635 = vunpack.c.l.b16 %v539
      %v636 = vunpack.c.l.b16 %v540
      %v637 = vunpack.c.l.b16 %v541
      %v638 = vunpack.c.l.b16 %v542
      %v639 = vunpack.c.l.b16 %v543
      %v640 = vunpack.c.l.b16 %v544
      %v641 = vunpack.c.l.b16 %v545
      %v642 = vunpack.c.l.b16 %v546
      %v643 = vunpack.c.l.b16 %v547
      %v644 = vunpack.c.l.b16 %v548
      %v645 = vunpack.c.l.b16 %v549
      %v646 = vunpack.c.l.b16 %v550
      %v647 = vunpack.c.l.b16 %v551
      %v648 = vunpack.c.l.b16 %v552
      %v649 = vunpack.c.l.b16 %v553
      %v650 = vunpack.c.l.b16 %v554
      %v651 = vunpack.c.l.b16 %v555
      %v652 = vunpack.c.l.b16 %v556
      %v653 = vunpack.c.l.b16 %v557
      %v654 = vunpack.c.l.b16 %v558
      %v655 = vunpack.c.l.b16 %v559
      %v656 = vunpack.c.l.b16 %v560
      %v657 = vunpack.c.l.b16 %v561
      %v658 = vunpack.c.l.b16 %v562
      %v659 = vpack.c.b16 %v612, %v611
      %v660 = vpack.c.b16 %v614, %v613
      %v661 = vpack.c.b16 %v616, %v615
      %v662 = vpack.c.b16 %v618, %v617
      %v663 = vpack.c.b16 %v620, %v619
      %v664 = vpack.c.b16 %v622, %v621
      %v665 = vpack.c.b16 %v624, %v623
      %v666 = vpack.c.b16 %v626, %v625
      %v667 = vpack.c.b16 %v628, %v627
      %v668 = vpack.c.b16 %v630, %v629
      %v669 = vpack.c.b16 %v632, %v631
      %v670 = vpack.c.b16 %v634, %v633
      %v671 = vpack.c.b16 %v636, %v635
      %v672 = vpack.c.b16 %v638, %v637
      %v673 = vpack.c.b16 %v640, %v639
      %v674 = vpack.c.b16 %v642, %v641
      %v675 = vpack.c.b16 %v644, %v643
      %v676 = vpack.c.b16 %v646, %v645
      %v677 = vpack.c.b16 %v648, %v647
      %v678 = vpack.c.b16 %v650, %v649
      %v679 = vpack.c.b16 %v652, %v651
      %v680 = vpack.c.b16 %v654, %v653
      %v681 = vpack.c.b16 %v656, %v655
      %v682 = vpack.c.b16 %v658, %v657
      %707 = vmatprep.subr.bf16.mxu0 0
      %708 = vmatpush1.bf16.msra.mxu0 %v666
      %709 = vmatprep.subr.bf16.mxu0 0
      %710 = vmatpush1.bf16.msra.mxu0 %v665
      %711 = vmatprep.subr.bf16.mxu0 0
      %712 = vmatpush1.bf16.msra.mxu0 %v664
      %713 = vmatprep.subr.bf16.mxu0 0
      %714 = vmatpush1.bf16.msra.mxu0 %v663
      %715 = vmatprep.subr.bf16.mxu0 0
      %716 = vmatpush1.bf16.msra.mxu0 %v662
      %717 = vmatprep.subr.bf16.mxu0 0
      %718 = vmatpush1.bf16.msra.mxu0 %v661
      %719 = vmatprep.subr.bf16.mxu0 0
      %720 = vmatpush1.bf16.msra.mxu0 %v660
      %721 = vmatprep.subr.bf16.mxu0 0
      %722 = vmatpush1.bf16.msra.mxu0 %v659
      %723 = vmatprep.subr.bf16.mxu0 0
      %724 = vmatpush2.bf16.msra.mxu0 %v674
      %725 = vmatprep.subr.bf16.mxu0 0
      %726 = vmatpush2.bf16.msra.mxu0 %v673
      %727 = vmatprep.subr.bf16.mxu0 0
      %728 = vmatpush2.bf16.msra.mxu0 %v672
      %729 = vmatprep.subr.bf16.mxu0 0
      %730 = vmatpush2.bf16.msra.mxu0 %v671
      %731 = vmatprep.subr.bf16.mxu0 0
      %732 = vmatpush2.bf16.msra.mxu0 %v670
      %733 = vmatprep.subr.bf16.mxu0 0
      %734 = vmatpush2.bf16.msra.mxu0 %v669
      %735 = vmatprep.subr.bf16.mxu0 0
      %736 = vmatpush2.bf16.msra.mxu0 %v668
      %737 = vmatprep.subr.bf16.mxu0 0
      %738 = vmatpush2.bf16.msra.mxu0 %v667
      %739 = vmatprep.mubr.bf16.mxu0 %v204
      %740 = vmatmul.mubr.bf16.gmra.mxu0 %v368
      %v741 = vpop.f32.mrf.mxu0
      %v742 = vadd.f32 0.0, %v741
      %v743 = vpop.f32.mrf.mxu0
      %v744 = vpop.f32.mrf.mxu0
      %v745 = vadd.f32 0.0, %v744
      %v746 = vpop.f32.mrf.mxu0
      %747 = vmatprep.mubr.bf16.mxu0 %v205
      %748 = vmatmul.mubr.bf16.gmra.mxu0 %v367
      %v749 = vpop.f32.mrf.mxu0
      %v750 = vadd.f32 0.0, %v749
      %v751 = vpop.f32.mrf.mxu0
      %v752 = vpop.f32.mrf.mxu0
      %v753 = vadd.f32 0.0, %v752
      %v754 = vpop.f32.mrf.mxu0
      %755 = vmatprep.mubr.bf16.mxu0 %v206
      %756 = vmatmul.mubr.bf16.gmra.mxu0 %v369
      %v757 = vpop.f32.mrf.mxu0
      %v758 = vadd.f32 0.0, %v757
      %v759 = vpop.f32.mrf.mxu0
      %v760 = vpop.f32.mrf.mxu0
      %v761 = vadd.f32 0.0, %v760
      %v762 = vpop.f32.mrf.mxu0
      %763 = vmatprep.mubr.bf16.mxu0 %v207
      %764 = vmatmul.mubr.bf16.gmra.mxu0 %v370
      %v765 = vpop.f32.mrf.mxu0
      %v766 = vadd.f32 0.0, %v765
      %v767 = vpop.f32.mrf.mxu0
      %v768 = vpop.f32.mrf.mxu0
      %v769 = vadd.f32 0.0, %v768
      %v770 = vpop.f32.mrf.mxu0
      %771 = vmatprep.mubr.bf16.mxu0 %v208
      %772 = vmatmul.mubr.bf16.gmra.mxu0 %v371
      %v773 = vpop.f32.mrf.mxu0
      %v774 = vadd.f32 0.0, %v773
      %v775 = vpop.f32.mrf.mxu0
      %v776 = vpop.f32.mrf.mxu0
      %v777 = vadd.f32 0.0, %v776
      %v778 = vpop.f32.mrf.mxu0
      %779 = vmatprep.mubr.bf16.mxu0 %v209
      %780 = vmatmul.mubr.bf16.gmra.mxu0 %v372
      %v781 = vpop.f32.mrf.mxu0
      %v782 = vadd.f32 0.0, %v781
      %v783 = vpop.f32.mrf.mxu0
      %v784 = vpop.f32.mrf.mxu0
      %v785 = vadd.f32 0.0, %v784
      %v786 = vpop.f32.mrf.mxu0
      %787 = vmatprep.mubr.bf16.mxu0 %v210
      %788 = vmatmul.mubr.bf16.gmra.mxu0 %v373
      %v789 = vpop.f32.mrf.mxu0
      %v790 = vadd.f32 0.0, %v789
      %v791 = vpop.f32.mrf.mxu0
      %v792 = vpop.f32.mrf.mxu0
      %v793 = vadd.f32 0.0, %v792
      %v794 = vpop.f32.mrf.mxu0
      %795 = vmatprep.mubr.bf16.mxu0 %v211
      %796 = vmatmul.mubr.bf16.gmra.mxu0 %v374
      %v797 = vpop.f32.mrf.mxu0
      %v798 = vadd.f32 0.0, %v797
      %v799 = vpop.f32.mrf.mxu0
      %v800 = vpop.f32.mrf.mxu0
      %v801 = vadd.f32 0.0, %v800
      %v802 = vpop.f32.mrf.mxu0
      %803 = vmatprep.mubr.bf16.mxu0 %v212
      %804 = vmatmul.mubr.bf16.gmra.mxu0 %v375
      %v805 = vpop.f32.mrf.mxu0
      %v806 = vadd.f32 0.0, %v805
      %v807 = vpop.f32.mrf.mxu0
      %v808 = vpop.f32.mrf.mxu0
      %v809 = vadd.f32 0.0, %v808
      %v810 = vpop.f32.mrf.mxu0
      %811 = vmatprep.mubr.bf16.mxu0 %v213
      %812 = vmatmul.mubr.bf16.gmra.mxu0 %v376
      %v813 = vpop.f32.mrf.mxu0
      %v814 = vadd.f32 0.0, %v813
      %v815 = vpop.f32.mrf.mxu0
      %v816 = vpop.f32.mrf.mxu0
      %v817 = vadd.f32 0.0, %v816
      %v818 = vpop.f32.mrf.mxu0
      %819 = vmatprep.mubr.bf16.mxu0 %v214
      %820 = vmatmul.mubr.bf16.gmra.mxu0 %v377
      %v821 = vpop.f32.mrf.mxu0
      %v822 = vadd.f32 0.0, %v821
      %v823 = vpop.f32.mrf.mxu0
      %v824 = vpop.f32.mrf.mxu0
      %v825 = vadd.f32 0.0, %v824
      %v826 = vpop.f32.mrf.mxu0
      %827 = vmatprep.mubr.bf16.mxu0 %v215
      %828 = vmatmul.mubr.bf16.gmra.mxu0 %v378
      %v829 = vpop.f32.mrf.mxu0
      %v830 = vadd.f32 0.0, %v829
      %v831 = vpop.f32.mrf.mxu0
      %v832 = vpop.f32.mrf.mxu0
      %v833 = vadd.f32 0.0, %v832
      %v834 = vpop.f32.mrf.mxu0
      %835 = vmatprep.mubr.bf16.mxu0 %v216
      %836 = vmatmul.mubr.bf16.gmra.mxu0 %v379
      %v837 = vpop.f32.mrf.mxu0
      %v838 = vadd.f32 0.0, %v837
      %v839 = vpop.f32.mrf.mxu0
      %v840 = vpop.f32.mrf.mxu0
      %v841 = vadd.f32 0.0, %v840
      %v842 = vpop.f32.mrf.mxu0
      %843 = vmatprep.mubr.bf16.mxu0 %v217
      %844 = vmatmul.mubr.bf16.gmra.mxu0 %v380
      %v845 = vpop.f32.mrf.mxu0
      %v846 = vadd.f32 0.0, %v845
      %v847 = vpop.f32.mrf.mxu0
      %v848 = vpop.f32.mrf.mxu0
      %v849 = vadd.f32 0.0, %v848
      %v850 = vpop.f32.mrf.mxu0
      %851 = vmatprep.mubr.bf16.mxu0 %v218
      %852 = vmatmul.mubr.bf16.gmra.mxu0 %v381
      %v853 = vpop.f32.mrf.mxu0
      %v854 = vadd.f32 0.0, %v853
      %v855 = vpop.f32.mrf.mxu0
      %v856 = vpop.f32.mrf.mxu0
      %v857 = vadd.f32 0.0, %v856
      %v858 = vpop.f32.mrf.mxu0
      %859 = vmatprep.mubr.bf16.mxu0 %v219
      %860 = vmatmul.mubr.bf16.gmra.mxu0 %v382
      %v861 = vpop.f32.mrf.mxu0
      %v862 = vadd.f32 0.0, %v861
      %v863 = vpop.f32.mrf.mxu0
      %v864 = vpop.f32.mrf.mxu0
      %v865 = vadd.f32 0.0, %v864
      %v866 = vpop.f32.mrf.mxu0
      %867 = vdwg.mxu0
      %868 = vmatprep.subr.bf16.mxu0 0
      %869 = vmatpush1.bf16.msra.mxu0 %v682
      %870 = vmatprep.subr.bf16.mxu0 0
      %871 = vmatpush1.bf16.msra.mxu0 %v681
      %872 = vmatprep.subr.bf16.mxu0 0
      %873 = vmatpush1.bf16.msra.mxu0 %v680
      %874 = vmatprep.subr.bf16.mxu0 0
      %875 = vmatpush1.bf16.msra.mxu0 %v679
      %876 = vmatprep.subr.bf16.mxu0 0
      %877 = vmatpush1.bf16.msra.mxu0 %v678
      %878 = vmatprep.subr.bf16.mxu0 0
      %879 = vmatpush1.bf16.msra.mxu0 %v677
      %880 = vmatprep.subr.bf16.mxu0 0
      %881 = vmatpush1.bf16.msra.mxu0 %v676
      %882 = vmatprep.subr.bf16.mxu0 0
      %883 = vmatpush1.bf16.msra.mxu0 %v675
      %884 = vmatprep.subr.bf16.mxu0 0
      %885 = vmatpush2.bf16.msra.mxu0 0
      %886 = vmatprep.subr.bf16.mxu0 0
      %887 = vmatpush2.bf16.msra.mxu0 0
      %888 = vmatprep.subr.bf16.mxu0 0
      %889 = vmatpush2.bf16.msra.mxu0 0
      %890 = vmatprep.subr.bf16.mxu0 0
      %891 = vmatpush2.bf16.msra.mxu0 0
      %892 = vmatprep.subr.bf16.mxu0 0
      %893 = vmatpush2.bf16.msra.mxu0 0
      %894 = vmatprep.subr.bf16.mxu0 0
      %895 = vmatpush2.bf16.msra.mxu0 0
      %896 = vmatprep.subr.bf16.mxu0 0
      %897 = vmatpush2.bf16.msra.mxu0 0
      %898 = vmatprep.subr.bf16.mxu0 0
      %899 = vmatpush2.bf16.msra.mxu0 0
      %900 = vmatprep.mubr.bf16.mxu0 0
      %901 = vmatmul.mubr.bf16.gmra.mxu0 %v451
      %v902 = vpop.f32.mrf.mxu0
      %v903 = vadd.f32 %v742, %v902
      %v904 = vpop.f32.mrf.mxu0
      %v905 = vpop.f32.mrf.mxu0
      %v906 = vadd.f32 %v745, %v905
      %v907 = vpop.f32.mrf.mxu0
      %908 = vmatprep.mubr.bf16.mxu0 0
      %909 = vmatmul.mubr.bf16.gmra.mxu0 %v450
      %v910 = vpop.f32.mrf.mxu0
      %v911 = vadd.f32 %v750, %v910
      %v912 = vpop.f32.mrf.mxu0
      %v913 = vpop.f32.mrf.mxu0
      %v914 = vadd.f32 %v753, %v913
      %v915 = vpop.f32.mrf.mxu0
      %916 = vmatprep.mubr.bf16.mxu0 0
      %917 = vmatmul.mubr.bf16.gmra.mxu0 %v452
      %v918 = vpop.f32.mrf.mxu0
      %v919 = vadd.f32 %v758, %v918
      %v920 = vpop.f32.mrf.mxu0
      %v921 = vpop.f32.mrf.mxu0
      %v922 = vadd.f32 %v761, %v921
      %v923 = vpop.f32.mrf.mxu0
      %924 = vmatprep.mubr.bf16.mxu0 0
      %925 = vmatmul.mubr.bf16.gmra.mxu0 %v453
      %v926 = vpop.f32.mrf.mxu0
      %v927 = vadd.f32 %v766, %v926
      %v928 = vpop.f32.mrf.mxu0
      %v929 = vpop.f32.mrf.mxu0
      %v930 = vadd.f32 %v769, %v929
      %v931 = vpop.f32.mrf.mxu0
      %932 = vmatprep.mubr.bf16.mxu0 0
      %933 = vmatmul.mubr.bf16.gmra.mxu0 %v454
      %v934 = vpop.f32.mrf.mxu0
      %v935 = vadd.f32 %v774, %v934
      %v936 = vpop.f32.mrf.mxu0
      %v937 = vpop.f32.mrf.mxu0
      %v938 = vadd.f32 %v777, %v937
      %v939 = vpop.f32.mrf.mxu0
      %940 = vmatprep.mubr.bf16.mxu0 0
      %941 = vmatmul.mubr.bf16.gmra.mxu0 %v455
      %v942 = vpop.f32.mrf.mxu0
      %v943 = vadd.f32 %v782, %v942
      %v944 = vpop.f32.mrf.mxu0
      %v945 = vpop.f32.mrf.mxu0
      %v946 = vadd.f32 %v785, %v945
      %v947 = vpop.f32.mrf.mxu0
      %948 = vmatprep.mubr.bf16.mxu0 0
      %949 = vmatmul.mubr.bf16.gmra.mxu0 %v456
      %v950 = vpop.f32.mrf.mxu0
      %v951 = vadd.f32 %v790, %v950
      %v952 = vpop.f32.mrf.mxu0
      %v953 = vpop.f32.mrf.mxu0
      %v954 = vadd.f32 %v793, %v953
      %v955 = vpop.f32.mrf.mxu0
      %956 = vmatprep.mubr.bf16.mxu0 0
      %957 = vmatmul.mubr.bf16.gmra.mxu0 %v457
      %v958 = vpop.f32.mrf.mxu0
      %v959 = vadd.f32 %v798, %v958
      %v960 = vpop.f32.mrf.mxu0
      %v961 = vpop.f32.mrf.mxu0
      %v962 = vadd.f32 %v801, %v961
      %v963 = vpop.f32.mrf.mxu0
      %964 = vmatprep.mubr.bf16.mxu0 0
      %965 = vmatmul.mubr.bf16.gmra.mxu0 %v458
      %v966 = vpop.f32.mrf.mxu0
      %v967 = vadd.f32 %v806, %v966
      %v968 = vpop.f32.mrf.mxu0
      %v969 = vpop.f32.mrf.mxu0
      %v970 = vadd.f32 %v809, %v969
      %v971 = vpop.f32.mrf.mxu0
      %972 = vmatprep.mubr.bf16.mxu0 0
      %973 = vmatmul.mubr.bf16.gmra.mxu0 %v459
      %v974 = vpop.f32.mrf.mxu0
      %v975 = vadd.f32 %v814, %v974
      %v976 = vpop.f32.mrf.mxu0
      %v977 = vpop.f32.mrf.mxu0
      %v978 = vadd.f32 %v817, %v977
      %v979 = vpop.f32.mrf.mxu0
      %980 = vmatprep.mubr.bf16.mxu0 0
      %981 = vmatmul.mubr.bf16.gmra.mxu0 %v460
      %v982 = vpop.f32.mrf.mxu0
      %v983 = vadd.f32 %v822, %v982
      %v984 = vpop.f32.mrf.mxu0
      %v985 = vpop.f32.mrf.mxu0
      %v986 = vadd.f32 %v825, %v985
      %v987 = vpop.f32.mrf.mxu0
      %988 = vmatprep.mubr.bf16.mxu0 0
      %989 = vmatmul.mubr.bf16.gmra.mxu0 %v461
      %v990 = vpop.f32.mrf.mxu0
      %v991 = vadd.f32 %v830, %v990
      %v992 = vpop.f32.mrf.mxu0
      %v993 = vpop.f32.mrf.mxu0
      %v994 = vadd.f32 %v833, %v993
      %v995 = vpop.f32.mrf.mxu0
      %996 = vmatprep.mubr.bf16.mxu0 0
      %997 = vmatmul.mubr.bf16.gmra.mxu0 %v462
      %v998 = vpop.f32.mrf.mxu0
      %v999 = vadd.f32 %v838, %v998
      %v1000 = vpop.f32.mrf.mxu0
      %v1001 = vpop.f32.mrf.mxu0
      %v1002 = vadd.f32 %v841, %v1001
      %v1003 = vpop.f32.mrf.mxu0
      %1004 = vmatprep.mubr.bf16.mxu0 0
      %1005 = vmatmul.mubr.bf16.gmra.mxu0 %v463
      %v1006 = vpop.f32.mrf.mxu0
      %v1007 = vadd.f32 %v846, %v1006
      %v1008 = vpop.f32.mrf.mxu0
      %v1009 = vpop.f32.mrf.mxu0
      %v1010 = vadd.f32 %v849, %v1009
      %v1011 = vpop.f32.mrf.mxu0
      %1012 = vmatprep.mubr.bf16.mxu0 0
      %1013 = vmatmul.mubr.bf16.gmra.mxu0 %v464
      %v1014 = vpop.f32.mrf.mxu0
      %v1015 = vadd.f32 %v854, %v1014
      %v1016 = vpop.f32.mrf.mxu0
      %v1017 = vpop.f32.mrf.mxu0
      %v1018 = vadd.f32 %v857, %v1017
      %v1019 = vpop.f32.mrf.mxu0
      %1020 = vmatprep.mubr.bf16.mxu0 0
      %1021 = vmatmul.mubr.bf16.gmra.mxu0 %v465
      %v1022 = vpop.f32.mrf.mxu0
      %v1023 = vadd.f32 %v862, %v1022
      %v1024 = vpop.f32.mrf.mxu0
      %v1025 = vpop.f32.mrf.mxu0
      %v1026 = vadd.f32 %v865, %v1025
      %v1027 = vpop.f32.mrf.mxu0
      %1028 = vdwg.mxu0
      %v1077 = vunpack.c.l.b16 %v466
      %v1078 = vunpack.c.l.b16 %v467
      %v1079 = vunpack.c.l.b16 %v468
      %v1080 = vunpack.c.l.b16 %v469
      %v1081 = vunpack.c.l.b16 %v470
      %v1082 = vunpack.c.l.b16 %v471
      %v1083 = vunpack.c.l.b16 %v472
      %v1084 = vunpack.c.l.b16 %v473
      %v1085 = vunpack.c.l.b16 %v474
      %v1086 = vunpack.c.l.b16 %v475
      %v1087 = vunpack.c.l.b16 %v476
      %v1088 = vunpack.c.l.b16 %v477
      %v1089 = vunpack.c.l.b16 %v478
      %v1090 = vunpack.c.l.b16 %v479
      %v1091 = vunpack.c.l.b16 %v480
      %v1092 = vunpack.c.l.b16 %v481
      %v1093 = vunpack.c.l.b16 %v482
      %v1094 = vunpack.c.l.b16 %v483
      %v1095 = vunpack.c.l.b16 %v484
      %v1096 = vunpack.c.l.b16 %v485
      %v1097 = vunpack.c.l.b16 %v486
      %v1098 = vunpack.c.l.b16 %v487
      %v1099 = vunpack.c.l.b16 %v488
      %v1100 = vunpack.c.l.b16 %v489
      %v1101 = vunpack.c.l.b16 %v490
      %v1102 = vunpack.c.l.b16 %v491
      %v1103 = vunpack.c.l.b16 %v492
      %v1104 = vunpack.c.l.b16 %v493
      %v1105 = vunpack.c.l.b16 %v494
      %v1106 = vunpack.c.l.b16 %v495
      %v1107 = vunpack.c.l.b16 %v496
      %v1108 = vunpack.c.l.b16 %v497
      %v1109 = vunpack.c.l.b16 %v498
      %v1110 = vunpack.c.l.b16 %v499
      %v1111 = vunpack.c.l.b16 %v500
      %v1112 = vunpack.c.l.b16 %v501
      %v1113 = vunpack.c.l.b16 %v502
      %v1114 = vunpack.c.l.b16 %v503
      %v1115 = vunpack.c.l.b16 %v504
      %v1116 = vunpack.c.l.b16 %v505
      %v1117 = vunpack.c.l.b16 %v506
      %v1118 = vunpack.c.l.b16 %v507
      %v1119 = vunpack.c.l.b16 %v508
      %v1120 = vunpack.c.l.b16 %v509
      %v1121 = vunpack.c.l.b16 %v510
      %v1122 = vunpack.c.l.b16 %v511
      %v1123 = vunpack.c.l.b16 %v512
      %v1124 = vunpack.c.l.b16 %v513
      %v1125 = vpack.c.b16 %v1078, %v1077
      %v1126 = vpack.c.b16 %v1080, %v1079
      %v1127 = vpack.c.b16 %v1082, %v1081
      %v1128 = vpack.c.b16 %v1084, %v1083
      %v1129 = vpack.c.b16 %v1086, %v1085
      %v1130 = vpack.c.b16 %v1088, %v1087
      %v1131 = vpack.c.b16 %v1090, %v1089
      %v1132 = vpack.c.b16 %v1092, %v1091
      %v1133 = vpack.c.b16 %v1094, %v1093
      %v1134 = vpack.c.b16 %v1096, %v1095
      %v1135 = vpack.c.b16 %v1098, %v1097
      %v1136 = vpack.c.b16 %v1100, %v1099
      %v1137 = vpack.c.b16 %v1102, %v1101
      %v1138 = vpack.c.b16 %v1104, %v1103
      %v1139 = vpack.c.b16 %v1106, %v1105
      %v1140 = vpack.c.b16 %v1108, %v1107
      %v1141 = vpack.c.b16 %v1110, %v1109
      %v1142 = vpack.c.b16 %v1112, %v1111
      %v1143 = vpack.c.b16 %v1114, %v1113
      %v1144 = vpack.c.b16 %v1116, %v1115
      %v1145 = vpack.c.b16 %v1118, %v1117
      %v1146 = vpack.c.b16 %v1120, %v1119
      %v1147 = vpack.c.b16 %v1122, %v1121
      %v1148 = vpack.c.b16 %v1124, %v1123
      %1173 = vmatprep.subr.bf16.mxu0 0
      %1174 = vmatpush1.bf16.msra.mxu0 %v1132
      %1175 = vmatprep.subr.bf16.mxu0 0
      %1176 = vmatpush1.bf16.msra.mxu0 %v1131
      %1177 = vmatprep.subr.bf16.mxu0 0
      %1178 = vmatpush1.bf16.msra.mxu0 %v1130
      %1179 = vmatprep.subr.bf16.mxu0 0
      %1180 = vmatpush1.bf16.msra.mxu0 %v1129
      %1181 = vmatprep.subr.bf16.mxu0 0
      %1182 = vmatpush1.bf16.msra.mxu0 %v1128
      %1183 = vmatprep.subr.bf16.mxu0 0
      %1184 = vmatpush1.bf16.msra.mxu0 %v1127
      %1185 = vmatprep.subr.bf16.mxu0 0
      %1186 = vmatpush1.bf16.msra.mxu0 %v1126
      %1187 = vmatprep.subr.bf16.mxu0 0
      %1188 = vmatpush1.bf16.msra.mxu0 %v1125
      %1189 = vmatprep.subr.bf16.mxu0 0
      %1190 = vmatpush2.bf16.msra.mxu0 %v1140
      %1191 = vmatprep.subr.bf16.mxu0 0
      %1192 = vmatpush2.bf16.msra.mxu0 %v1139
      %1193 = vmatprep.subr.bf16.mxu0 0
      %1194 = vmatpush2.bf16.msra.mxu0 %v1138
      %1195 = vmatprep.subr.bf16.mxu0 0
      %1196 = vmatpush2.bf16.msra.mxu0 %v1137
      %1197 = vmatprep.subr.bf16.mxu0 0
      %1198 = vmatpush2.bf16.msra.mxu0 %v1136
      %1199 = vmatprep.subr.bf16.mxu0 0
      %1200 = vmatpush2.bf16.msra.mxu0 %v1135
      %1201 = vmatprep.subr.bf16.mxu0 0
      %1202 = vmatpush2.bf16.msra.mxu0 %v1134
      %1203 = vmatprep.subr.bf16.mxu0 0
      %1204 = vmatpush2.bf16.msra.mxu0 %v1133
      %1205 = vmatprep.mubr.bf16.mxu0 %v205
      %1206 = vmatmul.mubr.bf16.gmra.mxu0 %v367
      %v1207 = vpop.f32.mrf.mxu0
      %v1208 = vadd.f32 %v903, %v1207
      %v1209 = vpop.f32.mrf.mxu0
      %v1210 = vpop.f32.mrf.mxu0
      %v1211 = vadd.f32 %v906, %v1210
      %v1212 = vpop.f32.mrf.mxu0
      %1213 = vmatprep.mubr.bf16.mxu0 %v204
      %1214 = vmatmul.mubr.bf16.gmra.mxu0 %v368
      %v1215 = vpop.f32.mrf.mxu0
      %v1216 = vadd.f32 %v911, %v1215
      %v1217 = vpop.f32.mrf.mxu0
      %v1218 = vpop.f32.mrf.mxu0
      %v1219 = vadd.f32 %v914, %v1218
      %v1220 = vpop.f32.mrf.mxu0
      %1221 = vmatprep.mubr.bf16.mxu0 %v205
      %1222 = vmatmul.mubr.bf16.gmra.mxu0 %v367
      %v1223 = vpop.f32.mrf.mxu0
      %v1224 = vadd.f32 %v919, %v1223
      %v1225 = vpop.f32.mrf.mxu0
      %v1226 = vpop.f32.mrf.mxu0
      %v1227 = vadd.f32 %v922, %v1226
      %v1228 = vpop.f32.mrf.mxu0
      %1229 = vmatprep.mubr.bf16.mxu0 %v206
      %1230 = vmatmul.mubr.bf16.gmra.mxu0 %v369
      %v1231 = vpop.f32.mrf.mxu0
      %v1232 = vadd.f32 %v927, %v1231
      %v1233 = vpop.f32.mrf.mxu0
      %v1234 = vpop.f32.mrf.mxu0
      %v1235 = vadd.f32 %v930, %v1234
      %v1236 = vpop.f32.mrf.mxu0
      %1237 = vmatprep.mubr.bf16.mxu0 %v207
      %1238 = vmatmul.mubr.bf16.gmra.mxu0 %v370
      %v1239 = vpop.f32.mrf.mxu0
      %v1240 = vadd.f32 %v935, %v1239
      %v1241 = vpop.f32.mrf.mxu0
      %v1242 = vpop.f32.mrf.mxu0
      %v1243 = vadd.f32 %v938, %v1242
      %v1244 = vpop.f32.mrf.mxu0
      %1245 = vmatprep.mubr.bf16.mxu0 %v208
      %1246 = vmatmul.mubr.bf16.gmra.mxu0 %v371
      %v1247 = vpop.f32.mrf.mxu0
      %v1248 = vadd.f32 %v943, %v1247
      %v1249 = vpop.f32.mrf.mxu0
      %v1250 = vpop.f32.mrf.mxu0
      %v1251 = vadd.f32 %v946, %v1250
      %v1252 = vpop.f32.mrf.mxu0
      %1253 = vmatprep.mubr.bf16.mxu0 %v209
      %1254 = vmatmul.mubr.bf16.gmra.mxu0 %v372
      %v1255 = vpop.f32.mrf.mxu0
      %v1256 = vadd.f32 %v951, %v1255
      %v1257 = vpop.f32.mrf.mxu0
      %v1258 = vpop.f32.mrf.mxu0
      %v1259 = vadd.f32 %v954, %v1258
      %v1260 = vpop.f32.mrf.mxu0
      %1261 = vmatprep.mubr.bf16.mxu0 %v210
      %1262 = vmatmul.mubr.bf16.gmra.mxu0 %v373
      %v1263 = vpop.f32.mrf.mxu0
      %v1264 = vadd.f32 %v959, %v1263
      %v1265 = vpop.f32.mrf.mxu0
      %v1266 = vpop.f32.mrf.mxu0
      %v1267 = vadd.f32 %v962, %v1266
      %v1268 = vpop.f32.mrf.mxu0
      %1269 = vmatprep.mubr.bf16.mxu0 %v211
      %1270 = vmatmul.mubr.bf16.gmra.mxu0 %v374
      %v1271 = vpop.f32.mrf.mxu0
      %v1272 = vadd.f32 %v967, %v1271
      %v1273 = vpop.f32.mrf.mxu0
      %v1274 = vpop.f32.mrf.mxu0
      %v1275 = vadd.f32 %v970, %v1274
      %v1276 = vpop.f32.mrf.mxu0
      %1277 = vmatprep.mubr.bf16.mxu0 %v212
      %1278 = vmatmul.mubr.bf16.gmra.mxu0 %v375
      %v1279 = vpop.f32.mrf.mxu0
      %v1280 = vadd.f32 %v975, %v1279
      %v1281 = vpop.f32.mrf.mxu0
      %v1282 = vpop.f32.mrf.mxu0
      %v1283 = vadd.f32 %v978, %v1282
      %v1284 = vpop.f32.mrf.mxu0
      %1285 = vmatprep.mubr.bf16.mxu0 %v213
      %1286 = vmatmul.mubr.bf16.gmra.mxu0 %v376
      %v1287 = vpop.f32.mrf.mxu0
      %v1288 = vadd.f32 %v983, %v1287
      %v1289 = vpop.f32.mrf.mxu0
      %v1290 = vpop.f32.mrf.mxu0
      %v1291 = vadd.f32 %v986, %v1290
      %v1292 = vpop.f32.mrf.mxu0
      %1293 = vmatprep.mubr.bf16.mxu0 %v214
      %1294 = vmatmul.mubr.bf16.gmra.mxu0 %v377
      %v1295 = vpop.f32.mrf.mxu0
      %v1296 = vadd.f32 %v991, %v1295
      %v1297 = vpop.f32.mrf.mxu0
      %v1298 = vpop.f32.mrf.mxu0
      %v1299 = vadd.f32 %v994, %v1298
      %v1300 = vpop.f32.mrf.mxu0
      %1301 = vmatprep.mubr.bf16.mxu0 %v215
      %1302 = vmatmul.mubr.bf16.gmra.mxu0 %v378
      %v1303 = vpop.f32.mrf.mxu0
      %v1304 = vadd.f32 %v999, %v1303
      %v1305 = vpop.f32.mrf.mxu0
      %v1306 = vpop.f32.mrf.mxu0
      %v1307 = vadd.f32 %v1002, %v1306
      %v1308 = vpop.f32.mrf.mxu0
      %1309 = vmatprep.mubr.bf16.mxu0 %v216
      %1310 = vmatmul.mubr.bf16.gmra.mxu0 %v379
      %v1311 = vpop.f32.mrf.mxu0
      %v1312 = vadd.f32 %v1007, %v1311
      %v1313 = vpop.f32.mrf.mxu0
      %v1314 = vpop.f32.mrf.mxu0
      %v1315 = vadd.f32 %v1010, %v1314
      %v1316 = vpop.f32.mrf.mxu0
      %1317 = vmatprep.mubr.bf16.mxu0 %v217
      %1318 = vmatmul.mubr.bf16.gmra.mxu0 %v380
      %v1319 = vpop.f32.mrf.mxu0
      %v1320 = vadd.f32 %v1015, %v1319
      %v1321 = vpop.f32.mrf.mxu0
      %v1322 = vpop.f32.mrf.mxu0
      %v1323 = vadd.f32 %v1018, %v1322
      %v1324 = vpop.f32.mrf.mxu0
      %1325 = vmatprep.mubr.bf16.mxu0 %v218
      %1326 = vmatmul.mubr.bf16.gmra.mxu0 %v381
      %v1327 = vpop.f32.mrf.mxu0
      %v1328 = vadd.f32 %v1023, %v1327
      %v1329 = vpop.f32.mrf.mxu0
      %v1330 = vpop.f32.mrf.mxu0
      %v1331 = vadd.f32 %v1026, %v1330
      %v1332 = vpop.f32.mrf.mxu0
      %1333 = vdwg.mxu0
      %1334 = vmatprep.subr.bf16.mxu0 0
      %1335 = vmatpush1.bf16.msra.mxu0 %v1148
      %1336 = vmatprep.subr.bf16.mxu0 0
      %1337 = vmatpush1.bf16.msra.mxu0 %v1147
      %1338 = vmatprep.subr.bf16.mxu0 0
      %1339 = vmatpush1.bf16.msra.mxu0 %v1146
      %1340 = vmatprep.subr.bf16.mxu0 0
      %1341 = vmatpush1.bf16.msra.mxu0 %v1145
      %1342 = vmatprep.subr.bf16.mxu0 0
      %1343 = vmatpush1.bf16.msra.mxu0 %v1144
      %1344 = vmatprep.subr.bf16.mxu0 0
      %1345 = vmatpush1.bf16.msra.mxu0 %v1143
      %1346 = vmatprep.subr.bf16.mxu0 0
      %1347 = vmatpush1.bf16.msra.mxu0 %v1142
      %1348 = vmatprep.subr.bf16.mxu0 0
      %1349 = vmatpush1.bf16.msra.mxu0 %v1141
      %1350 = vmatprep.subr.bf16.mxu0 0
      %1351 = vmatpush2.bf16.msra.mxu0 0
      %1352 = vmatprep.subr.bf16.mxu0 0
      %1353 = vmatpush2.bf16.msra.mxu0 0
      %1354 = vmatprep.subr.bf16.mxu0 0
      %1355 = vmatpush2.bf16.msra.mxu0 0
      %1356 = vmatprep.subr.bf16.mxu0 0
      %1357 = vmatpush2.bf16.msra.mxu0 0
      %1358 = vmatprep.subr.bf16.mxu0 0
      %1359 = vmatpush2.bf16.msra.mxu0 0
      %1360 = vmatprep.subr.bf16.mxu0 0
      %1361 = vmatpush2.bf16.msra.mxu0 0
      %1362 = vmatprep.subr.bf16.mxu0 0
      %1363 = vmatpush2.bf16.msra.mxu0 0
      %1364 = vmatprep.subr.bf16.mxu0 0
      %1365 = vmatpush2.bf16.msra.mxu0 0
      %1366 = vmatprep.mubr.bf16.mxu0 0
      %1367 = vmatmul.mubr.bf16.gmra.mxu0 %v450
      %v1368 = vpop.f32.mrf.mxu0
      %v1369 = vadd.f32 %v1208, %v1368
      %v1370 = vpop.f32.mrf.mxu0
      %v1371 = vpop.f32.mrf.mxu0
      %v1372 = vadd.f32 %v1211, %v1371
      %v1373 = vpop.f32.mrf.mxu0
      %1374 = vmatprep.mubr.bf16.mxu0 0
      %1375 = vmatmul.mubr.bf16.gmra.mxu0 %v451
      %v1376 = vpop.f32.mrf.mxu0
      %v1377 = vadd.f32 %v1216, %v1376
      %v1378 = vpop.f32.mrf.mxu0
      %v1379 = vpop.f32.mrf.mxu0
      %v1380 = vadd.f32 %v1219, %v1379
      %v1381 = vpop.f32.mrf.mxu0
      %1382 = vmatprep.mubr.bf16.mxu0 0
      %1383 = vmatmul.mubr.bf16.gmra.mxu0 %v450
      %v1384 = vpop.f32.mrf.mxu0
      %v1385 = vadd.f32 %v1224, %v1384
      %v1386 = vpop.f32.mrf.mxu0
      %v1387 = vpop.f32.mrf.mxu0
      %v1388 = vadd.f32 %v1227, %v1387
      %v1389 = vpop.f32.mrf.mxu0
      %1390 = vmatprep.mubr.bf16.mxu0 0
      %1391 = vmatmul.mubr.bf16.gmra.mxu0 %v452
      %v1392 = vpop.f32.mrf.mxu0
      %v1393 = vadd.f32 %v1232, %v1392
      %v1394 = vpop.f32.mrf.mxu0
      %v1395 = vpop.f32.mrf.mxu0
      %v1396 = vadd.f32 %v1235, %v1395
      %v1397 = vpop.f32.mrf.mxu0
      %1398 = vmatprep.mubr.bf16.mxu0 0
      %1399 = vmatmul.mubr.bf16.gmra.mxu0 %v453
      %v1400 = vpop.f32.mrf.mxu0
      %v1401 = vadd.f32 %v1240, %v1400
      %v1402 = vpop.f32.mrf.mxu0
      %v1403 = vpop.f32.mrf.mxu0
      %v1404 = vadd.f32 %v1243, %v1403
      %v1405 = vpop.f32.mrf.mxu0
      %1406 = vmatprep.mubr.bf16.mxu0 0
      %1407 = vmatmul.mubr.bf16.gmra.mxu0 %v454
      %v1408 = vpop.f32.mrf.mxu0
      %v1409 = vadd.f32 %v1248, %v1408
      %v1410 = vpop.f32.mrf.mxu0
      %v1411 = vpop.f32.mrf.mxu0
      %v1412 = vadd.f32 %v1251, %v1411
      %v1413 = vpop.f32.mrf.mxu0
      %1414 = vmatprep.mubr.bf16.mxu0 0
      %1415 = vmatmul.mubr.bf16.gmra.mxu0 %v455
      %v1416 = vpop.f32.mrf.mxu0
      %v1417 = vadd.f32 %v1256, %v1416
      %v1418 = vpop.f32.mrf.mxu0
      %v1419 = vpop.f32.mrf.mxu0
      %v1420 = vadd.f32 %v1259, %v1419
      %v1421 = vpop.f32.mrf.mxu0
      %1422 = vmatprep.mubr.bf16.mxu0 0
      %1423 = vmatmul.mubr.bf16.gmra.mxu0 %v456
      %v1424 = vpop.f32.mrf.mxu0
      %v1425 = vadd.f32 %v1264, %v1424
      %v1426 = vpop.f32.mrf.mxu0
      %v1427 = vpop.f32.mrf.mxu0
      %v1428 = vadd.f32 %v1267, %v1427
      %v1429 = vpop.f32.mrf.mxu0
      %1430 = vmatprep.mubr.bf16.mxu0 0
      %1431 = vmatmul.mubr.bf16.gmra.mxu0 %v457
      %v1432 = vpop.f32.mrf.mxu0
      %v1433 = vadd.f32 %v1272, %v1432
      %v1434 = vpop.f32.mrf.mxu0
      %v1435 = vpop.f32.mrf.mxu0
      %v1436 = vadd.f32 %v1275, %v1435
      %v1437 = vpop.f32.mrf.mxu0
      %1438 = vmatprep.mubr.bf16.mxu0 0
      %1439 = vmatmul.mubr.bf16.gmra.mxu0 %v458
      %v1440 = vpop.f32.mrf.mxu0
      %v1441 = vadd.f32 %v1280, %v1440
      %v1442 = vpop.f32.mrf.mxu0
      %v1443 = vpop.f32.mrf.mxu0
      %v1444 = vadd.f32 %v1283, %v1443
      %v1445 = vpop.f32.mrf.mxu0
      %1446 = vmatprep.mubr.bf16.mxu0 0
      %1447 = vmatmul.mubr.bf16.gmra.mxu0 %v459
      %v1448 = vpop.f32.mrf.mxu0
      %v1449 = vadd.f32 %v1288, %v1448
      %v1450 = vpop.f32.mrf.mxu0
      %v1451 = vpop.f32.mrf.mxu0
      %v1452 = vadd.f32 %v1291, %v1451
      %v1453 = vpop.f32.mrf.mxu0
      %1454 = vmatprep.mubr.bf16.mxu0 0
      %1455 = vmatmul.mubr.bf16.gmra.mxu0 %v460
      %v1456 = vpop.f32.mrf.mxu0
      %v1457 = vadd.f32 %v1296, %v1456
      %v1458 = vpop.f32.mrf.mxu0
      %v1459 = vpop.f32.mrf.mxu0
      %v1460 = vadd.f32 %v1299, %v1459
      %v1461 = vpop.f32.mrf.mxu0
      %1462 = vmatprep.mubr.bf16.mxu0 0
      %1463 = vmatmul.mubr.bf16.gmra.mxu0 %v461
      %v1464 = vpop.f32.mrf.mxu0
      %v1465 = vadd.f32 %v1304, %v1464
      %v1466 = vpop.f32.mrf.mxu0
      %v1467 = vpop.f32.mrf.mxu0
      %v1468 = vadd.f32 %v1307, %v1467
      %v1469 = vpop.f32.mrf.mxu0
      %1470 = vmatprep.mubr.bf16.mxu0 0
      %1471 = vmatmul.mubr.bf16.gmra.mxu0 %v462
      %v1472 = vpop.f32.mrf.mxu0
      %v1473 = vadd.f32 %v1312, %v1472
      %v1474 = vpop.f32.mrf.mxu0
      %v1475 = vpop.f32.mrf.mxu0
      %v1476 = vadd.f32 %v1315, %v1475
      %v1477 = vpop.f32.mrf.mxu0
      %1478 = vmatprep.mubr.bf16.mxu0 0
      %1479 = vmatmul.mubr.bf16.gmra.mxu0 %v463
      %v1480 = vpop.f32.mrf.mxu0
      %v1481 = vadd.f32 %v1320, %v1480
      %v1482 = vpop.f32.mrf.mxu0
      %v1483 = vpop.f32.mrf.mxu0
      %v1484 = vadd.f32 %v1323, %v1483
      %v1485 = vpop.f32.mrf.mxu0
      %1486 = vmatprep.mubr.bf16.mxu0 0
      %1487 = vmatmul.mubr.bf16.gmra.mxu0 %v464
      %v1488 = vpop.f32.mrf.mxu0
      %v1489 = vadd.f32 %v1328, %v1488
      %v1490 = vpop.f32.mrf.mxu0
      %v1491 = vpop.f32.mrf.mxu0
      %v1492 = vadd.f32 %v1331, %v1491
      %v1493 = vpop.f32.mrf.mxu0
      %1494 = vdwg.mxu0
      %s1495 = scalar_lea.vmem %s1, 384
      %v1496 = vld [vmem:[%s1495] sm:$0xf]
      %v1497 = vld [vmem:[%s1495 + $0x4] sm:$0xf]
      %v1498 = vld [vmem:[%s1495 + $0x8] sm:$0xf]
      %v1499 = vld [vmem:[%s1495 + $0xc] sm:$0xf]
      %v1500 = vld [vmem:[%s1495 + $0x10] sm:$0xf]
      %v1501 = vld [vmem:[%s1495 + $0x14] sm:$0xf]
      %v1502 = vld [vmem:[%s1495 + $0x18] sm:$0xf]
      %v1503 = vld [vmem:[%s1495 + $0x1c] sm:$0xf]
      %v1504 = vld [vmem:[%s1495 + $0x20] sm:$0xf]
      %v1505 = vld [vmem:[%s1495 + $0x24] sm:$0xf]
      %v1506 = vld [vmem:[%s1495 + $0x28] sm:$0xf]
      %v1507 = vld [vmem:[%s1495 + $0x2c] sm:$0xf]
      %v1508 = vld [vmem:[%s1495 + $0x30] sm:$0xf]
      %v1509 = vld [vmem:[%s1495 + $0x34] sm:$0xf]
      %v1510 = vld [vmem:[%s1495 + $0x38] sm:$0xf]
      %v1511 = vld [vmem:[%s1495 + $0x3c] sm:$0xf]
      %v1512 = vld [vmem:[%s1495 + $0x40] sm:$0xf]
      %v1513 = vld [vmem:[%s1495 + $0x44] sm:$0xf]
      %v1514 = vld [vmem:[%s1495 + $0x48] sm:$0xf]
      %v1515 = vld [vmem:[%s1495 + $0x4c] sm:$0xf]
      %v1516 = vld [vmem:[%s1495 + $0x50] sm:$0xf]
      %v1517 = vld [vmem:[%s1495 + $0x54] sm:$0xf]
      %v1518 = vld [vmem:[%s1495 + $0x58] sm:$0xf]
      %v1519 = vld [vmem:[%s1495 + $0x5c] sm:$0xf]
      %v1520 = vld [vmem:[%s1495 + $0x60] sm:$0xf]
      %v1521 = vld [vmem:[%s1495 + $0x64] sm:$0xf]
      %v1522 = vld [vmem:[%s1495 + $0x68] sm:$0xf]
      %v1523 = vld [vmem:[%s1495 + $0x6c] sm:$0xf]
      %v1524 = vld [vmem:[%s1495 + $0x70] sm:$0xf]
      %v1525 = vld [vmem:[%s1495 + $0x74] sm:$0xf]
      %v1526 = vld [vmem:[%s1495 + $0x78] sm:$0xf]
      %v1527 = vld [vmem:[%s1495 + $0x7c] sm:$0xf]
      %v1528 = vld [vmem:[%s1495 + $0x80] sm:$0xf]
      %v1529 = vld [vmem:[%s1495 + $0x84] sm:$0xf]
      %v1530 = vld [vmem:[%s1495 + $0x88] sm:$0xf]
      %v1531 = vld [vmem:[%s1495 + $0x8c] sm:$0xf]
      %v1532 = vld [vmem:[%s1495 + $0x90] sm:$0xf]
      %v1533 = vld [vmem:[%s1495 + $0x94] sm:$0xf]
      %v1534 = vld [vmem:[%s1495 + $0x98] sm:$0xf]
      %v1535 = vld [vmem:[%s1495 + $0x9c] sm:$0xf]
      %v1536 = vld [vmem:[%s1495 + $0xa0] sm:$0xf]
      %v1537 = vld [vmem:[%s1495 + $0xa4] sm:$0xf]
      %v1538 = vld [vmem:[%s1495 + $0xa8] sm:$0xf]
      %v1539 = vld [vmem:[%s1495 + $0xac] sm:$0xf]
      %v1540 = vld [vmem:[%s1495 + $0xb0] sm:$0xf]
      %v1541 = vld [vmem:[%s1495 + $0xb4] sm:$0xf]
      %v1542 = vld [vmem:[%s1495 + $0xb8] sm:$0xf]
      %v1543 = vld [vmem:[%s1495 + $0xbc] sm:$0xf]
      %v1592 = vunpack.c.l.b16 %v1496
      %v1593 = vunpack.c.l.b16 %v1497
      %v1594 = vunpack.c.l.b16 %v1498
      %v1595 = vunpack.c.l.b16 %v1499
      %v1596 = vunpack.c.l.b16 %v1500
      %v1597 = vunpack.c.l.b16 %v1501
      %v1598 = vunpack.c.l.b16 %v1502
      %v1599 = vunpack.c.l.b16 %v1503
      %v1600 = vunpack.c.l.b16 %v1504
      %v1601 = vunpack.c.l.b16 %v1505
      %v1602 = vunpack.c.l.b16 %v1506
      %v1603 = vunpack.c.l.b16 %v1507
      %v1604 = vunpack.c.l.b16 %v1508
      %v1605 = vunpack.c.l.b16 %v1509
      %v1606 = vunpack.c.l.b16 %v1510
      %v1607 = vunpack.c.l.b16 %v1511
      %v1608 = vunpack.c.l.b16 %v1512
      %v1609 = vunpack.c.l.b16 %v1513
      %v1610 = vunpack.c.l.b16 %v1514
      %v1611 = vunpack.c.l.b16 %v1515
      %v1612 = vunpack.c.l.b16 %v1516
      %v1613 = vunpack.c.l.b16 %v1517
      %v1614 = vunpack.c.l.b16 %v1518
      %v1615 = vunpack.c.l.b16 %v1519
      %v1616 = vunpack.c.l.b16 %v1520
      %v1617 = vunpack.c.l.b16 %v1521
      %v1618 = vunpack.c.l.b16 %v1522
      %v1619 = vunpack.c.l.b16 %v1523
      %v1620 = vunpack.c.l.b16 %v1524
      %v1621 = vunpack.c.l.b16 %v1525
      %v1622 = vunpack.c.l.b16 %v1526
      %v1623 = vunpack.c.l.b16 %v1527
      %v1624 = vunpack.c.l.b16 %v1528
      %v1625 = vunpack.c.l.b16 %v1529
      %v1626 = vunpack.c.l.b16 %v1530
      %v1627 = vunpack.c.l.b16 %v1531
      %v1628 = vunpack.c.l.b16 %v1532
      %v1629 = vunpack.c.l.b16 %v1533
      %v1630 = vunpack.c.l.b16 %v1534
      %v1631 = vunpack.c.l.b16 %v1535
      %v1632 = vunpack.c.l.b16 %v1536
      %v1633 = vunpack.c.l.b16 %v1537
      %v1634 = vunpack.c.l.b16 %v1538
      %v1635 = vunpack.c.l.b16 %v1539
      %v1636 = vunpack.c.l.b16 %v1540
      %v1637 = vunpack.c.l.b16 %v1541
      %v1638 = vunpack.c.l.b16 %v1542
      %v1639 = vunpack.c.l.b16 %v1543
      %v1640 = vpack.c.b16 %v1593, %v1592
      %v1641 = vpack.c.b16 %v1595, %v1594
      %v1642 = vpack.c.b16 %v1597, %v1596
      %v1643 = vpack.c.b16 %v1599, %v1598
      %v1644 = vpack.c.b16 %v1601, %v1600
      %v1645 = vpack.c.b16 %v1603, %v1602
      %v1646 = vpack.c.b16 %v1605, %v1604
      %v1647 = vpack.c.b16 %v1607, %v1606
      %v1648 = vpack.c.b16 %v1609, %v1608
      %v1649 = vpack.c.b16 %v1611, %v1610
      %v1650 = vpack.c.b16 %v1613, %v1612
      %v1651 = vpack.c.b16 %v1615, %v1614
      %v1652 = vpack.c.b16 %v1617, %v1616
      %v1653 = vpack.c.b16 %v1619, %v1618
      %v1654 = vpack.c.b16 %v1621, %v1620
      %v1655 = vpack.c.b16 %v1623, %v1622
      %v1656 = vpack.c.b16 %v1625, %v1624
      %v1657 = vpack.c.b16 %v1627, %v1626
      %v1658 = vpack.c.b16 %v1629, %v1628
      %v1659 = vpack.c.b16 %v1631, %v1630
      %v1660 = vpack.c.b16 %v1633, %v1632
      %v1661 = vpack.c.b16 %v1635, %v1634
      %v1662 = vpack.c.b16 %v1637, %v1636
      %v1663 = vpack.c.b16 %v1639, %v1638
      %1688 = vmatprep.subr.bf16.mxu0 0
      %1689 = vmatpush1.bf16.msra.mxu0 %v1647
      %1690 = vmatprep.subr.bf16.mxu0 0
      %1691 = vmatpush1.bf16.msra.mxu0 %v1646
      %1692 = vmatprep.subr.bf16.mxu0 0
      %1693 = vmatpush1.bf16.msra.mxu0 %v1645
      %1694 = vmatprep.subr.bf16.mxu0 0
      %1695 = vmatpush1.bf16.msra.mxu0 %v1644
      %1696 = vmatprep.subr.bf16.mxu0 0
      %1697 = vmatpush1.bf16.msra.mxu0 %v1643
      %1698 = vmatprep.subr.bf16.mxu0 0
      %1699 = vmatpush1.bf16.msra.mxu0 %v1642
      %1700 = vmatprep.subr.bf16.mxu0 0
      %1701 = vmatpush1.bf16.msra.mxu0 %v1641
      %1702 = vmatprep.subr.bf16.mxu0 0
      %1703 = vmatpush1.bf16.msra.mxu0 %v1640
      %1704 = vmatprep.subr.bf16.mxu0 0
      %1705 = vmatpush2.bf16.msra.mxu0 %v1655
      %1706 = vmatprep.subr.bf16.mxu0 0
      %1707 = vmatpush2.bf16.msra.mxu0 %v1654
      %1708 = vmatprep.subr.bf16.mxu0 0
      %1709 = vmatpush2.bf16.msra.mxu0 %v1653
      %1710 = vmatprep.subr.bf16.mxu0 0
      %1711 = vmatpush2.bf16.msra.mxu0 %v1652
      %1712 = vmatprep.subr.bf16.mxu0 0
      %1713 = vmatpush2.bf16.msra.mxu0 %v1651
      %1714 = vmatprep.subr.bf16.mxu0 0
      %1715 = vmatpush2.bf16.msra.mxu0 %v1650
      %1716 = vmatprep.subr.bf16.mxu0 0
      %1717 = vmatpush2.bf16.msra.mxu0 %v1649
      %1718 = vmatprep.subr.bf16.mxu0 0
      %1719 = vmatpush2.bf16.msra.mxu0 %v1648
      %1720 = vmatprep.mubr.bf16.mxu0 %v205
      %1721 = vmatmul.mubr.bf16.gmra.mxu0 %v367
      %v1722 = vpop.f32.mrf.mxu0
      %v1723 = vadd.f32 0.0, %v1722
      %v1724 = vpop.f32.mrf.mxu0
      %v1725 = vpop.f32.mrf.mxu0
      %v1726 = vadd.f32 0.0, %v1725
      %v1727 = vpop.f32.mrf.mxu0
      %1728 = vmatprep.mubr.bf16.mxu0 %v206
      %1729 = vmatmul.mubr.bf16.gmra.mxu0 %v369
      %v1730 = vpop.f32.mrf.mxu0
      %v1731 = vadd.f32 0.0, %v1730
      %v1732 = vpop.f32.mrf.mxu0
      %v1733 = vpop.f32.mrf.mxu0
      %v1734 = vadd.f32 0.0, %v1733
      %v1735 = vpop.f32.mrf.mxu0
      %1736 = vmatprep.mubr.bf16.mxu0 %v207
      %1737 = vmatmul.mubr.bf16.gmra.mxu0 %v370
      %v1738 = vpop.f32.mrf.mxu0
      %v1739 = vadd.f32 0.0, %v1738
      %v1740 = vpop.f32.mrf.mxu0
      %v1741 = vpop.f32.mrf.mxu0
      %v1742 = vadd.f32 0.0, %v1741
      %v1743 = vpop.f32.mrf.mxu0
      %1744 = vmatprep.mubr.bf16.mxu0 %v208
      %1745 = vmatmul.mubr.bf16.gmra.mxu0 %v371
      %v1746 = vpop.f32.mrf.mxu0
      %v1747 = vadd.f32 0.0, %v1746
      %v1748 = vpop.f32.mrf.mxu0
      %v1749 = vpop.f32.mrf.mxu0
      %v1750 = vadd.f32 0.0, %v1749
      %v1751 = vpop.f32.mrf.mxu0
      %1752 = vmatprep.mubr.bf16.mxu0 %v209
      %1753 = vmatmul.mubr.bf16.gmra.mxu0 %v372
      %v1754 = vpop.f32.mrf.mxu0
      %v1755 = vadd.f32 0.0, %v1754
      %v1756 = vpop.f32.mrf.mxu0
      %v1757 = vpop.f32.mrf.mxu0
      %v1758 = vadd.f32 0.0, %v1757
      %v1759 = vpop.f32.mrf.mxu0
      %1760 = vmatprep.mubr.bf16.mxu0 %v210
      %1761 = vmatmul.mubr.bf16.gmra.mxu0 %v373
      %v1762 = vpop.f32.mrf.mxu0
      %v1763 = vadd.f32 0.0, %v1762
      %v1764 = vpop.f32.mrf.mxu0
      %v1765 = vpop.f32.mrf.mxu0
      %v1766 = vadd.f32 0.0, %v1765
      %v1767 = vpop.f32.mrf.mxu0
      %1768 = vmatprep.mubr.bf16.mxu0 %v211
      %1769 = vmatmul.mubr.bf16.gmra.mxu0 %v374
      %v1770 = vpop.f32.mrf.mxu0
      %v1771 = vadd.f32 0.0, %v1770
      %v1772 = vpop.f32.mrf.mxu0
      %v1773 = vpop.f32.mrf.mxu0
      %v1774 = vadd.f32 0.0, %v1773
      %v1775 = vpop.f32.mrf.mxu0
      %1776 = vmatprep.mubr.bf16.mxu0 %v212
      %1777 = vmatmul.mubr.bf16.gmra.mxu0 %v375
      %v1778 = vpop.f32.mrf.mxu0
      %v1779 = vadd.f32 0.0, %v1778
      %v1780 = vpop.f32.mrf.mxu0
      %v1781 = vpop.f32.mrf.mxu0
      %v1782 = vadd.f32 0.0, %v1781
      %v1783 = vpop.f32.mrf.mxu0
      %1784 = vmatprep.mubr.bf16.mxu0 %v213
      %1785 = vmatmul.mubr.bf16.gmra.mxu0 %v376
      %v1786 = vpop.f32.mrf.mxu0
      %v1787 = vadd.f32 0.0, %v1786
      %v1788 = vpop.f32.mrf.mxu0
      %v1789 = vpop.f32.mrf.mxu0
      %v1790 = vadd.f32 0.0, %v1789
      %v1791 = vpop.f32.mrf.mxu0
      %1792 = vmatprep.mubr.bf16.mxu0 %v214
      %1793 = vmatmul.mubr.bf16.gmra.mxu0 %v377
      %v1794 = vpop.f32.mrf.mxu0
      %v1795 = vadd.f32 0.0, %v1794
      %v1796 = vpop.f32.mrf.mxu0
      %v1797 = vpop.f32.mrf.mxu0
      %v1798 = vadd.f32 0.0, %v1797
      %v1799 = vpop.f32.mrf.mxu0
      %1800 = vmatprep.mubr.bf16.mxu0 %v215
      %1801 = vmatmul.mubr.bf16.gmra.mxu0 %v378
      %v1802 = vpop.f32.mrf.mxu0
      %v1803 = vadd.f32 0.0, %v1802
      %v1804 = vpop.f32.mrf.mxu0
      %v1805 = vpop.f32.mrf.mxu0
      %v1806 = vadd.f32 0.0, %v1805
      %v1807 = vpop.f32.mrf.mxu0
      %1808 = vmatprep.mubr.bf16.mxu0 %v216
      %1809 = vmatmul.mubr.bf16.gmra.mxu0 %v379
      %v1810 = vpop.f32.mrf.mxu0
      %v1811 = vadd.f32 0.0, %v1810
      %v1812 = vpop.f32.mrf.mxu0
      %v1813 = vpop.f32.mrf.mxu0
      %v1814 = vadd.f32 0.0, %v1813
      %v1815 = vpop.f32.mrf.mxu0
      %1816 = vmatprep.mubr.bf16.mxu0 %v217
      %1817 = vmatmul.mubr.bf16.gmra.mxu0 %v380
      %v1818 = vpop.f32.mrf.mxu0
      %v1819 = vadd.f32 0.0, %v1818
      %v1820 = vpop.f32.mrf.mxu0
      %v1821 = vpop.f32.mrf.mxu0
      %v1822 = vadd.f32 0.0, %v1821
      %v1823 = vpop.f32.mrf.mxu0
      %1824 = vmatprep.mubr.bf16.mxu0 %v218
      %1825 = vmatmul.mubr.bf16.gmra.mxu0 %v381
      %v1826 = vpop.f32.mrf.mxu0
      %v1827 = vadd.f32 0.0, %v1826
      %v1828 = vpop.f32.mrf.mxu0
      %v1829 = vpop.f32.mrf.mxu0
      %v1830 = vadd.f32 0.0, %v1829
      %v1831 = vpop.f32.mrf.mxu0
      %1832 = vmatprep.mubr.bf16.mxu0 %v219
      %1833 = vmatmul.mubr.bf16.gmra.mxu0 %v382
      %v1834 = vpop.f32.mrf.mxu0
      %v1835 = vadd.f32 0.0, %v1834
      %v1836 = vpop.f32.mrf.mxu0
      %v1837 = vpop.f32.mrf.mxu0
      %v1838 = vadd.f32 0.0, %v1837
      %v1839 = vpop.f32.mrf.mxu0
      %1840 = vmatprep.mubr.bf16.mxu0 %v218
      %1841 = vmatmul.mubr.bf16.gmra.mxu0 %v381
      %v1842 = vpop.f32.mrf.mxu0
      %v1843 = vadd.f32 0.0, %v1842
      %v1844 = vpop.f32.mrf.mxu0
      %v1845 = vpop.f32.mrf.mxu0
      %v1846 = vadd.f32 0.0, %v1845
      %v1847 = vpop.f32.mrf.mxu0
      %1848 = vdwg.mxu0
      %1849 = vmatprep.subr.bf16.mxu0 0
      %1850 = vmatpush1.bf16.msra.mxu0 %v1663
      %1851 = vmatprep.subr.bf16.mxu0 0
      %1852 = vmatpush1.bf16.msra.mxu0 %v1662
      %1853 = vmatprep.subr.bf16.mxu0 0
      %1854 = vmatpush1.bf16.msra.mxu0 %v1661
      %1855 = vmatprep.subr.bf16.mxu0 0
      %1856 = vmatpush1.bf16.msra.mxu0 %v1660
      %1857 = vmatprep.subr.bf16.mxu0 0
      %1858 = vmatpush1.bf16.msra.mxu0 %v1659
      %1859 = vmatprep.subr.bf16.mxu0 0
      %1860 = vmatpush1.bf16.msra.mxu0 %v1658
      %1861 = vmatprep.subr.bf16.mxu0 0
      %1862 = vmatpush1.bf16.msra.mxu0 %v1657
      %1863 = vmatprep.subr.bf16.mxu0 0
      %1864 = vmatpush1.bf16.msra.mxu0 %v1656
      %1865 = vmatprep.subr.bf16.mxu0 0
      %1866 = vmatpush2.bf16.msra.mxu0 0
      %1867 = vmatprep.subr.bf16.mxu0 0
      %1868 = vmatpush2.bf16.msra.mxu0 0
      %1869 = vmatprep.subr.bf16.mxu0 0
      %1870 = vmatpush2.bf16.msra.mxu0 0
      %1871 = vmatprep.subr.bf16.mxu0 0
      %1872 = vmatpush2.bf16.msra.mxu0 0
      %1873 = vmatprep.subr.bf16.mxu0 0
      %1874 = vmatpush2.bf16.msra.mxu0 0
      %1875 = vmatprep.subr.bf16.mxu0 0
      %1876 = vmatpush2.bf16.msra.mxu0 0
      %1877 = vmatprep.subr.bf16.mxu0 0
      %1878 = vmatpush2.bf16.msra.mxu0 0
      %1879 = vmatprep.subr.bf16.mxu0 0
      %1880 = vmatpush2.bf16.msra.mxu0 0
      %1881 = vmatprep.mubr.bf16.mxu0 0
      %1882 = vmatmul.mubr.bf16.gmra.mxu0 %v450
      %v1883 = vpop.f32.mrf.mxu0
      %v1884 = vadd.f32 %v1723, %v1883
      %v1885 = vpop.f32.mrf.mxu0
      %v1886 = vpop.f32.mrf.mxu0
      %v1887 = vadd.f32 %v1726, %v1886
      %v1888 = vpop.f32.mrf.mxu0
      %1889 = vmatprep.mubr.bf16.mxu0 0
      %1890 = vmatmul.mubr.bf16.gmra.mxu0 %v452
      %v1891 = vpop.f32.mrf.mxu0
      %v1892 = vadd.f32 %v1731, %v1891
      %v1893 = vpop.f32.mrf.mxu0
      %v1894 = vpop.f32.mrf.mxu0
      %v1895 = vadd.f32 %v1734, %v1894
      %v1896 = vpop.f32.mrf.mxu0
      %1897 = vmatprep.mubr.bf16.mxu0 0
      %1898 = vmatmul.mubr.bf16.gmra.mxu0 %v453
      %v1899 = vpop.f32.mrf.mxu0
      %v1900 = vadd.f32 %v1739, %v1899
      %v1901 = vpop.f32.mrf.mxu0
      %v1902 = vpop.f32.mrf.mxu0
      %v1903 = vadd.f32 %v1742, %v1902
      %v1904 = vpop.f32.mrf.mxu0
      %1905 = vmatprep.mubr.bf16.mxu0 0
      %1906 = vmatmul.mubr.bf16.gmra.mxu0 %v454
      %v1907 = vpop.f32.mrf.mxu0
      %v1908 = vadd.f32 %v1747, %v1907
      %v1909 = vpop.f32.mrf.mxu0
      %v1910 = vpop.f32.mrf.mxu0
      %v1911 = vadd.f32 %v1750, %v1910
      %v1912 = vpop.f32.mrf.mxu0
      %1913 = vmatprep.mubr.bf16.mxu0 0
      %1914 = vmatmul.mubr.bf16.gmra.mxu0 %v455
      %v1915 = vpop.f32.mrf.mxu0
      %v1916 = vadd.f32 %v1755, %v1915
      %v1917 = vpop.f32.mrf.mxu0
      %v1918 = vpop.f32.mrf.mxu0
      %v1919 = vadd.f32 %v1758, %v1918
      %v1920 = vpop.f32.mrf.mxu0
      %1921 = vmatprep.mubr.bf16.mxu0 0
      %1922 = vmatmul.mubr.bf16.gmra.mxu0 %v456
      %v1923 = vpop.f32.mrf.mxu0
      %v1924 = vadd.f32 %v1763, %v1923
      %v1925 = vpop.f32.mrf.mxu0
      %v1926 = vpop.f32.mrf.mxu0
      %v1927 = vadd.f32 %v1766, %v1926
      %v1928 = vpop.f32.mrf.mxu0
      %1929 = vmatprep.mubr.bf16.mxu0 0
      %1930 = vmatmul.mubr.bf16.gmra.mxu0 %v457
      %v1931 = vpop.f32.mrf.mxu0
      %v1932 = vadd.f32 %v1771, %v1931
      %v1933 = vpop.f32.mrf.mxu0
      %v1934 = vpop.f32.mrf.mxu0
      %v1935 = vadd.f32 %v1774, %v1934
      %v1936 = vpop.f32.mrf.mxu0
      %1937 = vmatprep.mubr.bf16.mxu0 0
      %1938 = vmatmul.mubr.bf16.gmra.mxu0 %v458
      %v1939 = vpop.f32.mrf.mxu0
      %v1940 = vadd.f32 %v1779, %v1939
      %v1941 = vpop.f32.mrf.mxu0
      %v1942 = vpop.f32.mrf.mxu0
      %v1943 = vadd.f32 %v1782, %v1942
      %v1944 = vpop.f32.mrf.mxu0
      %1945 = vmatprep.mubr.bf16.mxu0 0
      %1946 = vmatmul.mubr.bf16.gmra.mxu0 %v459
      %v1947 = vpop.f32.mrf.mxu0
      %v1948 = vadd.f32 %v1787, %v1947
      %v1949 = vpop.f32.mrf.mxu0
      %v1950 = vpop.f32.mrf.mxu0
      %v1951 = vadd.f32 %v1790, %v1950
      %v1952 = vpop.f32.mrf.mxu0
      %1953 = vmatprep.mubr.bf16.mxu0 0
      %1954 = vmatmul.mubr.bf16.gmra.mxu0 %v460
      %v1955 = vpop.f32.mrf.mxu0
      %v1956 = vadd.f32 %v1795, %v1955
      %v1957 = vpop.f32.mrf.mxu0
      %v1958 = vpop.f32.mrf.mxu0
      %v1959 = vadd.f32 %v1798, %v1958
      %v1960 = vpop.f32.mrf.mxu0
      %1961 = vmatprep.mubr.bf16.mxu0 0
      %1962 = vmatmul.mubr.bf16.gmra.mxu0 %v461
      %v1963 = vpop.f32.mrf.mxu0
      %v1964 = vadd.f32 %v1803, %v1963
      %v1965 = vpop.f32.mrf.mxu0
      %v1966 = vpop.f32.mrf.mxu0
      %v1967 = vadd.f32 %v1806, %v1966
      %v1968 = vpop.f32.mrf.mxu0
      %1969 = vmatprep.mubr.bf16.mxu0 0
      %1970 = vmatmul.mubr.bf16.gmra.mxu0 %v462
      %v1971 = vpop.f32.mrf.mxu0
      %v1972 = vadd.f32 %v1811, %v1971
      %v1973 = vpop.f32.mrf.mxu0
      %v1974 = vpop.f32.mrf.mxu0
      %v1975 = vadd.f32 %v1814, %v1974
      %v1976 = vpop.f32.mrf.mxu0
      %1977 = vmatprep.mubr.bf16.mxu0 0
      %1978 = vmatmul.mubr.bf16.gmra.mxu0 %v463
      %v1979 = vpop.f32.mrf.mxu0
      %v1980 = vadd.f32 %v1819, %v1979
      %v1981 = vpop.f32.mrf.mxu0
      %v1982 = vpop.f32.mrf.mxu0
      %v1983 = vadd.f32 %v1822, %v1982
      %v1984 = vpop.f32.mrf.mxu0
      %1985 = vmatprep.mubr.bf16.mxu0 0
      %1986 = vmatmul.mubr.bf16.gmra.mxu0 %v464
      %v1987 = vpop.f32.mrf.mxu0
      %v1988 = vadd.f32 %v1827, %v1987
      %v1989 = vpop.f32.mrf.mxu0
      %v1990 = vpop.f32.mrf.mxu0
      %v1991 = vadd.f32 %v1830, %v1990
      %v1992 = vpop.f32.mrf.mxu0
      %1993 = vmatprep.mubr.bf16.mxu0 0
      %1994 = vmatmul.mubr.bf16.gmra.mxu0 %v465
      %v1995 = vpop.f32.mrf.mxu0
      %v1996 = vadd.f32 %v1835, %v1995
      %v1997 = vpop.f32.mrf.mxu0
      %v1998 = vpop.f32.mrf.mxu0
      %v1999 = vadd.f32 %v1838, %v1998
      %v2000 = vpop.f32.mrf.mxu0
      %2001 = vmatprep.mubr.bf16.mxu0 0
      %2002 = vmatmul.mubr.bf16.gmra.mxu0 %v464
      %v2003 = vpop.f32.mrf.mxu0
      %v2004 = vadd.f32 %v1843, %v2003
      %v2005 = vpop.f32.mrf.mxu0
      %v2006 = vpop.f32.mrf.mxu0
      %v2007 = vadd.f32 %v1846, %v2006
      %v2008 = vpop.f32.mrf.mxu0
      %2009 = vdwg.mxu0
      %v2010 = vadd.f32 %v1369, %v1884
      %v2011 = vadd.f32 %v1372, %v1887
      %v2012 = vadd.f32 %v1377, %v1892
      %v2013 = vadd.f32 %v1380, %v1895
      %v2014 = vadd.f32 %v1385, %v1900
      %v2015 = vadd.f32 %v1388, %v1903
      %v2016 = vadd.f32 %v1393, %v1908
      %v2017 = vadd.f32 %v1396, %v1911
      %v2018 = vadd.f32 %v1401, %v1916
      %v2019 = vadd.f32 %v1404, %v1919
      %v2020 = vadd.f32 %v1409, %v1924
      %v2021 = vadd.f32 %v1412, %v1927
      %v2022 = vadd.f32 %v1417, %v1932
      %v2023 = vadd.f32 %v1420, %v1935
      %v2024 = vadd.f32 %v1425, %v1940
      %v2025 = vadd.f32 %v1428, %v1943
      %v2026 = vadd.f32 %v1433, %v1948
      %v2027 = vadd.f32 %v1436, %v1951
      %v2028 = vadd.f32 %v1441, %v1956
      %v2029 = vadd.f32 %v1444, %v1959
      %v2030 = vadd.f32 %v1449, %v1964
      %v2031 = vadd.f32 %v1452, %v1967
      %v2032 = vadd.f32 %v1457, %v1972
      %v2033 = vadd.f32 %v1460, %v1975
      %v2034 = vadd.f32 %v1465, %v1980
      %v2035 = vadd.f32 %v1468, %v1983
      %v2036 = vadd.f32 %v1473, %v1988
      %v2037 = vadd.f32 %v1476, %v1991
      %v2038 = vadd.f32 %v1481, %v1996
      %v2039 = vadd.f32 %v1484, %v1999
      %v2040 = vadd.f32 %v1489, %v2004
      %v2041 = vadd.f32 %v1492, %v2007
      %v2042 = vadd.f32 %v2010, %v2011
      %v2043 = vadd.f32 %v2042, %v2012
      %v2044 = vadd.f32 %v2043, %v2013
      %v2045 = vadd.f32 %v2044, %v2014
      %v2046 = vadd.f32 %v2045, %v2015
      %v2047 = vadd.f32 %v2046, %v2016
      %v2048 = vadd.f32 %v2047, %v2017
      %v2049 = vadd.f32 %v2048, %v2018
      %v2050 = vadd.f32 %v2049, %v2019
      %v2051 = vadd.f32 %v2050, %v2020
      %v2052 = vadd.f32 %v2051, %v2021
      %v2053 = vadd.f32 %v2052, %v2022
      %v2054 = vadd.f32 %v2053, %v2023
      %v2055 = vadd.f32 %v2054, %v2024
      %v2056 = vadd.f32 %v2055, %v2025
      %v2057 = vadd.f32 %v2056, %v2026
      %v2058 = vadd.f32 %v2057, %v2027
      %v2059 = vadd.f32 %v2058, %v2028
      %v2060 = vadd.f32 %v2059, %v2029
      %v2061 = vadd.f32 %v2060, %v2030
      %v2062 = vadd.f32 %v2061, %v2031
      %v2063 = vadd.f32 %v2062, %v2032
      %v2064 = vadd.f32 %v2063, %v2033
      %v2065 = vadd.f32 %v2064, %v2034
      %v2066 = vadd.f32 %v2065, %v2035
      %v2067 = vadd.f32 %v2066, %v2036
      %v2068 = vadd.f32 %v2067, %v2037
      %v2069 = vadd.f32 %v2068, %v2038
      %v2070 = vadd.f32 %v2069, %v2039
      %v2071 = vadd.f32 %v2070, %v2040
      %v2072 = vadd.f32 %v2071, %v2041
      %v2073 = vrot.slane %v2072, 4
      %v2074 = vadd.f32 %v2072, %v2073
      %v2075 = vrot.slane %v2074, 2
      %v2076 = vadd.f32 %v2074, %v2075
      %v2077 = vrot.slane %v2076, 1
      %v2078 = vadd.f32 %v2076, %v2077
      %v2079 = vmul.f32 %v2078, 0.00390625
      %v2080 = vmul.f32 %v2010, %v2010
      %v2081 = vmul.f32 %v2011, %v2011
      %v2082 = vmul.f32 %v2012, %v2012
      %v2083 = vmul.f32 %v2013, %v2013
      %v2084 = vmul.f32 %v2014, %v2014
      %v2085 = vmul.f32 %v2015, %v2015
      %v2086 = vmul.f32 %v2016, %v2016
      %v2087 = vmul.f32 %v2017, %v2017
      %v2088 = vmul.f32 %v2018, %v2018
      %v2089 = vmul.f32 %v2019, %v2019
      %v2090 = vmul.f32 %v2020, %v2020
      %v2091 = vmul.f32 %v2021, %v2021
      %v2092 = vmul.f32 %v2022, %v2022
      %v2093 = vmul.f32 %v2023, %v2023
      %v2094 = vmul.f32 %v2024, %v2024
      %v2095 = vmul.f32 %v2025, %v2025
      %v2096 = vmul.f32 %v2026, %v2026
      %v2097 = vmul.f32 %v2027, %v2027
      %v2098 = vmul.f32 %v2028, %v2028
      %v2099 = vmul.f32 %v2029, %v2029
      %v2100 = vmul.f32 %v2030, %v2030
      %v2101 = vmul.f32 %v2031, %v2031
      %v2102 = vmul.f32 %v2032, %v2032
      %v2103 = vmul.f32 %v2033, %v2033
      %v2104 = vmul.f32 %v2034, %v2034
      %v2105 = vmul.f32 %v2035, %v2035
      %v2106 = vmul.f32 %v2036, %v2036
      %v2107 = vmul.f32 %v2037, %v2037
      %v2108 = vmul.f32 %v2038, %v2038
      %v2109 = vmul.f32 %v2039, %v2039
      %v2110 = vmul.f32 %v2040, %v2040
      %v2111 = vmul.f32 %v2041, %v2041
      %v2112 = vadd.f32 %v2080, %v2081
      %v2113 = vadd.f32 %v2112, %v2082
      %v2114 = vadd.f32 %v2113, %v2083
      %v2115 = vadd.f32 %v2114, %v2084
      %v2116 = vadd.f32 %v2115, %v2085
      %v2117 = vadd.f32 %v2116, %v2086
      %v2118 = vadd.f32 %v2117, %v2087
      %v2119 = vadd.f32 %v2118, %v2088
      %v2120 = vadd.f32 %v2119, %v2089
      %v2121 = vadd.f32 %v2120, %v2090
      %v2122 = vadd.f32 %v2121, %v2091
      %v2123 = vadd.f32 %v2122, %v2092
      %v2124 = vadd.f32 %v2123, %v2093
      %v2125 = vadd.f32 %v2124, %v2094
      %v2126 = vadd.f32 %v2125, %v2095
      %v2127 = vadd.f32 %v2126, %v2096
      %v2128 = vadd.f32 %v2127, %v2097
      %v2129 = vadd.f32 %v2128, %v2098
      %v2130 = vadd.f32 %v2129, %v2099
      %v2131 = vadd.f32 %v2130, %v2100
      %v2132 = vadd.f32 %v2131, %v2101
      %v2133 = vadd.f32 %v2132, %v2102
      %v2134 = vadd.f32 %v2133, %v2103
      %v2135 = vadd.f32 %v2134, %v2104
      %v2136 = vadd.f32 %v2135, %v2105
      %v2137 = vadd.f32 %v2136, %v2106
      %v2138 = vadd.f32 %v2137, %v2107
      %v2139 = vadd.f32 %v2138, %v2108
      %v2140 = vadd.f32 %v2139, %v2109
      %v2141 = vadd.f32 %v2140, %v2110
      %v2142 = vadd.f32 %v2141, %v2111
      %v2143 = vrot.slane %v2142, 4
      %v2144 = vadd.f32 %v2142, %v2143
      %v2145 = vrot.slane %v2144, 2
      %v2146 = vadd.f32 %v2144, %v2145
      %v2147 = vrot.slane %v2146, 1
      %v2148 = vadd.f32 %v2146, %v2147
      %v2149 = vmul.f32 %v2148, 0.00390625
      %v2150 = vmul.f32 %v2079, %v2079
      %v2151 = vsub.f32 %v2149, %v2150
      %v2152 = vmax.f32 %v2151, 0.0
      %v2153 = vsub.f32 %v2010, %v2079
      %v2154 = vsub.f32 %v2011, %v2079
      %v2155 = vsub.f32 %v2012, %v2079
      %v2156 = vsub.f32 %v2013, %v2079
      %v2157 = vsub.f32 %v2014, %v2079
      %v2158 = vsub.f32 %v2015, %v2079
      %v2159 = vsub.f32 %v2016, %v2079
      %v2160 = vsub.f32 %v2017, %v2079
      %v2161 = vsub.f32 %v2018, %v2079
      %v2162 = vsub.f32 %v2019, %v2079
      %v2163 = vsub.f32 %v2020, %v2079
      %v2164 = vsub.f32 %v2021, %v2079
      %v2165 = vsub.f32 %v2022, %v2079
      %v2166 = vsub.f32 %v2023, %v2079
      %v2167 = vsub.f32 %v2024, %v2079
      %v2168 = vsub.f32 %v2025, %v2079
      %v2169 = vsub.f32 %v2026, %v2079
      %v2170 = vsub.f32 %v2027, %v2079
      %v2171 = vsub.f32 %v2028, %v2079
      %v2172 = vsub.f32 %v2029, %v2079
      %v2173 = vsub.f32 %v2030, %v2079
      %v2174 = vsub.f32 %v2031, %v2079
      %v2175 = vsub.f32 %v2032, %v2079
      %v2176 = vsub.f32 %v2033, %v2079
      %v2177 = vsub.f32 %v2034, %v2079
      %v2178 = vsub.f32 %v2035, %v2079
      %v2179 = vsub.f32 %v2036, %v2079
      %v2180 = vsub.f32 %v2037, %v2079
      %v2181 = vsub.f32 %v2038, %v2079
      %v2182 = vsub.f32 %v2039, %v2079
      %v2183 = vsub.f32 %v2040, %v2079
      %v2184 = vsub.f32 %v2041, %v2079
      %v2185 = vadd.f32 %v2152, 1e-05
      %v2186 = vrsqrt.pop %v2185
      %v2187 = vmul.f32 %v2153, %v2186
      %v2188 = vmul.f32 %v2154, %v2186
      %v2189 = vmul.f32 %v2155, %v2186
      %v2190 = vmul.f32 %v2156, %v2186
      %v2191 = vmul.f32 %v2157, %v2186
      %v2192 = vmul.f32 %v2158, %v2186
      %v2193 = vmul.f32 %v2159, %v2186
      %v2194 = vmul.f32 %v2160, %v2186
      %v2195 = vmul.f32 %v2161, %v2186
      %v2196 = vmul.f32 %v2162, %v2186
      %v2197 = vmul.f32 %v2163, %v2186
      %v2198 = vmul.f32 %v2164, %v2186
      %v2199 = vmul.f32 %v2165, %v2186
      %v2200 = vmul.f32 %v2166, %v2186
      %v2201 = vmul.f32 %v2167, %v2186
      %v2202 = vmul.f32 %v2168, %v2186
      %v2203 = vmul.f32 %v2169, %v2186
      %v2204 = vmul.f32 %v2170, %v2186
      %v2205 = vmul.f32 %v2171, %v2186
      %v2206 = vmul.f32 %v2172, %v2186
      %v2207 = vmul.f32 %v2173, %v2186
      %v2208 = vmul.f32 %v2174, %v2186
      %v2209 = vmul.f32 %v2175, %v2186
      %v2210 = vmul.f32 %v2176, %v2186
      %v2211 = vmul.f32 %v2177, %v2186
      %v2212 = vmul.f32 %v2178, %v2186
      %v2213 = vmul.f32 %v2179, %v2186
      %v2214 = vmul.f32 %v2180, %v2186
      %v2215 = vmul.f32 %v2181, %v2186
      %v2216 = vmul.f32 %v2182, %v2186
      %v2217 = vmul.f32 %v2183, %v2186
      %v2218 = vmul.f32 %v2184, %v2186
      %v2219 = vmax.f32 %v2187, 0.0
      %v2220 = vmax.f32 %v2188, 0.0
      %v2221 = vmax.f32 %v2189, 0.0
      %v2222 = vmax.f32 %v2190, 0.0
      %v2223 = vmax.f32 %v2191, 0.0
      %v2224 = vmax.f32 %v2192, 0.0
      %v2225 = vmax.f32 %v2193, 0.0
      %v2226 = vmax.f32 %v2194, 0.0
      %v2227 = vmax.f32 %v2195, 0.0
      %v2228 = vmax.f32 %v2196, 0.0
      %v2229 = vmax.f32 %v2197, 0.0
      %v2230 = vmax.f32 %v2198, 0.0
      %v2231 = vmax.f32 %v2199, 0.0
      %v2232 = vmax.f32 %v2200, 0.0
      %v2233 = vmax.f32 %v2201, 0.0
      %v2234 = vmax.f32 %v2202, 0.0
      %v2235 = vmax.f32 %v2203, 0.0
      %v2236 = vmax.f32 %v2204, 0.0
      %v2237 = vmax.f32 %v2205, 0.0
      %v2238 = vmax.f32 %v2206, 0.0
      %v2239 = vmax.f32 %v2207, 0.0
      %v2240 = vmax.f32 %v2208, 0.0
      %v2241 = vmax.f32 %v2209, 0.0
      %v2242 = vmax.f32 %v2210, 0.0
      %v2243 = vmax.f32 %v2211, 0.0
      %v2244 = vmax.f32 %v2212, 0.0
      %v2245 = vmax.f32 %v2213, 0.0
      %v2246 = vmax.f32 %v2214, 0.0
      %v2247 = vmax.f32 %v2215, 0.0
      %v2248 = vmax.f32 %v2216, 0.0
      %v2249 = vmax.f32 %v2217, 0.0
      %v2250 = vmax.f32 %v2218, 0.0
      %v2251 = vpack.c.bf16 %v2220, %v2219
      %v2252 = vpack.c.bf16 %v2222, %v2221
      %v2253 = vpack.c.bf16 %v2224, %v2223
      %v2254 = vpack.c.bf16 %v2226, %v2225
      %v2255 = vpack.c.bf16 %v2228, %v2227
      %v2256 = vpack.c.bf16 %v2230, %v2229
      %v2257 = vpack.c.bf16 %v2232, %v2231
      %v2258 = vpack.c.bf16 %v2234, %v2233
      %v2259 = vpack.c.bf16 %v2236, %v2235
      %v2260 = vpack.c.bf16 %v2238, %v2237
      %v2261 = vpack.c.bf16 %v2240, %v2239
      %v2262 = vpack.c.bf16 %v2242, %v2241
      %v2263 = vpack.c.bf16 %v2244, %v2243
      %v2264 = vpack.c.bf16 %v2246, %v2245
      %v2265 = vpack.c.bf16 %v2248, %v2247
      %v2266 = vpack.c.bf16 %v2250, %v2249
      %v2268 = vshrl.u32 %v2252, 16
      %v2271 = vshrl.u32 %v2251, 16
      %v2274 = vshrl.u32 %v2253, 16
      %v2277 = vshrl.u32 %v2254, 16
      %v2280 = vshrl.u32 %v2255, 16
      %v2283 = vshrl.u32 %v2256, 16
      %v2286 = vshrl.u32 %v2257, 16
      %v2289 = vshrl.u32 %v2258, 16
      %v2292 = vshrl.u32 %v2259, 16
      %v2295 = vshrl.u32 %v2260, 16
      %v2298 = vshrl.u32 %v2261, 16
      %v2301 = vshrl.u32 %v2262, 16
      %v2304 = vshrl.u32 %v2263, 16
      %v2307 = vshrl.u32 %v2264, 16
      %v2310 = vshrl.u32 %v2265, 16
      %v2313 = vshrl.u32 %v2266, 16
      %v2331 = vrot.slane %v2268, 7
      %v2332 = vshll.u32 %v2252, 16
      %v2334 = vor.u32 %v2331, %v2332
      %v2335 = vrot.slane %v2271, 7
      %v2336 = vshll.u32 %v2251, 16
      %v2338 = vor.u32 %v2335, %v2336
      %v2339 = vrot.slane %v2274, 7
      %v2340 = vshll.u32 %v2253, 16
      %v2342 = vor.u32 %v2339, %v2340
      %v2343 = vrot.slane %v2277, 7
      %v2344 = vshll.u32 %v2254, 16
      %v2346 = vor.u32 %v2343, %v2344
      %v2347 = vrot.slane %v2280, 7
      %v2348 = vshll.u32 %v2255, 16
      %v2350 = vor.u32 %v2347, %v2348
      %v2351 = vrot.slane %v2283, 7
      %v2352 = vshll.u32 %v2256, 16
      %v2354 = vor.u32 %v2351, %v2352
      %v2355 = vrot.slane %v2286, 7
      %v2356 = vshll.u32 %v2257, 16
      %v2358 = vor.u32 %v2355, %v2356
      %v2359 = vrot.slane %v2289, 7
      %v2360 = vshll.u32 %v2258, 16
      %v2362 = vor.u32 %v2359, %v2360
      %v2363 = vrot.slane %v2292, 7
      %v2364 = vshll.u32 %v2259, 16
      %v2366 = vor.u32 %v2363, %v2364
      %v2367 = vrot.slane %v2295, 7
      %v2368 = vshll.u32 %v2260, 16
      %v2370 = vor.u32 %v2367, %v2368
      %v2371 = vrot.slane %v2298, 7
      %v2372 = vshll.u32 %v2261, 16
      %v2374 = vor.u32 %v2371, %v2372
      %v2375 = vrot.slane %v2301, 7
      %v2376 = vshll.u32 %v2262, 16
      %v2378 = vor.u32 %v2375, %v2376
      %v2379 = vrot.slane %v2304, 7
      %v2380 = vshll.u32 %v2263, 16
      %v2382 = vor.u32 %v2379, %v2380
      %v2383 = vrot.slane %v2307, 7
      %v2384 = vshll.u32 %v2264, 16
      %v2386 = vor.u32 %v2383, %v2384
      %v2387 = vrot.slane %v2310, 7
      %v2388 = vshll.u32 %v2265, 16
      %v2390 = vor.u32 %v2387, %v2388
      %v2391 = vrot.slane %v2313, 7
      %v2392 = vshll.u32 %v2266, 16
      %v2394 = vor.u32 %v2391, %v2392
      %v2411 = vsel %vm366, %v2268, %v2334
      %v2412 = vsel %vm366, %v2271, %v2338
      %v2413 = vsel %vm366, %v2274, %v2342
      %v2414 = vsel %vm366, %v2277, %v2346
      %v2415 = vsel %vm366, %v2280, %v2350
      %v2416 = vsel %vm366, %v2283, %v2354
      %v2417 = vsel %vm366, %v2286, %v2358
      %v2418 = vsel %vm366, %v2289, %v2362
      %v2419 = vsel %vm366, %v2292, %v2366
      %v2420 = vsel %vm366, %v2295, %v2370
      %v2421 = vsel %vm366, %v2298, %v2374
      %v2422 = vsel %vm366, %v2301, %v2378
      %v2423 = vsel %vm366, %v2304, %v2382
      %v2424 = vsel %vm366, %v2307, %v2386
      %v2425 = vsel %vm366, %v2310, %v2390
      %v2426 = vsel %vm366, %v2313, %v2394
      %v2427 = vrot.slane %v2332, 1
      %v2428 = vor.u32 %v2268, %v2427
      %v2429 = vrot.slane %v2336, 1
      %v2430 = vor.u32 %v2271, %v2429
      %v2431 = vrot.slane %v2340, 1
      %v2432 = vor.u32 %v2274, %v2431
      %v2433 = vrot.slane %v2344, 1
      %v2434 = vor.u32 %v2277, %v2433
      %v2435 = vrot.slane %v2348, 1
      %v2436 = vor.u32 %v2280, %v2435
      %v2437 = vrot.slane %v2352, 1
      %v2438 = vor.u32 %v2283, %v2437
      %v2439 = vrot.slane %v2356, 1
      %v2440 = vor.u32 %v2286, %v2439
      %v2441 = vrot.slane %v2360, 1
      %v2442 = vor.u32 %v2289, %v2441
      %v2443 = vrot.slane %v2364, 1
      %v2444 = vor.u32 %v2292, %v2443
      %v2445 = vrot.slane %v2368, 1
      %v2446 = vor.u32 %v2295, %v2445
      %v2447 = vrot.slane %v2372, 1
      %v2448 = vor.u32 %v2298, %v2447
      %v2449 = vrot.slane %v2376, 1
      %v2450 = vor.u32 %v2301, %v2449
      %v2451 = vrot.slane %v2380, 1
      %v2452 = vor.u32 %v2304, %v2451
      %v2453 = vrot.slane %v2384, 1
      %v2454 = vor.u32 %v2307, %v2453
      %v2455 = vrot.slane %v2388, 1
      %v2456 = vor.u32 %v2310, %v2455
      %v2457 = vrot.slane %v2392, 1
      %v2458 = vor.u32 %v2313, %v2457
      %v2491 = vsel %vm449, %v2428, %v2332
      %v2492 = vsel %vm449, %v2430, %v2336
      %v2493 = vsel %vm449, %v2432, %v2340
      %v2494 = vsel %vm449, %v2434, %v2344
      %v2495 = vsel %vm449, %v2436, %v2348
      %v2496 = vsel %vm449, %v2438, %v2352
      %v2497 = vsel %vm449, %v2440, %v2356
      %v2498 = vsel %vm449, %v2442, %v2360
      %v2499 = vsel %vm449, %v2444, %v2364
      %v2500 = vsel %vm449, %v2446, %v2368
      %v2501 = vsel %vm449, %v2448, %v2372
      %v2502 = vsel %vm449, %v2450, %v2376
      %v2503 = vsel %vm449, %v2452, %v2380
      %v2504 = vsel %vm449, %v2454, %v2384
      %v2505 = vsel %vm449, %v2456, %v2388
      %v2506 = vsel %vm449, %v2458, %v2392
      %v2507 = vld [vmem:[%s2] sm:$0xf]
      %v2508 = vld [vmem:[%s2 + $0x4] sm:$0xf]
      %v2509 = vld [vmem:[%s2 + $0x8] sm:$0xf]
      %v2510 = vld [vmem:[%s2 + $0xc] sm:$0xf]
      %v2511 = vld [vmem:[%s2 + $0x10] sm:$0xf]
      %v2512 = vld [vmem:[%s2 + $0x14] sm:$0xf]
      %v2513 = vld [vmem:[%s2 + $0x18] sm:$0xf]
      %v2514 = vld [vmem:[%s2 + $0x1c] sm:$0xf]
      %v2515 = vld [vmem:[%s2 + $0x20] sm:$0xf]
      %v2516 = vld [vmem:[%s2 + $0x24] sm:$0xf]
      %v2517 = vld [vmem:[%s2 + $0x28] sm:$0xf]
      %v2518 = vld [vmem:[%s2 + $0x2c] sm:$0xf]
      %v2519 = vld [vmem:[%s2 + $0x30] sm:$0xf]
      %v2520 = vld [vmem:[%s2 + $0x34] sm:$0xf]
      %v2521 = vld [vmem:[%s2 + $0x38] sm:$0xf]
      %v2522 = vld [vmem:[%s2 + $0x3c] sm:$0xf]
      %v2523 = vld [vmem:[%s2 + $0x40] sm:$0xf]
      %v2524 = vld [vmem:[%s2 + $0x44] sm:$0xf]
      %v2525 = vld [vmem:[%s2 + $0x48] sm:$0xf]
      %v2526 = vld [vmem:[%s2 + $0x4c] sm:$0xf]
      %v2527 = vld [vmem:[%s2 + $0x50] sm:$0xf]
      %v2528 = vld [vmem:[%s2 + $0x54] sm:$0xf]
      %v2529 = vld [vmem:[%s2 + $0x58] sm:$0xf]
      %v2530 = vld [vmem:[%s2 + $0x5c] sm:$0xf]
      %v2531 = vld [vmem:[%s2 + $0x60] sm:$0xf]
      %v2532 = vld [vmem:[%s2 + $0x64] sm:$0xf]
      %v2533 = vld [vmem:[%s2 + $0x68] sm:$0xf]
      %v2534 = vld [vmem:[%s2 + $0x6c] sm:$0xf]
      %v2535 = vld [vmem:[%s2 + $0x70] sm:$0xf]
      %v2536 = vld [vmem:[%s2 + $0x74] sm:$0xf]
      %v2537 = vld [vmem:[%s2 + $0x78] sm:$0xf]
      %v2538 = vld [vmem:[%s2 + $0x7c] sm:$0xf]
      %v2539 = vld [vmem:[%s2 + $0x80] sm:$0xf]
      %v2540 = vld [vmem:[%s2 + $0x84] sm:$0xf]
      %v2541 = vld [vmem:[%s2 + $0x88] sm:$0xf]
      %v2542 = vld [vmem:[%s2 + $0x8c] sm:$0xf]
      %v2543 = vld [vmem:[%s2 + $0x90] sm:$0xf]
      %v2544 = vld [vmem:[%s2 + $0x94] sm:$0xf]
      %v2545 = vld [vmem:[%s2 + $0x98] sm:$0xf]
      %v2546 = vld [vmem:[%s2 + $0x9c] sm:$0xf]
      %v2547 = vld [vmem:[%s2 + $0xa0] sm:$0xf]
      %v2548 = vld [vmem:[%s2 + $0xa4] sm:$0xf]
      %v2549 = vld [vmem:[%s2 + $0xa8] sm:$0xf]
      %v2550 = vld [vmem:[%s2 + $0xac] sm:$0xf]
      %v2551 = vld [vmem:[%s2 + $0xb0] sm:$0xf]
      %v2552 = vld [vmem:[%s2 + $0xb4] sm:$0xf]
      %v2553 = vld [vmem:[%s2 + $0xb8] sm:$0xf]
      %v2554 = vld [vmem:[%s2 + $0xbc] sm:$0xf]
      %s2555 = scalar_lea.vmem %s2, 192
      %v2556 = vld [vmem:[%s2555] sm:$0xf]
      %v2557 = vld [vmem:[%s2555 + $0x4] sm:$0xf]
      %v2558 = vld [vmem:[%s2555 + $0x8] sm:$0xf]
      %v2559 = vld [vmem:[%s2555 + $0xc] sm:$0xf]
      %v2560 = vld [vmem:[%s2555 + $0x10] sm:$0xf]
      %v2561 = vld [vmem:[%s2555 + $0x14] sm:$0xf]
      %v2562 = vld [vmem:[%s2555 + $0x18] sm:$0xf]
      %v2563 = vld [vmem:[%s2555 + $0x1c] sm:$0xf]
      %v2564 = vld [vmem:[%s2555 + $0x20] sm:$0xf]
      %v2565 = vld [vmem:[%s2555 + $0x24] sm:$0xf]
      %v2566 = vld [vmem:[%s2555 + $0x28] sm:$0xf]
      %v2567 = vld [vmem:[%s2555 + $0x2c] sm:$0xf]
      %v2568 = vld [vmem:[%s2555 + $0x30] sm:$0xf]
      %v2569 = vld [vmem:[%s2555 + $0x34] sm:$0xf]
      %v2570 = vld [vmem:[%s2555 + $0x38] sm:$0xf]
      %v2571 = vld [vmem:[%s2555 + $0x3c] sm:$0xf]
      %v2572 = vld [vmem:[%s2555 + $0x40] sm:$0xf]
      %v2573 = vld [vmem:[%s2555 + $0x44] sm:$0xf]
      %v2574 = vld [vmem:[%s2555 + $0x48] sm:$0xf]
      %v2575 = vld [vmem:[%s2555 + $0x4c] sm:$0xf]
      %v2576 = vld [vmem:[%s2555 + $0x50] sm:$0xf]
      %v2577 = vld [vmem:[%s2555 + $0x54] sm:$0xf]
      %v2578 = vld [vmem:[%s2555 + $0x58] sm:$0xf]
      %v2579 = vld [vmem:[%s2555 + $0x5c] sm:$0xf]
      %v2580 = vld [vmem:[%s2555 + $0x60] sm:$0xf]
      %v2581 = vld [vmem:[%s2555 + $0x64] sm:$0xf]
      %v2582 = vld [vmem:[%s2555 + $0x68] sm:$0xf]
      %v2583 = vld [vmem:[%s2555 + $0x6c] sm:$0xf]
      %v2584 = vld [vmem:[%s2555 + $0x70] sm:$0xf]
      %v2585 = vld [vmem:[%s2555 + $0x74] sm:$0xf]
      %v2586 = vld [vmem:[%s2555 + $0x78] sm:$0xf]
      %v2587 = vld [vmem:[%s2555 + $0x7c] sm:$0xf]
      %v2588 = vld [vmem:[%s2555 + $0x80] sm:$0xf]
      %v2589 = vld [vmem:[%s2555 + $0x84] sm:$0xf]
      %v2590 = vld [vmem:[%s2555 + $0x88] sm:$0xf]
      %v2591 = vld [vmem:[%s2555 + $0x8c] sm:$0xf]
      %v2592 = vld [vmem:[%s2555 + $0x90] sm:$0xf]
      %v2593 = vld [vmem:[%s2555 + $0x94] sm:$0xf]
      %v2594 = vld [vmem:[%s2555 + $0x98] sm:$0xf]
      %v2595 = vld [vmem:[%s2555 + $0x9c] sm:$0xf]
      %v2596 = vld [vmem:[%s2555 + $0xa0] sm:$0xf]
      %v2597 = vld [vmem:[%s2555 + $0xa4] sm:$0xf]
      %v2598 = vld [vmem:[%s2555 + $0xa8] sm:$0xf]
      %v2599 = vld [vmem:[%s2555 + $0xac] sm:$0xf]
      %v2600 = vld [vmem:[%s2555 + $0xb0] sm:$0xf]
      %v2601 = vld [vmem:[%s2555 + $0xb4] sm:$0xf]
      %v2602 = vld [vmem:[%s2555 + $0xb8] sm:$0xf]
      %v2603 = vld [vmem:[%s2555 + $0xbc] sm:$0xf]
      %v2652 = vunpack.c.l.b16 %v2556
      %v2653 = vunpack.c.l.b16 %v2557
      %v2654 = vunpack.c.l.b16 %v2558
      %v2655 = vunpack.c.l.b16 %v2559
      %v2656 = vunpack.c.l.b16 %v2560
      %v2657 = vunpack.c.l.b16 %v2561
      %v2658 = vunpack.c.l.b16 %v2562
      %v2659 = vunpack.c.l.b16 %v2563
      %v2660 = vunpack.c.l.b16 %v2564
      %v2661 = vunpack.c.l.b16 %v2565
      %v2662 = vunpack.c.l.b16 %v2566
      %v2663 = vunpack.c.l.b16 %v2567
      %v2664 = vunpack.c.l.b16 %v2568
      %v2665 = vunpack.c.l.b16 %v2569
      %v2666 = vunpack.c.l.b16 %v2570
      %v2667 = vunpack.c.l.b16 %v2571
      %v2668 = vunpack.c.l.b16 %v2572
      %v2669 = vunpack.c.l.b16 %v2573
      %v2670 = vunpack.c.l.b16 %v2574
      %v2671 = vunpack.c.l.b16 %v2575
      %v2672 = vunpack.c.l.b16 %v2576
      %v2673 = vunpack.c.l.b16 %v2577
      %v2674 = vunpack.c.l.b16 %v2578
      %v2675 = vunpack.c.l.b16 %v2579
      %v2676 = vunpack.c.l.b16 %v2580
      %v2677 = vunpack.c.l.b16 %v2581
      %v2678 = vunpack.c.l.b16 %v2582
      %v2679 = vunpack.c.l.b16 %v2583
      %v2680 = vunpack.c.l.b16 %v2584
      %v2681 = vunpack.c.l.b16 %v2585
      %v2682 = vunpack.c.l.b16 %v2586
      %v2683 = vunpack.c.l.b16 %v2587
      %v2684 = vunpack.c.l.b16 %v2588
      %v2685 = vunpack.c.l.b16 %v2589
      %v2686 = vunpack.c.l.b16 %v2590
      %v2687 = vunpack.c.l.b16 %v2591
      %v2688 = vunpack.c.l.b16 %v2592
      %v2689 = vunpack.c.l.b16 %v2593
      %v2690 = vunpack.c.l.b16 %v2594
      %v2691 = vunpack.c.l.b16 %v2595
      %v2692 = vunpack.c.l.b16 %v2596
      %v2693 = vunpack.c.l.b16 %v2597
      %v2694 = vunpack.c.l.b16 %v2598
      %v2695 = vunpack.c.l.b16 %v2599
      %v2696 = vunpack.c.l.b16 %v2600
      %v2697 = vunpack.c.l.b16 %v2601
      %v2698 = vunpack.c.l.b16 %v2602
      %v2699 = vunpack.c.l.b16 %v2603
      %v2700 = vpack.c.b16 %v2653, %v2652
      %v2701 = vpack.c.b16 %v2655, %v2654
      %v2702 = vpack.c.b16 %v2657, %v2656
      %v2703 = vpack.c.b16 %v2659, %v2658
      %v2704 = vpack.c.b16 %v2661, %v2660
      %v2705 = vpack.c.b16 %v2663, %v2662
      %v2706 = vpack.c.b16 %v2665, %v2664
      %v2707 = vpack.c.b16 %v2667, %v2666
      %v2708 = vpack.c.b16 %v2669, %v2668
      %v2709 = vpack.c.b16 %v2671, %v2670
      %v2710 = vpack.c.b16 %v2673, %v2672
      %v2711 = vpack.c.b16 %v2675, %v2674
      %v2712 = vpack.c.b16 %v2677, %v2676
      %v2713 = vpack.c.b16 %v2679, %v2678
      %v2714 = vpack.c.b16 %v2681, %v2680
      %v2715 = vpack.c.b16 %v2683, %v2682
      %v2716 = vpack.c.b16 %v2685, %v2684
      %v2717 = vpack.c.b16 %v2687, %v2686
      %v2718 = vpack.c.b16 %v2689, %v2688
      %v2719 = vpack.c.b16 %v2691, %v2690
      %v2720 = vpack.c.b16 %v2693, %v2692
      %v2721 = vpack.c.b16 %v2695, %v2694
      %v2722 = vpack.c.b16 %v2697, %v2696
      %v2723 = vpack.c.b16 %v2699, %v2698
      %2748 = vmatprep.subr.bf16.mxu0 0
      %2749 = vmatpush1.bf16.msra.mxu0 %v2707
      %2750 = vmatprep.subr.bf16.mxu0 0
      %2751 = vmatpush1.bf16.msra.mxu0 %v2706
      %2752 = vmatprep.subr.bf16.mxu0 0
      %2753 = vmatpush1.bf16.msra.mxu0 %v2705
      %2754 = vmatprep.subr.bf16.mxu0 0
      %2755 = vmatpush1.bf16.msra.mxu0 %v2704
      %2756 = vmatprep.subr.bf16.mxu0 0
      %2757 = vmatpush1.bf16.msra.mxu0 %v2703
      %2758 = vmatprep.subr.bf16.mxu0 0
      %2759 = vmatpush1.bf16.msra.mxu0 %v2702
      %2760 = vmatprep.subr.bf16.mxu0 0
      %2761 = vmatpush1.bf16.msra.mxu0 %v2701
      %2762 = vmatprep.subr.bf16.mxu0 0
      %2763 = vmatpush1.bf16.msra.mxu0 %v2700
      %2764 = vmatprep.subr.bf16.mxu0 0
      %2765 = vmatpush2.bf16.msra.mxu0 %v2715
      %2766 = vmatprep.subr.bf16.mxu0 0
      %2767 = vmatpush2.bf16.msra.mxu0 %v2714
      %2768 = vmatprep.subr.bf16.mxu0 0
      %2769 = vmatpush2.bf16.msra.mxu0 %v2713
      %2770 = vmatprep.subr.bf16.mxu0 0
      %2771 = vmatpush2.bf16.msra.mxu0 %v2712
      %2772 = vmatprep.subr.bf16.mxu0 0
      %2773 = vmatpush2.bf16.msra.mxu0 %v2711
      %2774 = vmatprep.subr.bf16.mxu0 0
      %2775 = vmatpush2.bf16.msra.mxu0 %v2710
      %2776 = vmatprep.subr.bf16.mxu0 0
      %2777 = vmatpush2.bf16.msra.mxu0 %v2709
      %2778 = vmatprep.subr.bf16.mxu0 0
      %2779 = vmatpush2.bf16.msra.mxu0 %v2708
      %2780 = vmatprep.mubr.bf16.mxu0 %v2251
      %2781 = vmatmul.mubr.bf16.gmra.mxu0 %v2412
      %v2782 = vpop.f32.mrf.mxu0
      %v2783 = vadd.f32 0.0, %v2782
      %v2784 = vpop.f32.mrf.mxu0
      %v2785 = vpop.f32.mrf.mxu0
      %v2786 = vadd.f32 0.0, %v2785
      %v2787 = vpop.f32.mrf.mxu0
      %2788 = vmatprep.mubr.bf16.mxu0 %v2252
      %2789 = vmatmul.mubr.bf16.gmra.mxu0 %v2411
      %v2790 = vpop.f32.mrf.mxu0
      %v2791 = vadd.f32 0.0, %v2790
      %v2792 = vpop.f32.mrf.mxu0
      %v2793 = vpop.f32.mrf.mxu0
      %v2794 = vadd.f32 0.0, %v2793
      %v2795 = vpop.f32.mrf.mxu0
      %2796 = vmatprep.mubr.bf16.mxu0 %v2253
      %2797 = vmatmul.mubr.bf16.gmra.mxu0 %v2413
      %v2798 = vpop.f32.mrf.mxu0
      %v2799 = vadd.f32 0.0, %v2798
      %v2800 = vpop.f32.mrf.mxu0
      %v2801 = vpop.f32.mrf.mxu0
      %v2802 = vadd.f32 0.0, %v2801
      %v2803 = vpop.f32.mrf.mxu0
      %2804 = vmatprep.mubr.bf16.mxu0 %v2254
      %2805 = vmatmul.mubr.bf16.gmra.mxu0 %v2414
      %v2806 = vpop.f32.mrf.mxu0
      %v2807 = vadd.f32 0.0, %v2806
      %v2808 = vpop.f32.mrf.mxu0
      %v2809 = vpop.f32.mrf.mxu0
      %v2810 = vadd.f32 0.0, %v2809
      %v2811 = vpop.f32.mrf.mxu0
      %2812 = vmatprep.mubr.bf16.mxu0 %v2255
      %2813 = vmatmul.mubr.bf16.gmra.mxu0 %v2415
      %v2814 = vpop.f32.mrf.mxu0
      %v2815 = vadd.f32 0.0, %v2814
      %v2816 = vpop.f32.mrf.mxu0
      %v2817 = vpop.f32.mrf.mxu0
      %v2818 = vadd.f32 0.0, %v2817
      %v2819 = vpop.f32.mrf.mxu0
      %2820 = vmatprep.mubr.bf16.mxu0 %v2256
      %2821 = vmatmul.mubr.bf16.gmra.mxu0 %v2416
      %v2822 = vpop.f32.mrf.mxu0
      %v2823 = vadd.f32 0.0, %v2822
      %v2824 = vpop.f32.mrf.mxu0
      %v2825 = vpop.f32.mrf.mxu0
      %v2826 = vadd.f32 0.0, %v2825
      %v2827 = vpop.f32.mrf.mxu0
      %2828 = vmatprep.mubr.bf16.mxu0 %v2257
      %2829 = vmatmul.mubr.bf16.gmra.mxu0 %v2417
      %v2830 = vpop.f32.mrf.mxu0
      %v2831 = vadd.f32 0.0, %v2830
      %v2832 = vpop.f32.mrf.mxu0
      %v2833 = vpop.f32.mrf.mxu0
      %v2834 = vadd.f32 0.0, %v2833
      %v2835 = vpop.f32.mrf.mxu0
      %2836 = vmatprep.mubr.bf16.mxu0 %v2258
      %2837 = vmatmul.mubr.bf16.gmra.mxu0 %v2418
      %v2838 = vpop.f32.mrf.mxu0
      %v2839 = vadd.f32 0.0, %v2838
      %v2840 = vpop.f32.mrf.mxu0
      %v2841 = vpop.f32.mrf.mxu0
      %v2842 = vadd.f32 0.0, %v2841
      %v2843 = vpop.f32.mrf.mxu0
      %2844 = vmatprep.mubr.bf16.mxu0 %v2259
      %2845 = vmatmul.mubr.bf16.gmra.mxu0 %v2419
      %v2846 = vpop.f32.mrf.mxu0
      %v2847 = vadd.f32 0.0, %v2846
      %v2848 = vpop.f32.mrf.mxu0
      %v2849 = vpop.f32.mrf.mxu0
      %v2850 = vadd.f32 0.0, %v2849
      %v2851 = vpop.f32.mrf.mxu0
      %2852 = vmatprep.mubr.bf16.mxu0 %v2260
      %2853 = vmatmul.mubr.bf16.gmra.mxu0 %v2420
      %v2854 = vpop.f32.mrf.mxu0
      %v2855 = vadd.f32 0.0, %v2854
      %v2856 = vpop.f32.mrf.mxu0
      %v2857 = vpop.f32.mrf.mxu0
      %v2858 = vadd.f32 0.0, %v2857
      %v2859 = vpop.f32.mrf.mxu0
      %2860 = vmatprep.mubr.bf16.mxu0 %v2261
      %2861 = vmatmul.mubr.bf16.gmra.mxu0 %v2421
      %v2862 = vpop.f32.mrf.mxu0
      %v2863 = vadd.f32 0.0, %v2862
      %v2864 = vpop.f32.mrf.mxu0
      %v2865 = vpop.f32.mrf.mxu0
      %v2866 = vadd.f32 0.0, %v2865
      %v2867 = vpop.f32.mrf.mxu0
      %2868 = vmatprep.mubr.bf16.mxu0 %v2262
      %2869 = vmatmul.mubr.bf16.gmra.mxu0 %v2422
      %v2870 = vpop.f32.mrf.mxu0
      %v2871 = vadd.f32 0.0, %v2870
      %v2872 = vpop.f32.mrf.mxu0
      %v2873 = vpop.f32.mrf.mxu0
      %v2874 = vadd.f32 0.0, %v2873
      %v2875 = vpop.f32.mrf.mxu0
      %2876 = vmatprep.mubr.bf16.mxu0 %v2263
      %2877 = vmatmul.mubr.bf16.gmra.mxu0 %v2423
      %v2878 = vpop.f32.mrf.mxu0
      %v2879 = vadd.f32 0.0, %v2878
      %v2880 = vpop.f32.mrf.mxu0
      %v2881 = vpop.f32.mrf.mxu0
      %v2882 = vadd.f32 0.0, %v2881
      %v2883 = vpop.f32.mrf.mxu0
      %2884 = vmatprep.mubr.bf16.mxu0 %v2264
      %2885 = vmatmul.mubr.bf16.gmra.mxu0 %v2424
      %v2886 = vpop.f32.mrf.mxu0
      %v2887 = vadd.f32 0.0, %v2886
      %v2888 = vpop.f32.mrf.mxu0
      %v2889 = vpop.f32.mrf.mxu0
      %v2890 = vadd.f32 0.0, %v2889
      %v2891 = vpop.f32.mrf.mxu0
      %2892 = vmatprep.mubr.bf16.mxu0 %v2265
      %2893 = vmatmul.mubr.bf16.gmra.mxu0 %v2425
      %v2894 = vpop.f32.mrf.mxu0
      %v2895 = vadd.f32 0.0, %v2894
      %v2896 = vpop.f32.mrf.mxu0
      %v2897 = vpop.f32.mrf.mxu0
      %v2898 = vadd.f32 0.0, %v2897
      %v2899 = vpop.f32.mrf.mxu0
      %2900 = vmatprep.mubr.bf16.mxu0 %v2266
      %2901 = vmatmul.mubr.bf16.gmra.mxu0 %v2426
      %v2902 = vpop.f32.mrf.mxu0
      %v2903 = vadd.f32 0.0, %v2902
      %v2904 = vpop.f32.mrf.mxu0
      %v2905 = vpop.f32.mrf.mxu0
      %v2906 = vadd.f32 0.0, %v2905
      %v2907 = vpop.f32.mrf.mxu0
      %2908 = vdwg.mxu0
      %2909 = vmatprep.subr.bf16.mxu0 0
      %2910 = vmatpush1.bf16.msra.mxu0 %v2723
      %2911 = vmatprep.subr.bf16.mxu0 0
      %2912 = vmatpush1.bf16.msra.mxu0 %v2722
      %2913 = vmatprep.subr.bf16.mxu0 0
      %2914 = vmatpush1.bf16.msra.mxu0 %v2721
      %2915 = vmatprep.subr.bf16.mxu0 0
      %2916 = vmatpush1.bf16.msra.mxu0 %v2720
      %2917 = vmatprep.subr.bf16.mxu0 0
      %2918 = vmatpush1.bf16.msra.mxu0 %v2719
      %2919 = vmatprep.subr.bf16.mxu0 0
      %2920 = vmatpush1.bf16.msra.mxu0 %v2718
      %2921 = vmatprep.subr.bf16.mxu0 0
      %2922 = vmatpush1.bf16.msra.mxu0 %v2717
      %2923 = vmatprep.subr.bf16.mxu0 0
      %2924 = vmatpush1.bf16.msra.mxu0 %v2716
      %2925 = vmatprep.subr.bf16.mxu0 0
      %2926 = vmatpush2.bf16.msra.mxu0 0
      %2927 = vmatprep.subr.bf16.mxu0 0
      %2928 = vmatpush2.bf16.msra.mxu0 0
      %2929 = vmatprep.subr.bf16.mxu0 0
      %2930 = vmatpush2.bf16.msra.mxu0 0
      %2931 = vmatprep.subr.bf16.mxu0 0
      %2932 = vmatpush2.bf16.msra.mxu0 0
      %2933 = vmatprep.subr.bf16.mxu0 0
      %2934 = vmatpush2.bf16.msra.mxu0 0
      %2935 = vmatprep.subr.bf16.mxu0 0
      %2936 = vmatpush2.bf16.msra.mxu0 0
      %2937 = vmatprep.subr.bf16.mxu0 0
      %2938 = vmatpush2.bf16.msra.mxu0 0
      %2939 = vmatprep.subr.bf16.mxu0 0
      %2940 = vmatpush2.bf16.msra.mxu0 0
      %2941 = vmatprep.mubr.bf16.mxu0 0
      %2942 = vmatmul.mubr.bf16.gmra.mxu0 %v2492
      %v2943 = vpop.f32.mrf.mxu0
      %v2944 = vadd.f32 %v2783, %v2943
      %v2945 = vpop.f32.mrf.mxu0
      %v2946 = vpop.f32.mrf.mxu0
      %v2947 = vadd.f32 %v2786, %v2946
      %v2948 = vpop.f32.mrf.mxu0
      %2949 = vmatprep.mubr.bf16.mxu0 0
      %2950 = vmatmul.mubr.bf16.gmra.mxu0 %v2491
      %v2951 = vpop.f32.mrf.mxu0
      %v2952 = vadd.f32 %v2791, %v2951
      %v2953 = vpop.f32.mrf.mxu0
      %v2954 = vpop.f32.mrf.mxu0
      %v2955 = vadd.f32 %v2794, %v2954
      %v2956 = vpop.f32.mrf.mxu0
      %2957 = vmatprep.mubr.bf16.mxu0 0
      %2958 = vmatmul.mubr.bf16.gmra.mxu0 %v2493
      %v2959 = vpop.f32.mrf.mxu0
      %v2960 = vadd.f32 %v2799, %v2959
      %v2961 = vpop.f32.mrf.mxu0
      %v2962 = vpop.f32.mrf.mxu0
      %v2963 = vadd.f32 %v2802, %v2962
      %v2964 = vpop.f32.mrf.mxu0
      %2965 = vmatprep.mubr.bf16.mxu0 0
      %2966 = vmatmul.mubr.bf16.gmra.mxu0 %v2494
      %v2967 = vpop.f32.mrf.mxu0
      %v2968 = vadd.f32 %v2807, %v2967
      %v2969 = vpop.f32.mrf.mxu0
      %v2970 = vpop.f32.mrf.mxu0
      %v2971 = vadd.f32 %v2810, %v2970
      %v2972 = vpop.f32.mrf.mxu0
      %2973 = vmatprep.mubr.bf16.mxu0 0
      %2974 = vmatmul.mubr.bf16.gmra.mxu0 %v2495
      %v2975 = vpop.f32.mrf.mxu0
      %v2976 = vadd.f32 %v2815, %v2975
      %v2977 = vpop.f32.mrf.mxu0
      %v2978 = vpop.f32.mrf.mxu0
      %v2979 = vadd.f32 %v2818, %v2978
      %v2980 = vpop.f32.mrf.mxu0
      %2981 = vmatprep.mubr.bf16.mxu0 0
      %2982 = vmatmul.mubr.bf16.gmra.mxu0 %v2496
      %v2983 = vpop.f32.mrf.mxu0
      %v2984 = vadd.f32 %v2823, %v2983
      %v2985 = vpop.f32.mrf.mxu0
      %v2986 = vpop.f32.mrf.mxu0
      %v2987 = vadd.f32 %v2826, %v2986
      %v2988 = vpop.f32.mrf.mxu0
      %2989 = vmatprep.mubr.bf16.mxu0 0
      %2990 = vmatmul.mubr.bf16.gmra.mxu0 %v2497
      %v2991 = vpop.f32.mrf.mxu0
      %v2992 = vadd.f32 %v2831, %v2991
      %v2993 = vpop.f32.mrf.mxu0
      %v2994 = vpop.f32.mrf.mxu0
      %v2995 = vadd.f32 %v2834, %v2994
      %v2996 = vpop.f32.mrf.mxu0
      %2997 = vmatprep.mubr.bf16.mxu0 0
      %2998 = vmatmul.mubr.bf16.gmra.mxu0 %v2498
      %v2999 = vpop.f32.mrf.mxu0
      %v3000 = vadd.f32 %v2839, %v2999
      %v3001 = vpop.f32.mrf.mxu0
      %v3002 = vpop.f32.mrf.mxu0
      %v3003 = vadd.f32 %v2842, %v3002
      %v3004 = vpop.f32.mrf.mxu0
      %3005 = vmatprep.mubr.bf16.mxu0 0
      %3006 = vmatmul.mubr.bf16.gmra.mxu0 %v2499
      %v3007 = vpop.f32.mrf.mxu0
      %v3008 = vadd.f32 %v2847, %v3007
      %v3009 = vpop.f32.mrf.mxu0
      %v3010 = vpop.f32.mrf.mxu0
      %v3011 = vadd.f32 %v2850, %v3010
      %v3012 = vpop.f32.mrf.mxu0
      %3013 = vmatprep.mubr.bf16.mxu0 0
      %3014 = vmatmul.mubr.bf16.gmra.mxu0 %v2500
      %v3015 = vpop.f32.mrf.mxu0
      %v3016 = vadd.f32 %v2855, %v3015
      %v3017 = vpop.f32.mrf.mxu0
      %v3018 = vpop.f32.mrf.mxu0
      %v3019 = vadd.f32 %v2858, %v3018
      %v3020 = vpop.f32.mrf.mxu0
      %3021 = vmatprep.mubr.bf16.mxu0 0
      %3022 = vmatmul.mubr.bf16.gmra.mxu0 %v2501
      %v3023 = vpop.f32.mrf.mxu0
      %v3024 = vadd.f32 %v2863, %v3023
      %v3025 = vpop.f32.mrf.mxu0
      %v3026 = vpop.f32.mrf.mxu0
      %v3027 = vadd.f32 %v2866, %v3026
      %v3028 = vpop.f32.mrf.mxu0
      %3029 = vmatprep.mubr.bf16.mxu0 0
      %3030 = vmatmul.mubr.bf16.gmra.mxu0 %v2502
      %v3031 = vpop.f32.mrf.mxu0
      %v3032 = vadd.f32 %v2871, %v3031
      %v3033 = vpop.f32.mrf.mxu0
      %v3034 = vpop.f32.mrf.mxu0
      %v3035 = vadd.f32 %v2874, %v3034
      %v3036 = vpop.f32.mrf.mxu0
      %3037 = vmatprep.mubr.bf16.mxu0 0
      %3038 = vmatmul.mubr.bf16.gmra.mxu0 %v2503
      %v3039 = vpop.f32.mrf.mxu0
      %v3040 = vadd.f32 %v2879, %v3039
      %v3041 = vpop.f32.mrf.mxu0
      %v3042 = vpop.f32.mrf.mxu0
      %v3043 = vadd.f32 %v2882, %v3042
      %v3044 = vpop.f32.mrf.mxu0
      %3045 = vmatprep.mubr.bf16.mxu0 0
      %3046 = vmatmul.mubr.bf16.gmra.mxu0 %v2504
      %v3047 = vpop.f32.mrf.mxu0
      %v3048 = vadd.f32 %v2887, %v3047
      %v3049 = vpop.f32.mrf.mxu0
      %v3050 = vpop.f32.mrf.mxu0
      %v3051 = vadd.f32 %v2890, %v3050
      %v3052 = vpop.f32.mrf.mxu0
      %3053 = vmatprep.mubr.bf16.mxu0 0
      %3054 = vmatmul.mubr.bf16.gmra.mxu0 %v2505
      %v3055 = vpop.f32.mrf.mxu0
      %v3056 = vadd.f32 %v2895, %v3055
      %v3057 = vpop.f32.mrf.mxu0
      %v3058 = vpop.f32.mrf.mxu0
      %v3059 = vadd.f32 %v2898, %v3058
      %v3060 = vpop.f32.mrf.mxu0
      %3061 = vmatprep.mubr.bf16.mxu0 0
      %3062 = vmatmul.mubr.bf16.gmra.mxu0 %v2506
      %v3063 = vpop.f32.mrf.mxu0
      %v3064 = vadd.f32 %v2903, %v3063
      %v3065 = vpop.f32.mrf.mxu0
      %v3066 = vpop.f32.mrf.mxu0
      %v3067 = vadd.f32 %v2906, %v3066
      %v3068 = vpop.f32.mrf.mxu0
      %3069 = vdwg.mxu0
      %v3118 = vunpack.c.l.b16 %v2507
      %v3119 = vunpack.c.l.b16 %v2508
      %v3120 = vunpack.c.l.b16 %v2509
      %v3121 = vunpack.c.l.b16 %v2510
      %v3122 = vunpack.c.l.b16 %v2511
      %v3123 = vunpack.c.l.b16 %v2512
      %v3124 = vunpack.c.l.b16 %v2513
      %v3125 = vunpack.c.l.b16 %v2514
      %v3126 = vunpack.c.l.b16 %v2515
      %v3127 = vunpack.c.l.b16 %v2516
      %v3128 = vunpack.c.l.b16 %v2517
      %v3129 = vunpack.c.l.b16 %v2518
      %v3130 = vunpack.c.l.b16 %v2519
      %v3131 = vunpack.c.l.b16 %v2520
      %v3132 = vunpack.c.l.b16 %v2521
      %v3133 = vunpack.c.l.b16 %v2522
      %v3134 = vunpack.c.l.b16 %v2523
      %v3135 = vunpack.c.l.b16 %v2524
      %v3136 = vunpack.c.l.b16 %v2525
      %v3137 = vunpack.c.l.b16 %v2526
      %v3138 = vunpack.c.l.b16 %v2527
      %v3139 = vunpack.c.l.b16 %v2528
      %v3140 = vunpack.c.l.b16 %v2529
      %v3141 = vunpack.c.l.b16 %v2530
      %v3142 = vunpack.c.l.b16 %v2531
      %v3143 = vunpack.c.l.b16 %v2532
      %v3144 = vunpack.c.l.b16 %v2533
      %v3145 = vunpack.c.l.b16 %v2534
      %v3146 = vunpack.c.l.b16 %v2535
      %v3147 = vunpack.c.l.b16 %v2536
      %v3148 = vunpack.c.l.b16 %v2537
      %v3149 = vunpack.c.l.b16 %v2538
      %v3150 = vunpack.c.l.b16 %v2539
      %v3151 = vunpack.c.l.b16 %v2540
      %v3152 = vunpack.c.l.b16 %v2541
      %v3153 = vunpack.c.l.b16 %v2542
      %v3154 = vunpack.c.l.b16 %v2543
      %v3155 = vunpack.c.l.b16 %v2544
      %v3156 = vunpack.c.l.b16 %v2545
      %v3157 = vunpack.c.l.b16 %v2546
      %v3158 = vunpack.c.l.b16 %v2547
      %v3159 = vunpack.c.l.b16 %v2548
      %v3160 = vunpack.c.l.b16 %v2549
      %v3161 = vunpack.c.l.b16 %v2550
      %v3162 = vunpack.c.l.b16 %v2551
      %v3163 = vunpack.c.l.b16 %v2552
      %v3164 = vunpack.c.l.b16 %v2553
      %v3165 = vunpack.c.l.b16 %v2554
      %v3166 = vpack.c.b16 %v3119, %v3118
      %v3167 = vpack.c.b16 %v3121, %v3120
      %v3168 = vpack.c.b16 %v3123, %v3122
      %v3169 = vpack.c.b16 %v3125, %v3124
      %v3170 = vpack.c.b16 %v3127, %v3126
      %v3171 = vpack.c.b16 %v3129, %v3128
      %v3172 = vpack.c.b16 %v3131, %v3130
      %v3173 = vpack.c.b16 %v3133, %v3132
      %v3174 = vpack.c.b16 %v3135, %v3134
      %v3175 = vpack.c.b16 %v3137, %v3136
      %v3176 = vpack.c.b16 %v3139, %v3138
      %v3177 = vpack.c.b16 %v3141, %v3140
      %v3178 = vpack.c.b16 %v3143, %v3142
      %v3179 = vpack.c.b16 %v3145, %v3144
      %v3180 = vpack.c.b16 %v3147, %v3146
      %v3181 = vpack.c.b16 %v3149, %v3148
      %v3182 = vpack.c.b16 %v3151, %v3150
      %v3183 = vpack.c.b16 %v3153, %v3152
      %v3184 = vpack.c.b16 %v3155, %v3154
      %v3185 = vpack.c.b16 %v3157, %v3156
      %v3186 = vpack.c.b16 %v3159, %v3158
      %v3187 = vpack.c.b16 %v3161, %v3160
      %v3188 = vpack.c.b16 %v3163, %v3162
      %v3189 = vpack.c.b16 %v3165, %v3164
      %3214 = vmatprep.subr.bf16.mxu0 0
      %3215 = vmatpush1.bf16.msra.mxu0 %v3173
      %3216 = vmatprep.subr.bf16.mxu0 0
      %3217 = vmatpush1.bf16.msra.mxu0 %v3172
      %3218 = vmatprep.subr.bf16.mxu0 0
      %3219 = vmatpush1.bf16.msra.mxu0 %v3171
      %3220 = vmatprep.subr.bf16.mxu0 0
      %3221 = vmatpush1.bf16.msra.mxu0 %v3170
      %3222 = vmatprep.subr.bf16.mxu0 0
      %3223 = vmatpush1.bf16.msra.mxu0 %v3169
      %3224 = vmatprep.subr.bf16.mxu0 0
      %3225 = vmatpush1.bf16.msra.mxu0 %v3168
      %3226 = vmatprep.subr.bf16.mxu0 0
      %3227 = vmatpush1.bf16.msra.mxu0 %v3167
      %3228 = vmatprep.subr.bf16.mxu0 0
      %3229 = vmatpush1.bf16.msra.mxu0 %v3166
      %3230 = vmatprep.subr.bf16.mxu0 0
      %3231 = vmatpush2.bf16.msra.mxu0 %v3181
      %3232 = vmatprep.subr.bf16.mxu0 0
      %3233 = vmatpush2.bf16.msra.mxu0 %v3180
      %3234 = vmatprep.subr.bf16.mxu0 0
      %3235 = vmatpush2.bf16.msra.mxu0 %v3179
      %3236 = vmatprep.subr.bf16.mxu0 0
      %3237 = vmatpush2.bf16.msra.mxu0 %v3178
      %3238 = vmatprep.subr.bf16.mxu0 0
      %3239 = vmatpush2.bf16.msra.mxu0 %v3177
      %3240 = vmatprep.subr.bf16.mxu0 0
      %3241 = vmatpush2.bf16.msra.mxu0 %v3176
      %3242 = vmatprep.subr.bf16.mxu0 0
      %3243 = vmatpush2.bf16.msra.mxu0 %v3175
      %3244 = vmatprep.subr.bf16.mxu0 0
      %3245 = vmatpush2.bf16.msra.mxu0 %v3174
      %3246 = vmatprep.mubr.bf16.mxu0 %v2252
      %3247 = vmatmul.mubr.bf16.gmra.mxu0 %v2411
      %v3248 = vpop.f32.mrf.mxu0
      %v3249 = vadd.f32 %v2944, %v3248
      %v3250 = vpop.f32.mrf.mxu0
      %v3251 = vpop.f32.mrf.mxu0
      %v3252 = vadd.f32 %v2947, %v3251
      %v3253 = vpop.f32.mrf.mxu0
      %3254 = vmatprep.mubr.bf16.mxu0 %v2251
      %3255 = vmatmul.mubr.bf16.gmra.mxu0 %v2412
      %v3256 = vpop.f32.mrf.mxu0
      %v3257 = vadd.f32 %v2952, %v3256
      %v3258 = vpop.f32.mrf.mxu0
      %v3259 = vpop.f32.mrf.mxu0
      %v3260 = vadd.f32 %v2955, %v3259
      %v3261 = vpop.f32.mrf.mxu0
      %3262 = vmatprep.mubr.bf16.mxu0 %v2252
      %3263 = vmatmul.mubr.bf16.gmra.mxu0 %v2411
      %v3264 = vpop.f32.mrf.mxu0
      %v3265 = vadd.f32 %v2960, %v3264
      %v3266 = vpop.f32.mrf.mxu0
      %v3267 = vpop.f32.mrf.mxu0
      %v3268 = vadd.f32 %v2963, %v3267
      %v3269 = vpop.f32.mrf.mxu0
      %3270 = vmatprep.mubr.bf16.mxu0 %v2253
      %3271 = vmatmul.mubr.bf16.gmra.mxu0 %v2413
      %v3272 = vpop.f32.mrf.mxu0
      %v3273 = vadd.f32 %v2968, %v3272
      %v3274 = vpop.f32.mrf.mxu0
      %v3275 = vpop.f32.mrf.mxu0
      %v3276 = vadd.f32 %v2971, %v3275
      %v3277 = vpop.f32.mrf.mxu0
      %3278 = vmatprep.mubr.bf16.mxu0 %v2254
      %3279 = vmatmul.mubr.bf16.gmra.mxu0 %v2414
      %v3280 = vpop.f32.mrf.mxu0
      %v3281 = vadd.f32 %v2976, %v3280
      %v3282 = vpop.f32.mrf.mxu0
      %v3283 = vpop.f32.mrf.mxu0
      %v3284 = vadd.f32 %v2979, %v3283
      %v3285 = vpop.f32.mrf.mxu0
      %3286 = vmatprep.mubr.bf16.mxu0 %v2255
      %3287 = vmatmul.mubr.bf16.gmra.mxu0 %v2415
      %v3288 = vpop.f32.mrf.mxu0
      %v3289 = vadd.f32 %v2984, %v3288
      %v3290 = vpop.f32.mrf.mxu0
      %v3291 = vpop.f32.mrf.mxu0
      %v3292 = vadd.f32 %v2987, %v3291
      %v3293 = vpop.f32.mrf.mxu0
      %3294 = vmatprep.mubr.bf16.mxu0 %v2256
      %3295 = vmatmul.mubr.bf16.gmra.mxu0 %v2416
      %v3296 = vpop.f32.mrf.mxu0
      %v3297 = vadd.f32 %v2992, %v3296
      %v3298 = vpop.f32.mrf.mxu0
      %v3299 = vpop.f32.mrf.mxu0
      %v3300 = vadd.f32 %v2995, %v3299
      %v3301 = vpop.f32.mrf.mxu0
      %3302 = vmatprep.mubr.bf16.mxu0 %v2257
      %3303 = vmatmul.mubr.bf16.gmra.mxu0 %v2417
      %v3304 = vpop.f32.mrf.mxu0
      %v3305 = vadd.f32 %v3000, %v3304
      %v3306 = vpop.f32.mrf.mxu0
      %v3307 = vpop.f32.mrf.mxu0
      %v3308 = vadd.f32 %v3003, %v3307
      %v3309 = vpop.f32.mrf.mxu0
      %3310 = vmatprep.mubr.bf16.mxu0 %v2258
      %3311 = vmatmul.mubr.bf16.gmra.mxu0 %v2418
      %v3312 = vpop.f32.mrf.mxu0
      %v3313 = vadd.f32 %v3008, %v3312
      %v3314 = vpop.f32.mrf.mxu0
      %v3315 = vpop.f32.mrf.mxu0
      %v3316 = vadd.f32 %v3011, %v3315
      %v3317 = vpop.f32.mrf.mxu0
      %3318 = vmatprep.mubr.bf16.mxu0 %v2259
      %3319 = vmatmul.mubr.bf16.gmra.mxu0 %v2419
      %v3320 = vpop.f32.mrf.mxu0
      %v3321 = vadd.f32 %v3016, %v3320
      %v3322 = vpop.f32.mrf.mxu0
      %v3323 = vpop.f32.mrf.mxu0
      %v3324 = vadd.f32 %v3019, %v3323
      %v3325 = vpop.f32.mrf.mxu0
      %3326 = vmatprep.mubr.bf16.mxu0 %v2260
      %3327 = vmatmul.mubr.bf16.gmra.mxu0 %v2420
      %v3328 = vpop.f32.mrf.mxu0
      %v3329 = vadd.f32 %v3024, %v3328
      %v3330 = vpop.f32.mrf.mxu0
      %v3331 = vpop.f32.mrf.mxu0
      %v3332 = vadd.f32 %v3027, %v3331
      %v3333 = vpop.f32.mrf.mxu0
      %3334 = vmatprep.mubr.bf16.mxu0 %v2261
      %3335 = vmatmul.mubr.bf16.gmra.mxu0 %v2421
      %v3336 = vpop.f32.mrf.mxu0
      %v3337 = vadd.f32 %v3032, %v3336
      %v3338 = vpop.f32.mrf.mxu0
      %v3339 = vpop.f32.mrf.mxu0
      %v3340 = vadd.f32 %v3035, %v3339
      %v3341 = vpop.f32.mrf.mxu0
      %3342 = vmatprep.mubr.bf16.mxu0 %v2262
      %3343 = vmatmul.mubr.bf16.gmra.mxu0 %v2422
      %v3344 = vpop.f32.mrf.mxu0
      %v3345 = vadd.f32 %v3040, %v3344
      %v3346 = vpop.f32.mrf.mxu0
      %v3347 = vpop.f32.mrf.mxu0
      %v3348 = vadd.f32 %v3043, %v3347
      %v3349 = vpop.f32.mrf.mxu0
      %3350 = vmatprep.mubr.bf16.mxu0 %v2263
      %3351 = vmatmul.mubr.bf16.gmra.mxu0 %v2423
      %v3352 = vpop.f32.mrf.mxu0
      %v3353 = vadd.f32 %v3048, %v3352
      %v3354 = vpop.f32.mrf.mxu0
      %v3355 = vpop.f32.mrf.mxu0
      %v3356 = vadd.f32 %v3051, %v3355
      %v3357 = vpop.f32.mrf.mxu0
      %3358 = vmatprep.mubr.bf16.mxu0 %v2264
      %3359 = vmatmul.mubr.bf16.gmra.mxu0 %v2424
      %v3360 = vpop.f32.mrf.mxu0
      %v3361 = vadd.f32 %v3056, %v3360
      %v3362 = vpop.f32.mrf.mxu0
      %v3363 = vpop.f32.mrf.mxu0
      %v3364 = vadd.f32 %v3059, %v3363
      %v3365 = vpop.f32.mrf.mxu0
      %3366 = vmatprep.mubr.bf16.mxu0 %v2265
      %3367 = vmatmul.mubr.bf16.gmra.mxu0 %v2425
      %v3368 = vpop.f32.mrf.mxu0
      %v3369 = vadd.f32 %v3064, %v3368
      %v3370 = vpop.f32.mrf.mxu0
      %v3371 = vpop.f32.mrf.mxu0
      %v3372 = vadd.f32 %v3067, %v3371
      %v3373 = vpop.f32.mrf.mxu0
      %3374 = vdwg.mxu0
      %3375 = vmatprep.subr.bf16.mxu0 0
      %3376 = vmatpush1.bf16.msra.mxu0 %v3189
      %3377 = vmatprep.subr.bf16.mxu0 0
      %3378 = vmatpush1.bf16.msra.mxu0 %v3188
      %3379 = vmatprep.subr.bf16.mxu0 0
      %3380 = vmatpush1.bf16.msra.mxu0 %v3187
      %3381 = vmatprep.subr.bf16.mxu0 0
      %3382 = vmatpush1.bf16.msra.mxu0 %v3186
      %3383 = vmatprep.subr.bf16.mxu0 0
      %3384 = vmatpush1.bf16.msra.mxu0 %v3185
      %3385 = vmatprep.subr.bf16.mxu0 0
      %3386 = vmatpush1.bf16.msra.mxu0 %v3184
      %3387 = vmatprep.subr.bf16.mxu0 0
      %3388 = vmatpush1.bf16.msra.mxu0 %v3183
      %3389 = vmatprep.subr.bf16.mxu0 0
      %3390 = vmatpush1.bf16.msra.mxu0 %v3182
      %3391 = vmatprep.subr.bf16.mxu0 0
      %3392 = vmatpush2.bf16.msra.mxu0 0
      %3393 = vmatprep.subr.bf16.mxu0 0
      %3394 = vmatpush2.bf16.msra.mxu0 0
      %3395 = vmatprep.subr.bf16.mxu0 0
      %3396 = vmatpush2.bf16.msra.mxu0 0
      %3397 = vmatprep.subr.bf16.mxu0 0
      %3398 = vmatpush2.bf16.msra.mxu0 0
      %3399 = vmatprep.subr.bf16.mxu0 0
      %3400 = vmatpush2.bf16.msra.mxu0 0
      %3401 = vmatprep.subr.bf16.mxu0 0
      %3402 = vmatpush2.bf16.msra.mxu0 0
      %3403 = vmatprep.subr.bf16.mxu0 0
      %3404 = vmatpush2.bf16.msra.mxu0 0
      %3405 = vmatprep.subr.bf16.mxu0 0
      %3406 = vmatpush2.bf16.msra.mxu0 0
      %3407 = vmatprep.mubr.bf16.mxu0 0
      %3408 = vmatmul.mubr.bf16.gmra.mxu0 %v2491
      %v3409 = vpop.f32.mrf.mxu0
      %v3410 = vadd.f32 %v3249, %v3409
      %v3411 = vpop.f32.mrf.mxu0
      %v3412 = vpop.f32.mrf.mxu0
      %v3413 = vadd.f32 %v3252, %v3412
      %v3414 = vpop.f32.mrf.mxu0
      %3415 = vmatprep.mubr.bf16.mxu0 0
      %3416 = vmatmul.mubr.bf16.gmra.mxu0 %v2492
      %v3417 = vpop.f32.mrf.mxu0
      %v3418 = vadd.f32 %v3257, %v3417
      %v3419 = vpop.f32.mrf.mxu0
      %v3420 = vpop.f32.mrf.mxu0
      %v3421 = vadd.f32 %v3260, %v3420
      %v3422 = vpop.f32.mrf.mxu0
      %3423 = vmatprep.mubr.bf16.mxu0 0
      %3424 = vmatmul.mubr.bf16.gmra.mxu0 %v2491
      %v3425 = vpop.f32.mrf.mxu0
      %v3426 = vadd.f32 %v3265, %v3425
      %v3427 = vpop.f32.mrf.mxu0
      %v3428 = vpop.f32.mrf.mxu0
      %v3429 = vadd.f32 %v3268, %v3428
      %v3430 = vpop.f32.mrf.mxu0
      %3431 = vmatprep.mubr.bf16.mxu0 0
      %3432 = vmatmul.mubr.bf16.gmra.mxu0 %v2493
      %v3433 = vpop.f32.mrf.mxu0
      %v3434 = vadd.f32 %v3273, %v3433
      %v3435 = vpop.f32.mrf.mxu0
      %v3436 = vpop.f32.mrf.mxu0
      %v3437 = vadd.f32 %v3276, %v3436
      %v3438 = vpop.f32.mrf.mxu0
      %3439 = vmatprep.mubr.bf16.mxu0 0
      %3440 = vmatmul.mubr.bf16.gmra.mxu0 %v2494
      %v3441 = vpop.f32.mrf.mxu0
      %v3442 = vadd.f32 %v3281, %v3441
      %v3443 = vpop.f32.mrf.mxu0
      %v3444 = vpop.f32.mrf.mxu0
      %v3445 = vadd.f32 %v3284, %v3444
      %v3446 = vpop.f32.mrf.mxu0
      %3447 = vmatprep.mubr.bf16.mxu0 0
      %3448 = vmatmul.mubr.bf16.gmra.mxu0 %v2495
      %v3449 = vpop.f32.mrf.mxu0
      %v3450 = vadd.f32 %v3289, %v3449
      %v3451 = vpop.f32.mrf.mxu0
      %v3452 = vpop.f32.mrf.mxu0
      %v3453 = vadd.f32 %v3292, %v3452
      %v3454 = vpop.f32.mrf.mxu0
      %3455 = vmatprep.mubr.bf16.mxu0 0
      %3456 = vmatmul.mubr.bf16.gmra.mxu0 %v2496
      %v3457 = vpop.f32.mrf.mxu0
      %v3458 = vadd.f32 %v3297, %v3457
      %v3459 = vpop.f32.mrf.mxu0
      %v3460 = vpop.f32.mrf.mxu0
      %v3461 = vadd.f32 %v3300, %v3460
      %v3462 = vpop.f32.mrf.mxu0
      %3463 = vmatprep.mubr.bf16.mxu0 0
      %3464 = vmatmul.mubr.bf16.gmra.mxu0 %v2497
      %v3465 = vpop.f32.mrf.mxu0
      %v3466 = vadd.f32 %v3305, %v3465
      %v3467 = vpop.f32.mrf.mxu0
      %v3468 = vpop.f32.mrf.mxu0
      %v3469 = vadd.f32 %v3308, %v3468
      %v3470 = vpop.f32.mrf.mxu0
      %3471 = vmatprep.mubr.bf16.mxu0 0
      %3472 = vmatmul.mubr.bf16.gmra.mxu0 %v2498
      %v3473 = vpop.f32.mrf.mxu0
      %v3474 = vadd.f32 %v3313, %v3473
      %v3475 = vpop.f32.mrf.mxu0
      %v3476 = vpop.f32.mrf.mxu0
      %v3477 = vadd.f32 %v3316, %v3476
      %v3478 = vpop.f32.mrf.mxu0
      %3479 = vmatprep.mubr.bf16.mxu0 0
      %3480 = vmatmul.mubr.bf16.gmra.mxu0 %v2499
      %v3481 = vpop.f32.mrf.mxu0
      %v3482 = vadd.f32 %v3321, %v3481
      %v3483 = vpop.f32.mrf.mxu0
      %v3484 = vpop.f32.mrf.mxu0
      %v3485 = vadd.f32 %v3324, %v3484
      %v3486 = vpop.f32.mrf.mxu0
      %3487 = vmatprep.mubr.bf16.mxu0 0
      %3488 = vmatmul.mubr.bf16.gmra.mxu0 %v2500
      %v3489 = vpop.f32.mrf.mxu0
      %v3490 = vadd.f32 %v3329, %v3489
      %v3491 = vpop.f32.mrf.mxu0
      %v3492 = vpop.f32.mrf.mxu0
      %v3493 = vadd.f32 %v3332, %v3492
      %v3494 = vpop.f32.mrf.mxu0
      %3495 = vmatprep.mubr.bf16.mxu0 0
      %3496 = vmatmul.mubr.bf16.gmra.mxu0 %v2501
      %v3497 = vpop.f32.mrf.mxu0
      %v3498 = vadd.f32 %v3337, %v3497
      %v3499 = vpop.f32.mrf.mxu0
      %v3500 = vpop.f32.mrf.mxu0
      %v3501 = vadd.f32 %v3340, %v3500
      %v3502 = vpop.f32.mrf.mxu0
      %3503 = vmatprep.mubr.bf16.mxu0 0
      %3504 = vmatmul.mubr.bf16.gmra.mxu0 %v2502
      %v3505 = vpop.f32.mrf.mxu0
      %v3506 = vadd.f32 %v3345, %v3505
      %v3507 = vpop.f32.mrf.mxu0
      %v3508 = vpop.f32.mrf.mxu0
      %v3509 = vadd.f32 %v3348, %v3508
      %v3510 = vpop.f32.mrf.mxu0
      %3511 = vmatprep.mubr.bf16.mxu0 0
      %3512 = vmatmul.mubr.bf16.gmra.mxu0 %v2503
      %v3513 = vpop.f32.mrf.mxu0
      %v3514 = vadd.f32 %v3353, %v3513
      %v3515 = vpop.f32.mrf.mxu0
      %v3516 = vpop.f32.mrf.mxu0
      %v3517 = vadd.f32 %v3356, %v3516
      %v3518 = vpop.f32.mrf.mxu0
      %3519 = vmatprep.mubr.bf16.mxu0 0
      %3520 = vmatmul.mubr.bf16.gmra.mxu0 %v2504
      %v3521 = vpop.f32.mrf.mxu0
      %v3522 = vadd.f32 %v3361, %v3521
      %v3523 = vpop.f32.mrf.mxu0
      %v3524 = vpop.f32.mrf.mxu0
      %v3525 = vadd.f32 %v3364, %v3524
      %v3526 = vpop.f32.mrf.mxu0
      %3527 = vmatprep.mubr.bf16.mxu0 0
      %3528 = vmatmul.mubr.bf16.gmra.mxu0 %v2505
      %v3529 = vpop.f32.mrf.mxu0
      %v3530 = vadd.f32 %v3369, %v3529
      %v3531 = vpop.f32.mrf.mxu0
      %v3532 = vpop.f32.mrf.mxu0
      %v3533 = vadd.f32 %v3372, %v3532
      %v3534 = vpop.f32.mrf.mxu0
      %3535 = vdwg.mxu0
      %s3536 = scalar_lea.vmem %s2, 384
      %v3537 = vld [vmem:[%s3536] sm:$0xf]
      %v3538 = vld [vmem:[%s3536 + $0x4] sm:$0xf]
      %v3539 = vld [vmem:[%s3536 + $0x8] sm:$0xf]
      %v3540 = vld [vmem:[%s3536 + $0xc] sm:$0xf]
      %v3541 = vld [vmem:[%s3536 + $0x10] sm:$0xf]
      %v3542 = vld [vmem:[%s3536 + $0x14] sm:$0xf]
      %v3543 = vld [vmem:[%s3536 + $0x18] sm:$0xf]
      %v3544 = vld [vmem:[%s3536 + $0x1c] sm:$0xf]
      %v3545 = vld [vmem:[%s3536 + $0x20] sm:$0xf]
      %v3546 = vld [vmem:[%s3536 + $0x24] sm:$0xf]
      %v3547 = vld [vmem:[%s3536 + $0x28] sm:$0xf]
      %v3548 = vld [vmem:[%s3536 + $0x2c] sm:$0xf]
      %v3549 = vld [vmem:[%s3536 + $0x30] sm:$0xf]
      %v3550 = vld [vmem:[%s3536 + $0x34] sm:$0xf]
      %v3551 = vld [vmem:[%s3536 + $0x38] sm:$0xf]
      %v3552 = vld [vmem:[%s3536 + $0x3c] sm:$0xf]
      %v3553 = vld [vmem:[%s3536 + $0x40] sm:$0xf]
      %v3554 = vld [vmem:[%s3536 + $0x44] sm:$0xf]
      %v3555 = vld [vmem:[%s3536 + $0x48] sm:$0xf]
      %v3556 = vld [vmem:[%s3536 + $0x4c] sm:$0xf]
      %v3557 = vld [vmem:[%s3536 + $0x50] sm:$0xf]
      %v3558 = vld [vmem:[%s3536 + $0x54] sm:$0xf]
      %v3559 = vld [vmem:[%s3536 + $0x58] sm:$0xf]
      %v3560 = vld [vmem:[%s3536 + $0x5c] sm:$0xf]
      %v3561 = vld [vmem:[%s3536 + $0x60] sm:$0xf]
      %v3562 = vld [vmem:[%s3536 + $0x64] sm:$0xf]
      %v3563 = vld [vmem:[%s3536 + $0x68] sm:$0xf]
      %v3564 = vld [vmem:[%s3536 + $0x6c] sm:$0xf]
      %v3565 = vld [vmem:[%s3536 + $0x70] sm:$0xf]
      %v3566 = vld [vmem:[%s3536 + $0x74] sm:$0xf]
      %v3567 = vld [vmem:[%s3536 + $0x78] sm:$0xf]
      %v3568 = vld [vmem:[%s3536 + $0x7c] sm:$0xf]
      %v3569 = vld [vmem:[%s3536 + $0x80] sm:$0xf]
      %v3570 = vld [vmem:[%s3536 + $0x84] sm:$0xf]
      %v3571 = vld [vmem:[%s3536 + $0x88] sm:$0xf]
      %v3572 = vld [vmem:[%s3536 + $0x8c] sm:$0xf]
      %v3573 = vld [vmem:[%s3536 + $0x90] sm:$0xf]
      %v3574 = vld [vmem:[%s3536 + $0x94] sm:$0xf]
      %v3575 = vld [vmem:[%s3536 + $0x98] sm:$0xf]
      %v3576 = vld [vmem:[%s3536 + $0x9c] sm:$0xf]
      %v3577 = vld [vmem:[%s3536 + $0xa0] sm:$0xf]
      %v3578 = vld [vmem:[%s3536 + $0xa4] sm:$0xf]
      %v3579 = vld [vmem:[%s3536 + $0xa8] sm:$0xf]
      %v3580 = vld [vmem:[%s3536 + $0xac] sm:$0xf]
      %v3581 = vld [vmem:[%s3536 + $0xb0] sm:$0xf]
      %v3582 = vld [vmem:[%s3536 + $0xb4] sm:$0xf]
      %v3583 = vld [vmem:[%s3536 + $0xb8] sm:$0xf]
      %v3584 = vld [vmem:[%s3536 + $0xbc] sm:$0xf]
      %v3633 = vunpack.c.l.b16 %v3537
      %v3634 = vunpack.c.l.b16 %v3538
      %v3635 = vunpack.c.l.b16 %v3539
      %v3636 = vunpack.c.l.b16 %v3540
      %v3637 = vunpack.c.l.b16 %v3541
      %v3638 = vunpack.c.l.b16 %v3542
      %v3639 = vunpack.c.l.b16 %v3543
      %v3640 = vunpack.c.l.b16 %v3544
      %v3641 = vunpack.c.l.b16 %v3545
      %v3642 = vunpack.c.l.b16 %v3546
      %v3643 = vunpack.c.l.b16 %v3547
      %v3644 = vunpack.c.l.b16 %v3548
      %v3645 = vunpack.c.l.b16 %v3549
      %v3646 = vunpack.c.l.b16 %v3550
      %v3647 = vunpack.c.l.b16 %v3551
      %v3648 = vunpack.c.l.b16 %v3552
      %v3649 = vunpack.c.l.b16 %v3553
      %v3650 = vunpack.c.l.b16 %v3554
      %v3651 = vunpack.c.l.b16 %v3555
      %v3652 = vunpack.c.l.b16 %v3556
      %v3653 = vunpack.c.l.b16 %v3557
      %v3654 = vunpack.c.l.b16 %v3558
      %v3655 = vunpack.c.l.b16 %v3559
      %v3656 = vunpack.c.l.b16 %v3560
      %v3657 = vunpack.c.l.b16 %v3561
      %v3658 = vunpack.c.l.b16 %v3562
      %v3659 = vunpack.c.l.b16 %v3563
      %v3660 = vunpack.c.l.b16 %v3564
      %v3661 = vunpack.c.l.b16 %v3565
      %v3662 = vunpack.c.l.b16 %v3566
      %v3663 = vunpack.c.l.b16 %v3567
      %v3664 = vunpack.c.l.b16 %v3568
      %v3665 = vunpack.c.l.b16 %v3569
      %v3666 = vunpack.c.l.b16 %v3570
      %v3667 = vunpack.c.l.b16 %v3571
      %v3668 = vunpack.c.l.b16 %v3572
      %v3669 = vunpack.c.l.b16 %v3573
      %v3670 = vunpack.c.l.b16 %v3574
      %v3671 = vunpack.c.l.b16 %v3575
      %v3672 = vunpack.c.l.b16 %v3576
      %v3673 = vunpack.c.l.b16 %v3577
      %v3674 = vunpack.c.l.b16 %v3578
      %v3675 = vunpack.c.l.b16 %v3579
      %v3676 = vunpack.c.l.b16 %v3580
      %v3677 = vunpack.c.l.b16 %v3581
      %v3678 = vunpack.c.l.b16 %v3582
      %v3679 = vunpack.c.l.b16 %v3583
      %v3680 = vunpack.c.l.b16 %v3584
      %v3681 = vpack.c.b16 %v3634, %v3633
      %v3682 = vpack.c.b16 %v3636, %v3635
      %v3683 = vpack.c.b16 %v3638, %v3637
      %v3684 = vpack.c.b16 %v3640, %v3639
      %v3685 = vpack.c.b16 %v3642, %v3641
      %v3686 = vpack.c.b16 %v3644, %v3643
      %v3687 = vpack.c.b16 %v3646, %v3645
      %v3688 = vpack.c.b16 %v3648, %v3647
      %v3689 = vpack.c.b16 %v3650, %v3649
      %v3690 = vpack.c.b16 %v3652, %v3651
      %v3691 = vpack.c.b16 %v3654, %v3653
      %v3692 = vpack.c.b16 %v3656, %v3655
      %v3693 = vpack.c.b16 %v3658, %v3657
      %v3694 = vpack.c.b16 %v3660, %v3659
      %v3695 = vpack.c.b16 %v3662, %v3661
      %v3696 = vpack.c.b16 %v3664, %v3663
      %v3697 = vpack.c.b16 %v3666, %v3665
      %v3698 = vpack.c.b16 %v3668, %v3667
      %v3699 = vpack.c.b16 %v3670, %v3669
      %v3700 = vpack.c.b16 %v3672, %v3671
      %v3701 = vpack.c.b16 %v3674, %v3673
      %v3702 = vpack.c.b16 %v3676, %v3675
      %v3703 = vpack.c.b16 %v3678, %v3677
      %v3704 = vpack.c.b16 %v3680, %v3679
      %3729 = vmatprep.subr.bf16.mxu0 0
      %3730 = vmatpush1.bf16.msra.mxu0 %v3688
      %3731 = vmatprep.subr.bf16.mxu0 0
      %3732 = vmatpush1.bf16.msra.mxu0 %v3687
      %3733 = vmatprep.subr.bf16.mxu0 0
      %3734 = vmatpush1.bf16.msra.mxu0 %v3686
      %3735 = vmatprep.subr.bf16.mxu0 0
      %3736 = vmatpush1.bf16.msra.mxu0 %v3685
      %3737 = vmatprep.subr.bf16.mxu0 0
      %3738 = vmatpush1.bf16.msra.mxu0 %v3684
      %3739 = vmatprep.subr.bf16.mxu0 0
      %3740 = vmatpush1.bf16.msra.mxu0 %v3683
      %3741 = vmatprep.subr.bf16.mxu0 0
      %3742 = vmatpush1.bf16.msra.mxu0 %v3682
      %3743 = vmatprep.subr.bf16.mxu0 0
      %3744 = vmatpush1.bf16.msra.mxu0 %v3681
      %3745 = vmatprep.subr.bf16.mxu0 0
      %3746 = vmatpush2.bf16.msra.mxu0 %v3696
      %3747 = vmatprep.subr.bf16.mxu0 0
      %3748 = vmatpush2.bf16.msra.mxu0 %v3695
      %3749 = vmatprep.subr.bf16.mxu0 0
      %3750 = vmatpush2.bf16.msra.mxu0 %v3694
      %3751 = vmatprep.subr.bf16.mxu0 0
      %3752 = vmatpush2.bf16.msra.mxu0 %v3693
      %3753 = vmatprep.subr.bf16.mxu0 0
      %3754 = vmatpush2.bf16.msra.mxu0 %v3692
      %3755 = vmatprep.subr.bf16.mxu0 0
      %3756 = vmatpush2.bf16.msra.mxu0 %v3691
      %3757 = vmatprep.subr.bf16.mxu0 0
      %3758 = vmatpush2.bf16.msra.mxu0 %v3690
      %3759 = vmatprep.subr.bf16.mxu0 0
      %3760 = vmatpush2.bf16.msra.mxu0 %v3689
      %3761 = vmatprep.mubr.bf16.mxu0 %v2252
      %3762 = vmatmul.mubr.bf16.gmra.mxu0 %v2411
      %v3763 = vpop.f32.mrf.mxu0
      %v3764 = vadd.f32 0.0, %v3763
      %v3765 = vpop.f32.mrf.mxu0
      %v3766 = vpop.f32.mrf.mxu0
      %v3767 = vadd.f32 0.0, %v3766
      %v3768 = vpop.f32.mrf.mxu0
      %3769 = vmatprep.mubr.bf16.mxu0 %v2253
      %3770 = vmatmul.mubr.bf16.gmra.mxu0 %v2413
      %v3771 = vpop.f32.mrf.mxu0
      %v3772 = vadd.f32 0.0, %v3771
      %v3773 = vpop.f32.mrf.mxu0
      %v3774 = vpop.f32.mrf.mxu0
      %v3775 = vadd.f32 0.0, %v3774
      %v3776 = vpop.f32.mrf.mxu0
      %3777 = vmatprep.mubr.bf16.mxu0 %v2254
      %3778 = vmatmul.mubr.bf16.gmra.mxu0 %v2414
      %v3779 = vpop.f32.mrf.mxu0
      %v3780 = vadd.f32 0.0, %v3779
      %v3781 = vpop.f32.mrf.mxu0
      %v3782 = vpop.f32.mrf.mxu0
      %v3783 = vadd.f32 0.0, %v3782
      %v3784 = vpop.f32.mrf.mxu0
      %3785 = vmatprep.mubr.bf16.mxu0 %v2255
      %3786 = vmatmul.mubr.bf16.gmra.mxu0 %v2415
      %v3787 = vpop.f32.mrf.mxu0
      %v3788 = vadd.f32 0.0, %v3787
      %v3789 = vpop.f32.mrf.mxu0
      %v3790 = vpop.f32.mrf.mxu0
      %v3791 = vadd.f32 0.0, %v3790
      %v3792 = vpop.f32.mrf.mxu0
      %3793 = vmatprep.mubr.bf16.mxu0 %v2256
      %3794 = vmatmul.mubr.bf16.gmra.mxu0 %v2416
      %v3795 = vpop.f32.mrf.mxu0
      %v3796 = vadd.f32 0.0, %v3795
      %v3797 = vpop.f32.mrf.mxu0
      %v3798 = vpop.f32.mrf.mxu0
      %v3799 = vadd.f32 0.0, %v3798
      %v3800 = vpop.f32.mrf.mxu0
      %3801 = vmatprep.mubr.bf16.mxu0 %v2257
      %3802 = vmatmul.mubr.bf16.gmra.mxu0 %v2417
      %v3803 = vpop.f32.mrf.mxu0
      %v3804 = vadd.f32 0.0, %v3803
      %v3805 = vpop.f32.mrf.mxu0
      %v3806 = vpop.f32.mrf.mxu0
      %v3807 = vadd.f32 0.0, %v3806
      %v3808 = vpop.f32.mrf.mxu0
      %3809 = vmatprep.mubr.bf16.mxu0 %v2258
      %3810 = vmatmul.mubr.bf16.gmra.mxu0 %v2418
      %v3811 = vpop.f32.mrf.mxu0
      %v3812 = vadd.f32 0.0, %v3811
      %v3813 = vpop.f32.mrf.mxu0
      %v3814 = vpop.f32.mrf.mxu0
      %v3815 = vadd.f32 0.0, %v3814
      %v3816 = vpop.f32.mrf.mxu0
      %3817 = vmatprep.mubr.bf16.mxu0 %v2259
      %3818 = vmatmul.mubr.bf16.gmra.mxu0 %v2419
      %v3819 = vpop.f32.mrf.mxu0
      %v3820 = vadd.f32 0.0, %v3819
      %v3821 = vpop.f32.mrf.mxu0
      %v3822 = vpop.f32.mrf.mxu0
      %v3823 = vadd.f32 0.0, %v3822
      %v3824 = vpop.f32.mrf.mxu0
      %3825 = vmatprep.mubr.bf16.mxu0 %v2260
      %3826 = vmatmul.mubr.bf16.gmra.mxu0 %v2420
      %v3827 = vpop.f32.mrf.mxu0
      %v3828 = vadd.f32 0.0, %v3827
      %v3829 = vpop.f32.mrf.mxu0
      %v3830 = vpop.f32.mrf.mxu0
      %v3831 = vadd.f32 0.0, %v3830
      %v3832 = vpop.f32.mrf.mxu0
      %3833 = vmatprep.mubr.bf16.mxu0 %v2261
      %3834 = vmatmul.mubr.bf16.gmra.mxu0 %v2421
      %v3835 = vpop.f32.mrf.mxu0
      %v3836 = vadd.f32 0.0, %v3835
      %v3837 = vpop.f32.mrf.mxu0
      %v3838 = vpop.f32.mrf.mxu0
      %v3839 = vadd.f32 0.0, %v3838
      %v3840 = vpop.f32.mrf.mxu0
      %3841 = vmatprep.mubr.bf16.mxu0 %v2262
      %3842 = vmatmul.mubr.bf16.gmra.mxu0 %v2422
      %v3843 = vpop.f32.mrf.mxu0
      %v3844 = vadd.f32 0.0, %v3843
      %v3845 = vpop.f32.mrf.mxu0
      %v3846 = vpop.f32.mrf.mxu0
      %v3847 = vadd.f32 0.0, %v3846
      %v3848 = vpop.f32.mrf.mxu0
      %3849 = vmatprep.mubr.bf16.mxu0 %v2263
      %3850 = vmatmul.mubr.bf16.gmra.mxu0 %v2423
      %v3851 = vpop.f32.mrf.mxu0
      %v3852 = vadd.f32 0.0, %v3851
      %v3853 = vpop.f32.mrf.mxu0
      %v3854 = vpop.f32.mrf.mxu0
      %v3855 = vadd.f32 0.0, %v3854
      %v3856 = vpop.f32.mrf.mxu0
      %3857 = vmatprep.mubr.bf16.mxu0 %v2264
      %3858 = vmatmul.mubr.bf16.gmra.mxu0 %v2424
      %v3859 = vpop.f32.mrf.mxu0
      %v3860 = vadd.f32 0.0, %v3859
      %v3861 = vpop.f32.mrf.mxu0
      %v3862 = vpop.f32.mrf.mxu0
      %v3863 = vadd.f32 0.0, %v3862
      %v3864 = vpop.f32.mrf.mxu0
      %3865 = vmatprep.mubr.bf16.mxu0 %v2265
      %3866 = vmatmul.mubr.bf16.gmra.mxu0 %v2425
      %v3867 = vpop.f32.mrf.mxu0
      %v3868 = vadd.f32 0.0, %v3867
      %v3869 = vpop.f32.mrf.mxu0
      %v3870 = vpop.f32.mrf.mxu0
      %v3871 = vadd.f32 0.0, %v3870
      %v3872 = vpop.f32.mrf.mxu0
      %3873 = vmatprep.mubr.bf16.mxu0 %v2266
      %3874 = vmatmul.mubr.bf16.gmra.mxu0 %v2426
      %v3875 = vpop.f32.mrf.mxu0
      %v3876 = vadd.f32 0.0, %v3875
      %v3877 = vpop.f32.mrf.mxu0
      %v3878 = vpop.f32.mrf.mxu0
      %v3879 = vadd.f32 0.0, %v3878
      %v3880 = vpop.f32.mrf.mxu0
      %3881 = vmatprep.mubr.bf16.mxu0 %v2265
      %3882 = vmatmul.mubr.bf16.gmra.mxu0 %v2425
      %v3883 = vpop.f32.mrf.mxu0
      %v3884 = vadd.f32 0.0, %v3883
      %v3885 = vpop.f32.mrf.mxu0
      %v3886 = vpop.f32.mrf.mxu0
      %v3887 = vadd.f32 0.0, %v3886
      %v3888 = vpop.f32.mrf.mxu0
      %3889 = vdwg.mxu0
      %3890 = vmatprep.subr.bf16.mxu0 0
      %3891 = vmatpush1.bf16.msra.mxu0 %v3704
      %3892 = vmatprep.subr.bf16.mxu0 0
      %3893 = vmatpush1.bf16.msra.mxu0 %v3703
      %3894 = vmatprep.subr.bf16.mxu0 0
      %3895 = vmatpush1.bf16.msra.mxu0 %v3702
      %3896 = vmatprep.subr.bf16.mxu0 0
      %3897 = vmatpush1.bf16.msra.mxu0 %v3701
      %3898 = vmatprep.subr.bf16.mxu0 0
      %3899 = vmatpush1.bf16.msra.mxu0 %v3700
      %3900 = vmatprep.subr.bf16.mxu0 0
      %3901 = vmatpush1.bf16.msra.mxu0 %v3699
      %3902 = vmatprep.subr.bf16.mxu0 0
      %3903 = vmatpush1.bf16.msra.mxu0 %v3698
      %3904 = vmatprep.subr.bf16.mxu0 0
      %3905 = vmatpush1.bf16.msra.mxu0 %v3697
      %3906 = vmatprep.subr.bf16.mxu0 0
      %3907 = vmatpush2.bf16.msra.mxu0 0
      %3908 = vmatprep.subr.bf16.mxu0 0
      %3909 = vmatpush2.bf16.msra.mxu0 0
      %3910 = vmatprep.subr.bf16.mxu0 0
      %3911 = vmatpush2.bf16.msra.mxu0 0
      %3912 = vmatprep.subr.bf16.mxu0 0
      %3913 = vmatpush2.bf16.msra.mxu0 0
      %3914 = vmatprep.subr.bf16.mxu0 0
      %3915 = vmatpush2.bf16.msra.mxu0 0
      %3916 = vmatprep.subr.bf16.mxu0 0
      %3917 = vmatpush2.bf16.msra.mxu0 0
      %3918 = vmatprep.subr.bf16.mxu0 0
      %3919 = vmatpush2.bf16.msra.mxu0 0
      %3920 = vmatprep.subr.bf16.mxu0 0
      %3921 = vmatpush2.bf16.msra.mxu0 0
      %3922 = vmatprep.mubr.bf16.mxu0 0
      %3923 = vmatmul.mubr.bf16.gmra.mxu0 %v2491
      %v3924 = vpop.f32.mrf.mxu0
      %v3925 = vadd.f32 %v3764, %v3924
      %v3926 = vpop.f32.mrf.mxu0
      %v3927 = vpop.f32.mrf.mxu0
      %v3928 = vadd.f32 %v3767, %v3927
      %v3929 = vpop.f32.mrf.mxu0
      %3930 = vmatprep.mubr.bf16.mxu0 0
      %3931 = vmatmul.mubr.bf16.gmra.mxu0 %v2493
      %v3932 = vpop.f32.mrf.mxu0
      %v3933 = vadd.f32 %v3772, %v3932
      %v3934 = vpop.f32.mrf.mxu0
      %v3935 = vpop.f32.mrf.mxu0
      %v3936 = vadd.f32 %v3775, %v3935
      %v3937 = vpop.f32.mrf.mxu0
      %3938 = vmatprep.mubr.bf16.mxu0 0
      %3939 = vmatmul.mubr.bf16.gmra.mxu0 %v2494
      %v3940 = vpop.f32.mrf.mxu0
      %v3941 = vadd.f32 %v3780, %v3940
      %v3942 = vpop.f32.mrf.mxu0
      %v3943 = vpop.f32.mrf.mxu0
      %v3944 = vadd.f32 %v3783, %v3943
      %v3945 = vpop.f32.mrf.mxu0
      %3946 = vmatprep.mubr.bf16.mxu0 0
      %3947 = vmatmul.mubr.bf16.gmra.mxu0 %v2495
      %v3948 = vpop.f32.mrf.mxu0
      %v3949 = vadd.f32 %v3788, %v3948
      %v3950 = vpop.f32.mrf.mxu0
      %v3951 = vpop.f32.mrf.mxu0
      %v3952 = vadd.f32 %v3791, %v3951
      %v3953 = vpop.f32.mrf.mxu0
      %3954 = vmatprep.mubr.bf16.mxu0 0
      %3955 = vmatmul.mubr.bf16.gmra.mxu0 %v2496
      %v3956 = vpop.f32.mrf.mxu0
      %v3957 = vadd.f32 %v3796, %v3956
      %v3958 = vpop.f32.mrf.mxu0
      %v3959 = vpop.f32.mrf.mxu0
      %v3960 = vadd.f32 %v3799, %v3959
      %v3961 = vpop.f32.mrf.mxu0
      %3962 = vmatprep.mubr.bf16.mxu0 0
      %3963 = vmatmul.mubr.bf16.gmra.mxu0 %v2497
      %v3964 = vpop.f32.mrf.mxu0
      %v3965 = vadd.f32 %v3804, %v3964
      %v3966 = vpop.f32.mrf.mxu0
      %v3967 = vpop.f32.mrf.mxu0
      %v3968 = vadd.f32 %v3807, %v3967
      %v3969 = vpop.f32.mrf.mxu0
      %3970 = vmatprep.mubr.bf16.mxu0 0
      %3971 = vmatmul.mubr.bf16.gmra.mxu0 %v2498
      %v3972 = vpop.f32.mrf.mxu0
      %v3973 = vadd.f32 %v3812, %v3972
      %v3974 = vpop.f32.mrf.mxu0
      %v3975 = vpop.f32.mrf.mxu0
      %v3976 = vadd.f32 %v3815, %v3975
      %v3977 = vpop.f32.mrf.mxu0
      %3978 = vmatprep.mubr.bf16.mxu0 0
      %3979 = vmatmul.mubr.bf16.gmra.mxu0 %v2499
      %v3980 = vpop.f32.mrf.mxu0
      %v3981 = vadd.f32 %v3820, %v3980
      %v3982 = vpop.f32.mrf.mxu0
      %v3983 = vpop.f32.mrf.mxu0
      %v3984 = vadd.f32 %v3823, %v3983
      %v3985 = vpop.f32.mrf.mxu0
      %3986 = vmatprep.mubr.bf16.mxu0 0
      %3987 = vmatmul.mubr.bf16.gmra.mxu0 %v2500
      %v3988 = vpop.f32.mrf.mxu0
      %v3989 = vadd.f32 %v3828, %v3988
      %v3990 = vpop.f32.mrf.mxu0
      %v3991 = vpop.f32.mrf.mxu0
      %v3992 = vadd.f32 %v3831, %v3991
      %v3993 = vpop.f32.mrf.mxu0
      %3994 = vmatprep.mubr.bf16.mxu0 0
      %3995 = vmatmul.mubr.bf16.gmra.mxu0 %v2501
      %v3996 = vpop.f32.mrf.mxu0
      %v3997 = vadd.f32 %v3836, %v3996
      %v3998 = vpop.f32.mrf.mxu0
      %v3999 = vpop.f32.mrf.mxu0
      %v4000 = vadd.f32 %v3839, %v3999
      %v4001 = vpop.f32.mrf.mxu0
      %4002 = vmatprep.mubr.bf16.mxu0 0
      %4003 = vmatmul.mubr.bf16.gmra.mxu0 %v2502
      %v4004 = vpop.f32.mrf.mxu0
      %v4005 = vadd.f32 %v3844, %v4004
      %v4006 = vpop.f32.mrf.mxu0
      %v4007 = vpop.f32.mrf.mxu0
      %v4008 = vadd.f32 %v3847, %v4007
      %v4009 = vpop.f32.mrf.mxu0
      %4010 = vmatprep.mubr.bf16.mxu0 0
      %4011 = vmatmul.mubr.bf16.gmra.mxu0 %v2503
      %v4012 = vpop.f32.mrf.mxu0
      %v4013 = vadd.f32 %v3852, %v4012
      %v4014 = vpop.f32.mrf.mxu0
      %v4015 = vpop.f32.mrf.mxu0
      %v4016 = vadd.f32 %v3855, %v4015
      %v4017 = vpop.f32.mrf.mxu0
      %4018 = vmatprep.mubr.bf16.mxu0 0
      %4019 = vmatmul.mubr.bf16.gmra.mxu0 %v2504
      %v4020 = vpop.f32.mrf.mxu0
      %v4021 = vadd.f32 %v3860, %v4020
      %v4022 = vpop.f32.mrf.mxu0
      %v4023 = vpop.f32.mrf.mxu0
      %v4024 = vadd.f32 %v3863, %v4023
      %v4025 = vpop.f32.mrf.mxu0
      %4026 = vmatprep.mubr.bf16.mxu0 0
      %4027 = vmatmul.mubr.bf16.gmra.mxu0 %v2505
      %v4028 = vpop.f32.mrf.mxu0
      %v4029 = vadd.f32 %v3868, %v4028
      %v4030 = vpop.f32.mrf.mxu0
      %v4031 = vpop.f32.mrf.mxu0
      %v4032 = vadd.f32 %v3871, %v4031
      %v4033 = vpop.f32.mrf.mxu0
      %4034 = vmatprep.mubr.bf16.mxu0 0
      %4035 = vmatmul.mubr.bf16.gmra.mxu0 %v2506
      %v4036 = vpop.f32.mrf.mxu0
      %v4037 = vadd.f32 %v3876, %v4036
      %v4038 = vpop.f32.mrf.mxu0
      %v4039 = vpop.f32.mrf.mxu0
      %v4040 = vadd.f32 %v3879, %v4039
      %v4041 = vpop.f32.mrf.mxu0
      %4042 = vmatprep.mubr.bf16.mxu0 0
      %4043 = vmatmul.mubr.bf16.gmra.mxu0 %v2505
      %v4044 = vpop.f32.mrf.mxu0
      %v4045 = vadd.f32 %v3884, %v4044
      %v4046 = vpop.f32.mrf.mxu0
      %v4047 = vpop.f32.mrf.mxu0
      %v4048 = vadd.f32 %v3887, %v4047
      %v4049 = vpop.f32.mrf.mxu0
      %4050 = vdwg.mxu0
      %v4051 = vadd.f32 %v3410, %v3925
      %v4052 = vadd.f32 %v3413, %v3928
      %v4053 = vadd.f32 %v3418, %v3933
      %v4054 = vadd.f32 %v3421, %v3936
      %v4055 = vadd.f32 %v3426, %v3941
      %v4056 = vadd.f32 %v3429, %v3944
      %v4057 = vadd.f32 %v3434, %v3949
      %v4058 = vadd.f32 %v3437, %v3952
      %v4059 = vadd.f32 %v3442, %v3957
      %v4060 = vadd.f32 %v3445, %v3960
      %v4061 = vadd.f32 %v3450, %v3965
      %v4062 = vadd.f32 %v3453, %v3968
      %v4063 = vadd.f32 %v3458, %v3973
      %v4064 = vadd.f32 %v3461, %v3976
      %v4065 = vadd.f32 %v3466, %v3981
      %v4066 = vadd.f32 %v3469, %v3984
      %v4067 = vadd.f32 %v3474, %v3989
      %v4068 = vadd.f32 %v3477, %v3992
      %v4069 = vadd.f32 %v3482, %v3997
      %v4070 = vadd.f32 %v3485, %v4000
      %v4071 = vadd.f32 %v3490, %v4005
      %v4072 = vadd.f32 %v3493, %v4008
      %v4073 = vadd.f32 %v3498, %v4013
      %v4074 = vadd.f32 %v3501, %v4016
      %v4075 = vadd.f32 %v3506, %v4021
      %v4076 = vadd.f32 %v3509, %v4024
      %v4077 = vadd.f32 %v3514, %v4029
      %v4078 = vadd.f32 %v3517, %v4032
      %v4079 = vadd.f32 %v3522, %v4037
      %v4080 = vadd.f32 %v3525, %v4040
      %v4081 = vadd.f32 %v3530, %v4045
      %v4082 = vadd.f32 %v3533, %v4048
      %v4083 = vadd.f32 %v4051, %v4052
      %v4084 = vadd.f32 %v4083, %v4053
      %v4085 = vadd.f32 %v4084, %v4054
      %v4086 = vadd.f32 %v4085, %v4055
      %v4087 = vadd.f32 %v4086, %v4056
      %v4088 = vadd.f32 %v4087, %v4057
      %v4089 = vadd.f32 %v4088, %v4058
      %v4090 = vadd.f32 %v4089, %v4059
      %v4091 = vadd.f32 %v4090, %v4060
      %v4092 = vadd.f32 %v4091, %v4061
      %v4093 = vadd.f32 %v4092, %v4062
      %v4094 = vadd.f32 %v4093, %v4063
      %v4095 = vadd.f32 %v4094, %v4064
      %v4096 = vadd.f32 %v4095, %v4065
      %v4097 = vadd.f32 %v4096, %v4066
      %v4098 = vadd.f32 %v4097, %v4067
      %v4099 = vadd.f32 %v4098, %v4068
      %v4100 = vadd.f32 %v4099, %v4069
      %v4101 = vadd.f32 %v4100, %v4070
      %v4102 = vadd.f32 %v4101, %v4071
      %v4103 = vadd.f32 %v4102, %v4072
      %v4104 = vadd.f32 %v4103, %v4073
      %v4105 = vadd.f32 %v4104, %v4074
      %v4106 = vadd.f32 %v4105, %v4075
      %v4107 = vadd.f32 %v4106, %v4076
      %v4108 = vadd.f32 %v4107, %v4077
      %v4109 = vadd.f32 %v4108, %v4078
      %v4110 = vadd.f32 %v4109, %v4079
      %v4111 = vadd.f32 %v4110, %v4080
      %v4112 = vadd.f32 %v4111, %v4081
      %v4113 = vadd.f32 %v4112, %v4082
      %v4114 = vrot.slane %v4113, 4
      %v4115 = vadd.f32 %v4113, %v4114
      %v4116 = vrot.slane %v4115, 2
      %v4117 = vadd.f32 %v4115, %v4116
      %v4118 = vrot.slane %v4117, 1
      %v4119 = vadd.f32 %v4117, %v4118
      %v4120 = vmul.f32 %v4119, 0.00390625
      %v4121 = vmul.f32 %v4051, %v4051
      %v4122 = vmul.f32 %v4052, %v4052
      %v4123 = vmul.f32 %v4053, %v4053
      %v4124 = vmul.f32 %v4054, %v4054
      %v4125 = vmul.f32 %v4055, %v4055
      %v4126 = vmul.f32 %v4056, %v4056
      %v4127 = vmul.f32 %v4057, %v4057
      %v4128 = vmul.f32 %v4058, %v4058
      %v4129 = vmul.f32 %v4059, %v4059
      %v4130 = vmul.f32 %v4060, %v4060
      %v4131 = vmul.f32 %v4061, %v4061
      %v4132 = vmul.f32 %v4062, %v4062
      %v4133 = vmul.f32 %v4063, %v4063
      %v4134 = vmul.f32 %v4064, %v4064
      %v4135 = vmul.f32 %v4065, %v4065
      %v4136 = vmul.f32 %v4066, %v4066
      %v4137 = vmul.f32 %v4067, %v4067
      %v4138 = vmul.f32 %v4068, %v4068
      %v4139 = vmul.f32 %v4069, %v4069
      %v4140 = vmul.f32 %v4070, %v4070
      %v4141 = vmul.f32 %v4071, %v4071
      %v4142 = vmul.f32 %v4072, %v4072
      %v4143 = vmul.f32 %v4073, %v4073
      %v4144 = vmul.f32 %v4074, %v4074
      %v4145 = vmul.f32 %v4075, %v4075
      %v4146 = vmul.f32 %v4076, %v4076
      %v4147 = vmul.f32 %v4077, %v4077
      %v4148 = vmul.f32 %v4078, %v4078
      %v4149 = vmul.f32 %v4079, %v4079
      %v4150 = vmul.f32 %v4080, %v4080
      %v4151 = vmul.f32 %v4081, %v4081
      %v4152 = vmul.f32 %v4082, %v4082
      %v4153 = vadd.f32 %v4121, %v4122
      %v4154 = vadd.f32 %v4153, %v4123
      %v4155 = vadd.f32 %v4154, %v4124
      %v4156 = vadd.f32 %v4155, %v4125
      %v4157 = vadd.f32 %v4156, %v4126
      %v4158 = vadd.f32 %v4157, %v4127
      %v4159 = vadd.f32 %v4158, %v4128
      %v4160 = vadd.f32 %v4159, %v4129
      %v4161 = vadd.f32 %v4160, %v4130
      %v4162 = vadd.f32 %v4161, %v4131
      %v4163 = vadd.f32 %v4162, %v4132
      %v4164 = vadd.f32 %v4163, %v4133
      %v4165 = vadd.f32 %v4164, %v4134
      %v4166 = vadd.f32 %v4165, %v4135
      %v4167 = vadd.f32 %v4166, %v4136
      %v4168 = vadd.f32 %v4167, %v4137
      %v4169 = vadd.f32 %v4168, %v4138
      %v4170 = vadd.f32 %v4169, %v4139
      %v4171 = vadd.f32 %v4170, %v4140
      %v4172 = vadd.f32 %v4171, %v4141
      %v4173 = vadd.f32 %v4172, %v4142
      %v4174 = vadd.f32 %v4173, %v4143
      %v4175 = vadd.f32 %v4174, %v4144
      %v4176 = vadd.f32 %v4175, %v4145
      %v4177 = vadd.f32 %v4176, %v4146
      %v4178 = vadd.f32 %v4177, %v4147
      %v4179 = vadd.f32 %v4178, %v4148
      %v4180 = vadd.f32 %v4179, %v4149
      %v4181 = vadd.f32 %v4180, %v4150
      %v4182 = vadd.f32 %v4181, %v4151
      %v4183 = vadd.f32 %v4182, %v4152
      %v4184 = vrot.slane %v4183, 4
      %v4185 = vadd.f32 %v4183, %v4184
      %v4186 = vrot.slane %v4185, 2
      %v4187 = vadd.f32 %v4185, %v4186
      %v4188 = vrot.slane %v4187, 1
      %v4189 = vadd.f32 %v4187, %v4188
      %v4190 = vmul.f32 %v4189, 0.00390625
      %v4191 = vmul.f32 %v4120, %v4120
      %v4192 = vsub.f32 %v4190, %v4191
      %v4193 = vmax.f32 %v4192, 0.0
      %v4194 = vsub.f32 %v4051, %v4120
      %v4195 = vsub.f32 %v4052, %v4120
      %v4196 = vsub.f32 %v4053, %v4120
      %v4197 = vsub.f32 %v4054, %v4120
      %v4198 = vsub.f32 %v4055, %v4120
      %v4199 = vsub.f32 %v4056, %v4120
      %v4200 = vsub.f32 %v4057, %v4120
      %v4201 = vsub.f32 %v4058, %v4120
      %v4202 = vsub.f32 %v4059, %v4120
      %v4203 = vsub.f32 %v4060, %v4120
      %v4204 = vsub.f32 %v4061, %v4120
      %v4205 = vsub.f32 %v4062, %v4120
      %v4206 = vsub.f32 %v4063, %v4120
      %v4207 = vsub.f32 %v4064, %v4120
      %v4208 = vsub.f32 %v4065, %v4120
      %v4209 = vsub.f32 %v4066, %v4120
      %v4210 = vsub.f32 %v4067, %v4120
      %v4211 = vsub.f32 %v4068, %v4120
      %v4212 = vsub.f32 %v4069, %v4120
      %v4213 = vsub.f32 %v4070, %v4120
      %v4214 = vsub.f32 %v4071, %v4120
      %v4215 = vsub.f32 %v4072, %v4120
      %v4216 = vsub.f32 %v4073, %v4120
      %v4217 = vsub.f32 %v4074, %v4120
      %v4218 = vsub.f32 %v4075, %v4120
      %v4219 = vsub.f32 %v4076, %v4120
      %v4220 = vsub.f32 %v4077, %v4120
      %v4221 = vsub.f32 %v4078, %v4120
      %v4222 = vsub.f32 %v4079, %v4120
      %v4223 = vsub.f32 %v4080, %v4120
      %v4224 = vsub.f32 %v4081, %v4120
      %v4225 = vsub.f32 %v4082, %v4120
      %v4226 = vadd.f32 %v4193, 1e-05
      %v4227 = vrsqrt.pop %v4226
      %v4228 = vmul.f32 %v4194, %v4227
      %v4229 = vmul.f32 %v4195, %v4227
      %v4230 = vmul.f32 %v4196, %v4227
      %v4231 = vmul.f32 %v4197, %v4227
      %v4232 = vmul.f32 %v4198, %v4227
      %v4233 = vmul.f32 %v4199, %v4227
      %v4234 = vmul.f32 %v4200, %v4227
      %v4235 = vmul.f32 %v4201, %v4227
      %v4236 = vmul.f32 %v4202, %v4227
      %v4237 = vmul.f32 %v4203, %v4227
      %v4238 = vmul.f32 %v4204, %v4227
      %v4239 = vmul.f32 %v4205, %v4227
      %v4240 = vmul.f32 %v4206, %v4227
      %v4241 = vmul.f32 %v4207, %v4227
      %v4242 = vmul.f32 %v4208, %v4227
      %v4243 = vmul.f32 %v4209, %v4227
      %v4244 = vmul.f32 %v4210, %v4227
      %v4245 = vmul.f32 %v4211, %v4227
      %v4246 = vmul.f32 %v4212, %v4227
      %v4247 = vmul.f32 %v4213, %v4227
      %v4248 = vmul.f32 %v4214, %v4227
      %v4249 = vmul.f32 %v4215, %v4227
      %v4250 = vmul.f32 %v4216, %v4227
      %v4251 = vmul.f32 %v4217, %v4227
      %v4252 = vmul.f32 %v4218, %v4227
      %v4253 = vmul.f32 %v4219, %v4227
      %v4254 = vmul.f32 %v4220, %v4227
      %v4255 = vmul.f32 %v4221, %v4227
      %v4256 = vmul.f32 %v4222, %v4227
      %v4257 = vmul.f32 %v4223, %v4227
      %v4258 = vmul.f32 %v4224, %v4227
      %v4259 = vmul.f32 %v4225, %v4227
      %v4260 = vadd.f32 %v172, %v4228
      %v4261 = vadd.f32 %v173, %v4229
      %v4262 = vadd.f32 %v174, %v4230
      %v4263 = vadd.f32 %v175, %v4231
      %v4264 = vadd.f32 %v176, %v4232
      %v4265 = vadd.f32 %v177, %v4233
      %v4266 = vadd.f32 %v178, %v4234
      %v4267 = vadd.f32 %v179, %v4235
      %v4268 = vadd.f32 %v180, %v4236
      %v4269 = vadd.f32 %v181, %v4237
      %v4270 = vadd.f32 %v182, %v4238
      %v4271 = vadd.f32 %v183, %v4239
      %v4272 = vadd.f32 %v184, %v4240
      %v4273 = vadd.f32 %v185, %v4241
      %v4274 = vadd.f32 %v186, %v4242
      %v4275 = vadd.f32 %v187, %v4243
      %v4276 = vadd.f32 %v188, %v4244
      %v4277 = vadd.f32 %v189, %v4245
      %v4278 = vadd.f32 %v190, %v4246
      %v4279 = vadd.f32 %v191, %v4247
      %v4280 = vadd.f32 %v192, %v4248
      %v4281 = vadd.f32 %v193, %v4249
      %v4282 = vadd.f32 %v194, %v4250
      %v4283 = vadd.f32 %v195, %v4251
      %v4284 = vadd.f32 %v196, %v4252
      %v4285 = vadd.f32 %v197, %v4253
      %v4286 = vadd.f32 %v198, %v4254
      %v4287 = vadd.f32 %v199, %v4255
      %v4288 = vadd.f32 %v200, %v4256
      %v4289 = vadd.f32 %v201, %v4257
      %v4290 = vadd.f32 %v202, %v4258
      %v4291 = vadd.f32 %v203, %v4259
      %4292 = vst [vmem:[%s170] sm:$0xff] %v4260
      %4293 = vst [vmem:[%s170 + $0x8] sm:$0xff] %v4261
      %4294 = vst [vmem:[%s170 + $0x10] sm:$0xff] %v4262
      %4295 = vst [vmem:[%s170 + $0x18] sm:$0xff] %v4263
      %4296 = vst [vmem:[%s170 + $0x20] sm:$0xff] %v4264
      %4297 = vst [vmem:[%s170 + $0x28] sm:$0xff] %v4265
      %4298 = vst [vmem:[%s170 + $0x30] sm:$0xff] %v4266
      %4299 = vst [vmem:[%s170 + $0x38] sm:$0xff] %v4267
      %4300 = vst [vmem:[%s170 + $0x40] sm:$0xff] %v4268
      %4301 = vst [vmem:[%s170 + $0x48] sm:$0xff] %v4269
      %4302 = vst [vmem:[%s170 + $0x50] sm:$0xff] %v4270
      %4303 = vst [vmem:[%s170 + $0x58] sm:$0xff] %v4271
      %4304 = vst [vmem:[%s170 + $0x60] sm:$0xff] %v4272
      %4305 = vst [vmem:[%s170 + $0x68] sm:$0xff] %v4273
      %4306 = vst [vmem:[%s170 + $0x70] sm:$0xff] %v4274
      %4307 = vst [vmem:[%s170 + $0x78] sm:$0xff] %v4275
      %4308 = vst [vmem:[%s170 + $0x80] sm:$0xff] %v4276
      %4309 = vst [vmem:[%s170 + $0x88] sm:$0xff] %v4277
      %4310 = vst [vmem:[%s170 + $0x90] sm:$0xff] %v4278
      %4311 = vst [vmem:[%s170 + $0x98] sm:$0xff] %v4279
      %4312 = vst [vmem:[%s170 + $0xa0] sm:$0xff] %v4280
      %4313 = vst [vmem:[%s170 + $0xa8] sm:$0xff] %v4281
      %4314 = vst [vmem:[%s170 + $0xb0] sm:$0xff] %v4282
      %4315 = vst [vmem:[%s170 + $0xb8] sm:$0xff] %v4283
      %4316 = vst [vmem:[%s170 + $0xc0] sm:$0xff] %v4284
      %4317 = vst [vmem:[%s170 + $0xc8] sm:$0xff] %v4285
      %4318 = vst [vmem:[%s170 + $0xd0] sm:$0xff] %v4286
      %4319 = vst [vmem:[%s170 + $0xd8] sm:$0xff] %v4287
      %4320 = vst [vmem:[%s170 + $0xe0] sm:$0xff] %v4288
      %4321 = vst [vmem:[%s170 + $0xe8] sm:$0xff] %v4289
      %4322 = vst [vmem:[%s170 + $0xf0] sm:$0xff] %v4290
      %4323 = vst [vmem:[%s170 + $0xf8] sm:$0xff] %v4291
      %p4324 = scmp.lt.s32.totalorder %s14, 1
      %s4325 = scalar_select %p4324, %s14, 1
      %s4326 = smul.addr %s4325, 32
      %s4327 = smul.addr %s4326, 8
      %s4328 = scalar_lea.vmem %s3, %s4327
      // Predicated region
      $region33: #{residual_block.1} parent=31 // pred_check
        %p4329 = pneg %p100
      $region34: #{residual_block.1} parent=31 // pred_check_branch
        %4331 = sbr.rel (%p4329) target = $region36
      $region35: #{residual_block.1} parent=31 // pred_region
        _
      $region36: #{residual_block.1} parent=31 // pred_fallthru
        _
    $region32: #{residual_block.1} parent=5 // pred_fallthru
      _
    %p4332 = scmp.le.s32.totalorder 2, %s9
    // Predicated region
    $region37: #{residual_block.1} parent=5 // pred_check
      %p4333 = pneg %p4332
    $region38: #{residual_block.1} parent=5 // pred_check_branch
      %4335 = sbr.rel (%p4333) target = $region40
    $region39: #{residual_block.1} parent=5 // pred_region
      %s4336 = ssub.s32 %s9, 2
      // Predicated region
      $region41: #{residual_block.1} parent=39 // pred_check
        %p4337 = pneg %p106
      $region42: #{residual_block.1} parent=39 // pred_check_branch
        %4339 = sbr.rel (%p4337) target = $region44
      $region43: #{residual_block.1} parent=39 // pred_region
        %p4340 = scmp.lt.s32.totalorder %s15, 1
        %s4341 = scalar_select %p4340, %s15, 1
        %s4342 = smul.addr %s4341, 32
        %s4343 = smul.addr %s4342, 8
        %s4344 = scalar_lea.vmem %s3, %s4343
      $region44: #{residual_block.1} parent=39 // pred_fallthru
        _
    $region40: #{residual_block.1} parent=5 // pred_fallthru
      _
  $region6: #{residual_block.1} parent=0 // loop_footer
    %s13 = sadd.s32 1, %s9
  $region7: #{residual_block.1} parent=0 // loop_footer_branch
    %8 = sbr.rel target = $region3
  $region8: #{residual_block.1} parent=0 // loop_exit
    _

</llo_original>
